<compile_context>
chip_gen: v7x
topology: tpu7x:2x2x1
jax: 0.10.0
libtpu: 0.0.40
codegen_flags: <defaults>
</compile_context>

<pallas_src>
import functools
import math

import jax
import jax.numpy as jnp
from jax.experimental import pallas as pl
from jax.experimental.pallas import tpu as pltpu


# ----------------------------------------------------------------------------
# Pallas kernel: one full RTRNNBlock (all RNNs + stacked layers + FCN)
# ----------------------------------------------------------------------------
def _rtrnn_block_kernel(*args, T, L, R, H, num_rnns):
    """args = [x_packed, wih_bd*L, whh_bd*L, bias*L, fcn(7)] + [out] + [pre, hseq].

    x_packed : (T, R*I)   selected input rows of the R = num_rnns+1 RNNs,
                          concatenated along lanes.
    wih_bd_l : layer-0 (R*I, R*H), layers>=1 (R*H, R*H) block-diagonal.
    whh_bd_l : (R*H, R*H) block-diagonal recurrent weights.
    bias_l   : (1, R*H)   b_ih + b_hh per RNN slab.
    fcn      : w1_eff (R*H,Hf), b1 (1,Hf), w2t (Hf,H), b2 (1,H),
               w3at (Hf,O), w3bt (H,O), b3 (1,O).
    """
    n_in = 1 + 3 * L + 7
    x_ref = args[0]
    wih_refs = args[1:1 + L]
    whh_refs = args[1 + L:1 + 2 * L]
    b_refs = args[1 + 2 * L:1 + 3 * L]
    (w1_ref, b1_ref, w2_ref, b2_ref,
     w3a_ref, w3b_ref, b3_ref) = args[1 + 3 * L:n_in]
    out_ref = args[n_in]
    pre_ref, hseq_ref = args[n_in + 1:]

    RH = R * H
    # relu for the first num_rnns slabs, tanh for the last slab.
    relu_mask = jax.lax.broadcasted_iota(jnp.int32, (1, RH), 1) < (num_rnns * H)

    layer_in = x_ref[...].astype(jnp.float32)          # (T, R*I) for layer 0
    for l in range(L):                                  # static, small
        # Hoisted input projection: whole-sequence matmul, off the serial path.
        pre_ref[...] = (jnp.dot(layer_in, wih_refs[l][...],
                                preferred_element_type=jnp.float32)
                        + b_refs[l][...])
        whh = whh_refs[l][...]                          # (RH, RH) block-diag

        def step(t, h):
            z = pre_ref[pl.ds(t, 1), :] + jnp.dot(
                h, whh, preferred_element_type=jnp.float32)
            h_new = jnp.where(relu_mask, jnp.maximum(z, 0.0), jnp.tanh(z))
            hseq_ref[pl.ds(t, 1), :] = h_new
            return h_new

        jax.lax.fori_loop(0, T, step, jnp.zeros((1, RH), jnp.float32),
                          unroll=True)
        layer_in = hseq_ref[...]                        # feeds next stacked layer

    # Fused FCN: fc1 (slab-sum folded into w1_eff) -> rrelu(eval) -> fc2 ->
    # tanh -> concat -> fc3 (split as w3a/w3b).  Dropouts are identity (eval).
    out1 = (jnp.dot(layer_in, w1_ref[...], preferred_element_type=jnp.float32)
            + b1_ref[...])
    slope = (1.0 / 8.0 + 1.0 / 3.0) / 2.0               # F.rrelu eval slope
    out1 = jnp.where(out1 >= 0, out1, slope * out1)
    out2 = jnp.tanh(jnp.dot(out1, w2_ref[...],
                            preferred_element_type=jnp.float32) + b2_ref[...])
    out3 = (jnp.dot(out1, w3a_ref[...], preferred_element_type=jnp.float32)
            + jnp.dot(out2, w3b_ref[...], preferred_element_type=jnp.float32)
            + b3_ref[...])
    out_ref[...] = out3.astype(out_ref.dtype)


# ----------------------------------------------------------------------------
# Parameter packing (runs once, outside the hot path)
# ----------------------------------------------------------------------------
def _block_diag(mats):
    rows = sum(m.shape[0] for m in mats)
    cols = sum(m.shape[1] for m in mats)
    out = jnp.zeros((rows, cols), mats[0].dtype)
    r = c = 0
    for m in mats:
        out = out.at[r:r + m.shape[0], c:c + m.shape[1]].set(m)
        r += m.shape[0]
        c += m.shape[1]
    return out


def prepare_block(p, perms, B):
    """Pack one RTRNNBlock's params into the fused/block-diagonal kernel form."""
    num_rnns = len(p["relu_rnns"])
    L = len(p["tanh_rnn"])
    H = p["tanh_rnn"][0][1].shape[0]
    R = num_rnns + 1

    # Each RNN only contributes batch row perm[-1] (tanh RNN: row B-1).
    sel_relu = jnp.stack([perm[-1] for perm in perms])
    sel = jnp.concatenate(
        [sel_relu, jnp.array([B - 1], dtype=sel_relu.dtype)])

    wih_bd, whh_bd, bias = [], [], []
    for l in range(L):
        per_rnn = [p["relu_rnns"][r][l] for r in range(num_rnns)] + [p["tanh_rnn"][l]]
        wih_bd.append(_block_diag([lp[0] for lp in per_rnn]))
        whh_bd.append(_block_diag([lp[1] for lp in per_rnn]))
        bias.append(jnp.concatenate([lp[2] + lp[3] for lp in per_rnn], axis=-1))

    w1t, b1, w2t, b2, w3at, w3bt, b3 = p["fcn"]
    # Fold "sum relu slabs, concat tanh slab" into fc1's weight.
    w1_eff = jnp.concatenate([jnp.tile(w1t[:H], (num_rnns, 1)), w1t[H:]], axis=0)

    return dict(sel=sel, wih=wih_bd, whh=whh_bd, bias=bias,
                fcn=(w1_eff, b1, w2t, b2, w3at, w3bt, b3),
                num_rnns=num_rnns, L=L, H=H, R=R)


# ----------------------------------------------------------------------------
# Pallas wrappers / forward
# ----------------------------------------------------------------------------
def rtrnn_block_pallas(x, bp):
    """x: (T, B, I). Returns (T, output_size). One pallas_call per block."""
    T, _, I = x.shape
    H, R, L, num_rnns = bp["H"], bp["R"], bp["L"], bp["num_rnns"]
    RH = R * H
    O = bp["fcn"][-1].shape[-1]

    x_sel = x[:, bp["sel"], :].reshape(T, R * I)        # (T, R*I)
    args = [x_sel] + list(bp["wih"]) + list(bp["whh"]) + list(bp["bias"]) \
        + list(bp["fcn"])

    kernel = functools.partial(_rtrnn_block_kernel, T=T, L=L, R=R, H=H,
                               num_rnns=num_rnns)
    return pl.pallas_call(
        kernel,
        out_shape=jax.ShapeDtypeStruct((T, O), jnp.float32),
        scratch_shapes=[pltpu.VMEM((T, RH), jnp.float32),   # pre-activations
                        pltpu.VMEM((T, RH), jnp.float32)],  # hidden sequence
    )(*args)


def fused_rtrnn_forward_pallas(x, prepared_blocks, block_weights):
    out = None
    for bp, w in zip(prepared_blocks, block_weights):
        o = rtrnn_block_pallas(x, bp) * w
        out = o if out is None else out + o
    return out


# ----------------------------------------------------------------------------
# Pure-JAX reference (torch-faithful, full batch) — correctness check only
# ----------------------------------------------------------------------------
def rnn_layer_ref(x_seq, w_ih_t, w_hh_t, b_ih, b_hh, activation):
    act = (lambda v: jnp.maximum(v, 0.0)) if activation == "relu" else jnp.tanh

    def step(h, x_t):
        pre = (jnp.dot(x_t, w_ih_t, precision=jax.lax.Precision.HIGHEST)
               + jnp.dot(h, w_hh_t, precision=jax.lax.Precision.HIGHEST)
               + b_ih + b_hh)
        h_new = act(pre)
        return h_new, h_new

    B = x_seq.shape[1]
    H = w_hh_t.shape[0]
    h0 = jnp.zeros((B, H), jnp.float32)
    _, ys = jax.lax.scan(step, h0, x_seq)
    return ys


def fcn_ref(out_r, w1t, b1, w2t, b2, w3at, w3bt, b3):
    hi = jax.lax.Precision.HIGHEST
    out1 = jnp.dot(out_r, w1t, precision=hi) + b1
    slope = (0.125 + 1.0 / 3.0) / 2.0
    out1 = jnp.where(out1 >= 0, out1, slope * out1)
    out2 = jnp.tanh(jnp.dot(out1, w2t, precision=hi) + b2)
    return (jnp.dot(out1, w3at, precision=hi)
            + jnp.dot(out2, w3bt, precision=hi) + b3)


def rtrnn_block_ref(x, p, perms):
    outs = []
    for r, layers in enumerate(p["relu_rnns"]):
        seq = x[:, perms[r], :]                      # torch.randperm over batch
        for (wih, whh, bih, bhh) in layers:
            seq = rnn_layer_ref(seq, wih, whh, bih, bhh, "relu")
        outs.append(seq[:, -1, :])                   # (T, H): last batch element
    out_r_sum = jnp.sum(jnp.stack(outs), axis=0)

    seq = x
    for (wih, whh, bih, bhh) in p["tanh_rnn"]:
        seq = rnn_layer_ref(seq, wih, whh, bih, bhh, "tanh")
    out_r_orig = seq[:, -1, :]

    out_r = jnp.concatenate([out_r_sum, out_r_orig], axis=1)
    return fcn_ref(out_r, *p["fcn"])


def fused_rtrnn_ref(x, block_params, block_perms, block_weights):
    outs = [rtrnn_block_ref(x, p, perms) * w
            for p, perms, w in zip(block_params, block_perms, block_weights)]
    return jnp.sum(jnp.stack(outs), axis=0)


# ----------------------------------------------------------------------------
# Deterministic parameter construction
# ----------------------------------------------------------------------------
def _uniform(key, shape, bound):
    return jax.random.uniform(key, shape, jnp.float32, -bound, bound)


def init_block_params(key, input_size, H, output_size, L, num_rnns, fanout):
    keys = iter(jax.random.split(key, 4 * L * (num_rnns + 1) + 8))

    def rnn_params():
        bound = 1.0 / math.sqrt(H)
        layers = []
        for l in range(L):
            in_dim = input_size if l == 0 else H
            layers.append((
                _uniform(next(keys), (in_dim, H), bound),   # W_ih^T
                _uniform(next(keys), (H, H), bound),        # W_hh^T
                _uniform(next(keys), (1, H), bound),        # b_ih
                _uniform(next(keys), (1, H), bound),        # b_hh
            ))
        return layers

    relu_rnns = [rnn_params() for _ in range(num_rnns)]
    tanh_rnn = rnn_params()

    Hf = H * fanout
    b1w = 1.0 / math.sqrt(2 * H)
    b2w = 1.0 / math.sqrt(Hf)
    b3w = 1.0 / math.sqrt(H * (fanout + 1))
    fcn = (
        _uniform(next(keys), (2 * H, Hf), b1w),          # fc1 weight^T
        _uniform(next(keys), (1, Hf), b1w),              # fc1 bias
        _uniform(next(keys), (Hf, H), b2w),              # fc2 weight^T
        _uniform(next(keys), (1, H), b2w),               # fc2 bias
        _uniform(next(keys), (Hf, output_size), b3w),    # fc3 weight^T (out1 part)
        _uniform(next(keys), (H, output_size), b3w),     # fc3 weight^T (out2 part)
        _uniform(next(keys), (1, output_size), b3w),     # fc3 bias
    )
    return {"relu_rnns": relu_rnns, "tanh_rnn": tanh_rnn, "fcn": fcn}


# ----------------------------------------------------------------------------
if __name__ == "__main__":
    input_size, output_size = 8, 4
    hidden_sizes = [32, 16]
    num_layers = [1, 2]
    num_blocks = 2
    window_size = 6            # -> num_rnns = 3 per block
    fcn_fanout = 4
    T, B = 8, 4

    num_rnns = window_size // 2 if window_size % 2 == 0 else (window_size + 1) // 2

    root = jax.random.PRNGKey(0)
    kx, kparams, kperm = jax.random.split(root, 3)
    x = jax.random.normal(kx, (T, B, input_size), jnp.float32)

    pkeys = jax.random.split(kparams, num_blocks)
    permkeys = jax.random.split(kperm, num_blocks)
    block_params, block_perms = [], []
    for b in range(num_blocks):
        block_params.append(init_block_params(
            pkeys[b], input_size, hidden_sizes[b], output_size,
            num_layers[b], num_rnns, fcn_fanout))
        rkeys = jax.random.split(permkeys[b], num_rnns)
        block_perms.append([jax.random.permutation(rk, B) for rk in rkeys])

    total_h = sum(hidden_sizes)
    block_weights = [h / total_h for h in hidden_sizes]

    # One-time packing of weights into the fused/block-diagonal kernel form.
    prepared = [prepare_block(p, perms, B)
                for p, perms in zip(block_params, block_perms)]

    forward = jax.jit(
        lambda xx: fused_rtrnn_forward_pallas(xx, prepared, block_weights))
    out = jax.block_until_ready(forward(x))
    assert out.shape == (T, output_size), out.shape

    ref = fused_rtrnn_ref(x, block_params, block_perms, block_weights)
    assert jnp.allclose(out, ref, atol=1e-2, rtol=1e-2), (
        float(jnp.max(jnp.abs(out - ref))))

    print("KERNEL_OK")
</pallas_src>

<mosaic_0001>
module attributes {stable_mosaic.version = 11 : i64} {
  func.func @_rtrnn_block_kernel(%arg0: memref<8x32xf32, #tpu.memory_space<vmem>>, %arg1: memref<32x128xf32, #tpu.memory_space<vmem>>, %arg2: memref<128x128xf32, #tpu.memory_space<vmem>>, %arg3: memref<1x128xf32, #tpu.memory_space<vmem>>, %arg4: memref<128x128xf32, #tpu.memory_space<vmem>>, %arg5: memref<1x128xf32, #tpu.memory_space<vmem>>, %arg6: memref<128x32xf32, #tpu.memory_space<vmem>>, %arg7: memref<1x32xf32, #tpu.memory_space<vmem>>, %arg8: memref<128x4xf32, #tpu.memory_space<vmem>>, %arg9: memref<32x4xf32, #tpu.memory_space<vmem>>, %arg10: memref<1x4xf32, #tpu.memory_space<vmem>>, %arg11: memref<8x4xf32, #tpu.memory_space<vmem>>, %arg12: memref<8x128xf32, #tpu.memory_space<vmem>>, %arg13: memref<8x128xf32, #tpu.memory_space<vmem>>) attributes {dimension_semantics = [], scalar_prefetch = 0 : i64, scratch_operands = 2 : i64, tpu.core_type = #tpu.core_type<tc>} {
    %0 = tpu.iota {dimensions = array<i32: 1>} : vector<1x128xi32>
    %c96_i32 = arith.constant 96 : i32
    %1 = vector.broadcast %c96_i32 : i32 to vector<1x128xi32>
    %2 = arith.cmpi slt, %0, %1 : vector<1x128xi32>
    %c0 = arith.constant 0 : index
    %c0_0 = arith.constant 0 : index
    %3 = vector.load %arg0[%c0, %c0_0] : memref<8x32xf32, #tpu.memory_space<vmem>>, vector<8x32xf32>
    %c0_1 = arith.constant 0 : index
    %c0_2 = arith.constant 0 : index
    %4 = vector.load %arg1[%c0_1, %c0_2] : memref<32x128xf32, #tpu.memory_space<vmem>>, vector<32x128xf32>
    %cst = arith.constant dense<0.000000e+00> : vector<8x128xf32>
    %5 = tpu.matmul %3, %4, %cst {dimension_numbers = #tpu.dot_dimension_numbers<[1], [0], [0], [1], [0, 0, 1, 1], [], []>} : vector<8x32xf32>, vector<32x128xf32>, vector<8x128xf32> -> vector<8x128xf32>
    %c0_3 = arith.constant 0 : index
    %c0_4 = arith.constant 0 : index
    %6 = vector.load %arg3[%c0_3, %c0_4] : memref<1x128xf32, #tpu.memory_space<vmem>>, vector<1x128xf32>
    %7 = vector.broadcast %6 : vector<1x128xf32> to vector<8x128xf32>
    %8 = arith.addf %5, %7 : vector<8x128xf32>
    %c0_5 = arith.constant 0 : index
    %c0_6 = arith.constant 0 : index
    %9 = vector.load %arg12[%c0_5, %c0_6] : memref<8x128xf32, #tpu.memory_space<vmem>>, vector<8x128xf32>
    tpu.vector_store %arg12[%c0_5, %c0_6], %8 {strides = array<i32>} : memref<8x128xf32, #tpu.memory_space<vmem>>, vector<8x128xf32>,
    %c0_7 = arith.constant 0 : index
    %c0_8 = arith.constant 0 : index
    %10 = vector.load %arg2[%c0_7, %c0_8] : memref<128x128xf32, #tpu.memory_space<vmem>>, vector<128x128xf32>
    %cst_9 = arith.constant 0.000000e+00 : f32
    %11 = vector.broadcast %cst_9 : f32 to vector<1x128xf32>
    %c0_i32 = arith.constant 0 : i32
    %12 = arith.index_cast %c0_i32 : i32 to index
    %c0_10 = arith.constant 0 : index
    %13 = vector.load %arg12[%12, %c0_10] : memref<8x128xf32, #tpu.memory_space<vmem>>, vector<1x128xf32>
    %cst_11 = arith.constant dense<0.000000e+00> : vector<1x128xf32>
    %14 = tpu.matmul %11, %10, %cst_11 {dimension_numbers = #tpu.dot_dimension_numbers<[1], [0], [0], [1], [0, 0, 1, 1], [], []>} : vector<1x128xf32>, vector<128x128xf32>, vector<1x128xf32> -> vector<1x128xf32>
    %15 = arith.addf %13, %14 : vector<1x128xf32>
    %cst_12 = arith.constant 0.000000e+00 : f32
    %16 = vector.broadcast %cst_12 : f32 to vector<1x128xf32>
    %17 = arith.maximumf %15, %16 : vector<1x128xf32>
    %18 = math.tanh %15 : vector<1x128xf32>
    %19 = arith.select %2, %17, %18 : vector<1x128xi1>, vector<1x128xf32>
    %20 = arith.index_cast %c0_i32 : i32 to index
    %c0_13 = arith.constant 0 : index
    %21 = vector.load %arg13[%20, %c0_13] : memref<8x128xf32, #tpu.memory_space<vmem>>, vector<1x128xf32>
    tpu.vector_store %arg13[%20, %c0_13], %19 {strides = array<i32>} : memref<8x128xf32, #tpu.memory_space<vmem>>, vector<1x128xf32>,
    %c1_i32 = arith.constant 1 : i32
    %22 = arith.index_cast %c1_i32 : i32 to index
    %c0_14 = arith.constant 0 : index
    %23 = vector.load %arg12[%22, %c0_14] : memref<8x128xf32, #tpu.memory_space<vmem>>, vector<1x128xf32>
    %cst_15 = arith.constant dense<0.000000e+00> : vector<1x128xf32>
    %24 = tpu.matmul %19, %10, %cst_15 {dimension_numbers = #tpu.dot_dimension_numbers<[1], [0], [0], [1], [0, 0, 1, 1], [], []>} : vector<1x128xf32>, vector<128x128xf32>, vector<1x128xf32> -> vector<1x128xf32>
    %25 = arith.addf %23, %24 : vector<1x128xf32>
    %cst_16 = arith.constant 0.000000e+00 : f32
    %26 = vector.broadcast %cst_16 : f32 to vector<1x128xf32>
    %27 = arith.maximumf %25, %26 : vector<1x128xf32>
    %28 = math.tanh %25 : vector<1x128xf32>
    %29 = arith.select %2, %27, %28 : vector<1x128xi1>, vector<1x128xf32>
    %30 = arith.index_cast %c1_i32 : i32 to index
    %c0_17 = arith.constant 0 : index
    %31 = vector.load %arg13[%30, %c0_17] : memref<8x128xf32, #tpu.memory_space<vmem>>, vector<1x128xf32>
    tpu.vector_store %arg13[%30, %c0_17], %29 {strides = array<i32>} : memref<8x128xf32, #tpu.memory_space<vmem>>, vector<1x128xf32>,
    %c2_i32 = arith.constant 2 : i32
    %32 = arith.index_cast %c2_i32 : i32 to index
    %c0_18 = arith.constant 0 : index
    %33 = vector.load %arg12[%32, %c0_18] : memref<8x128xf32, #tpu.memory_space<vmem>>, vector<1x128xf32>
    %cst_19 = arith.constant dense<0.000000e+00> : vector<1x128xf32>
    %34 = tpu.matmul %29, %10, %cst_19 {dimension_numbers = #tpu.dot_dimension_numbers<[1], [0], [0], [1], [0, 0, 1, 1], [], []>} : vector<1x128xf32>, vector<128x128xf32>, vector<1x128xf32> -> vector<1x128xf32>
    %35 = arith.addf %33, %34 : vector<1x128xf32>
    %cst_20 = arith.constant 0.000000e+00 : f32
    %36 = vector.broadcast %cst_20 : f32 to vector<1x128xf32>
    %37 = arith.maximumf %35, %36 : vector<1x128xf32>
    %38 = math.tanh %35 : vector<1x128xf32>
    %39 = arith.select %2, %37, %38 : vector<1x128xi1>, vector<1x128xf32>
    %40 = arith.index_cast %c2_i32 : i32 to index
    %c0_21 = arith.constant 0 : index
    %41 = vector.load %arg13[%40, %c0_21] : memref<8x128xf32, #tpu.memory_space<vmem>>, vector<1x128xf32>
    tpu.vector_store %arg13[%40, %c0_21], %39 {strides = array<i32>} : memref<8x128xf32, #tpu.memory_space<vmem>>, vector<1x128xf32>,
    %c3_i32 = arith.constant 3 : i32
    %42 = arith.index_cast %c3_i32 : i32 to index
    %c0_22 = arith.constant 0 : index
    %43 = vector.load %arg12[%42, %c0_22] : memref<8x128xf32, #tpu.memory_space<vmem>>, vector<1x128xf32>
    %cst_23 = arith.constant dense<0.000000e+00> : vector<1x128xf32>
    %44 = tpu.matmul %39, %10, %cst_23 {dimension_numbers = #tpu.dot_dimension_numbers<[1], [0], [0], [1], [0, 0, 1, 1], [], []>} : vector<1x128xf32>, vector<128x128xf32>, vector<1x128xf32> -> vector<1x128xf32>
    %45 = arith.addf %43, %44 : vector<1x128xf32>
    %cst_24 = arith.constant 0.000000e+00 : f32
    %46 = vector.broadcast %cst_24 : f32 to vector<1x128xf32>
    %47 = arith.maximumf %45, %46 : vector<1x128xf32>
    %48 = math.tanh %45 : vector<1x128xf32>
    %49 = arith.select %2, %47, %48 : vector<1x128xi1>, vector<1x128xf32>
    %50 = arith.index_cast %c3_i32 : i32 to index
    %c0_25 = arith.constant 0 : index
    %51 = vector.load %arg13[%50, %c0_25] : memref<8x128xf32, #tpu.memory_space<vmem>>, vector<1x128xf32>
    tpu.vector_store %arg13[%50, %c0_25], %49 {strides = array<i32>} : memref<8x128xf32, #tpu.memory_space<vmem>>, vector<1x128xf32>,
    %c4_i32 = arith.constant 4 : i32
    %52 = arith.index_cast %c4_i32 : i32 to index
    %c0_26 = arith.constant 0 : index
    %53 = vector.load %arg12[%52, %c0_26] : memref<8x128xf32, #tpu.memory_space<vmem>>, vector<1x128xf32>
    %cst_27 = arith.constant dense<0.000000e+00> : vector<1x128xf32>
    %54 = tpu.matmul %49, %10, %cst_27 {dimension_numbers = #tpu.dot_dimension_numbers<[1], [0], [0], [1], [0, 0, 1, 1], [], []>} : vector<1x128xf32>, vector<128x128xf32>, vector<1x128xf32> -> vector<1x128xf32>
    %55 = arith.addf %53, %54 : vector<1x128xf32>
    %cst_28 = arith.constant 0.000000e+00 : f32
    %56 = vector.broadcast %cst_28 : f32 to vector<1x128xf32>
    %57 = arith.maximumf %55, %56 : vector<1x128xf32>
    %58 = math.tanh %55 : vector<1x128xf32>
    %59 = arith.select %2, %57, %58 : vector<1x128xi1>, vector<1x128xf32>
    %60 = arith.index_cast %c4_i32 : i32 to index
    %c0_29 = arith.constant 0 : index
    %61 = vector.load %arg13[%60, %c0_29] : memref<8x128xf32, #tpu.memory_space<vmem>>, vector<1x128xf32>
    tpu.vector_store %arg13[%60, %c0_29], %59 {strides = array<i32>} : memref<8x128xf32, #tpu.memory_space<vmem>>, vector<1x128xf32>,
    %c5_i32 = arith.constant 5 : i32
    %62 = arith.index_cast %c5_i32 : i32 to index
    %c0_30 = arith.constant 0 : index
    %63 = vector.load %arg12[%62, %c0_30] : memref<8x128xf32, #tpu.memory_space<vmem>>, vector<1x128xf32>
    %cst_31 = arith.constant dense<0.000000e+00> : vector<1x128xf32>
    %64 = tpu.matmul %59, %10, %cst_31 {dimension_numbers = #tpu.dot_dimension_numbers<[1], [0], [0], [1], [0, 0, 1, 1], [], []>} : vector<1x128xf32>, vector<128x128xf32>, vector<1x128xf32> -> vector<1x128xf32>
    %65 = arith.addf %63, %64 : vector<1x128xf32>
    %cst_32 = arith.constant 0.000000e+00 : f32
    %66 = vector.broadcast %cst_32 : f32 to vector<1x128xf32>
    %67 = arith.maximumf %65, %66 : vector<1x128xf32>
    %68 = math.tanh %65 : vector<1x128xf32>
    %69 = arith.select %2, %67, %68 : vector<1x128xi1>, vector<1x128xf32>
    %70 = arith.index_cast %c5_i32 : i32 to index
    %c0_33 = arith.constant 0 : index
    %71 = vector.load %arg13[%70, %c0_33] : memref<8x128xf32, #tpu.memory_space<vmem>>, vector<1x128xf32>
    tpu.vector_store %arg13[%70, %c0_33], %69 {strides = array<i32>} : memref<8x128xf32, #tpu.memory_space<vmem>>, vector<1x128xf32>,
    %c6_i32 = arith.constant 6 : i32
    %72 = arith.index_cast %c6_i32 : i32 to index
    %c0_34 = arith.constant 0 : index
    %73 = vector.load %arg12[%72, %c0_34] : memref<8x128xf32, #tpu.memory_space<vmem>>, vector<1x128xf32>
    %cst_35 = arith.constant dense<0.000000e+00> : vector<1x128xf32>
    %74 = tpu.matmul %69, %10, %cst_35 {dimension_numbers = #tpu.dot_dimension_numbers<[1], [0], [0], [1], [0, 0, 1, 1], [], []>} : vector<1x128xf32>, vector<128x128xf32>, vector<1x128xf32> -> vector<1x128xf32>
    %75 = arith.addf %73, %74 : vector<1x128xf32>
    %cst_36 = arith.constant 0.000000e+00 : f32
    %76 = vector.broadcast %cst_36 : f32 to vector<1x128xf32>
    %77 = arith.maximumf %75, %76 : vector<1x128xf32>
    %78 = math.tanh %75 : vector<1x128xf32>
    %79 = arith.select %2, %77, %78 : vector<1x128xi1>, vector<1x128xf32>
    %80 = arith.index_cast %c6_i32 : i32 to index
    %c0_37 = arith.constant 0 : index
    %81 = vector.load %arg13[%80, %c0_37] : memref<8x128xf32, #tpu.memory_space<vmem>>, vector<1x128xf32>
    tpu.vector_store %arg13[%80, %c0_37], %79 {strides = array<i32>} : memref<8x128xf32, #tpu.memory_space<vmem>>, vector<1x128xf32>,
    %c7_i32 = arith.constant 7 : i32
    %82 = arith.index_cast %c7_i32 : i32 to index
    %c0_38 = arith.constant 0 : index
    %83 = vector.load %arg12[%82, %c0_38] : memref<8x128xf32, #tpu.memory_space<vmem>>, vector<1x128xf32>
    %cst_39 = arith.constant dense<0.000000e+00> : vector<1x128xf32>
    %84 = tpu.matmul %79, %10, %cst_39 {dimension_numbers = #tpu.dot_dimension_numbers<[1], [0], [0], [1], [0, 0, 1, 1], [], []>} : vector<1x128xf32>, vector<128x128xf32>, vector<1x128xf32> -> vector<1x128xf32>
    %85 = arith.addf %83, %84 : vector<1x128xf32>
    %cst_40 = arith.constant 0.000000e+00 : f32
    %86 = vector.broadcast %cst_40 : f32 to vector<1x128xf32>
    %87 = arith.maximumf %85, %86 : vector<1x128xf32>
    %88 = math.tanh %85 : vector<1x128xf32>
    %89 = arith.select %2, %87, %88 : vector<1x128xi1>, vector<1x128xf32>
    %90 = arith.index_cast %c7_i32 : i32 to index
    %c0_41 = arith.constant 0 : index
    %91 = vector.load %arg13[%90, %c0_41] : memref<8x128xf32, #tpu.memory_space<vmem>>, vector<1x128xf32>
    tpu.vector_store %arg13[%90, %c0_41], %89 {strides = array<i32>} : memref<8x128xf32, #tpu.memory_space<vmem>>, vector<1x128xf32>,
    %c8_i32 = arith.constant 8 : i32
    %c0_42 = arith.constant 0 : index
    %c0_43 = arith.constant 0 : index
    %92 = vector.load %arg13[%c0_42, %c0_43] : memref<8x128xf32, #tpu.memory_space<vmem>>, vector<8x128xf32>
    %c0_44 = arith.constant 0 : index
    %c0_45 = arith.constant 0 : index
    %93 = vector.load %arg4[%c0_44, %c0_45] : memref<128x128xf32, #tpu.memory_space<vmem>>, vector<128x128xf32>
    %cst_46 = arith.constant dense<0.000000e+00> : vector<8x128xf32>
    %94 = tpu.matmul %92, %93, %cst_46 {dimension_numbers = #tpu.dot_dimension_numbers<[1], [0], [0], [1], [0, 0, 1, 1], [], []>} : vector<8x128xf32>, vector<128x128xf32>, vector<8x128xf32> -> vector<8x128xf32>
    %c0_47 = arith.constant 0 : index
    %c0_48 = arith.constant 0 : index
    %95 = vector.load %arg5[%c0_47, %c0_48] : memref<1x128xf32, #tpu.memory_space<vmem>>, vector<1x128xf32>
    %96 = vector.broadcast %95 : vector<1x128xf32> to vector<8x128xf32>
    %97 = arith.addf %94, %96 : vector<8x128xf32>
    %cst_49 = arith.constant 0.000000e+00 : f32
    %98 = vector.broadcast %cst_49 : f32 to vector<8x128xf32>
    %99 = arith.cmpf oge, %97, %98 : vector<8x128xf32>
    %cst_50 = arith.constant 0.229166672 : f32
    %100 = vector.broadcast %cst_50 : f32 to vector<8x128xf32>
    %101 = arith.mulf %100, %97 : vector<8x128xf32>
    %102 = arith.select %99, %97, %101 : vector<8x128xi1>, vector<8x128xf32>
    %c0_51 = arith.constant 0 : index
    %c0_52 = arith.constant 0 : index
    %103 = vector.load %arg6[%c0_51, %c0_52] : memref<128x32xf32, #tpu.memory_space<vmem>>, vector<128x32xf32>
    %cst_53 = arith.constant dense<0.000000e+00> : vector<8x32xf32>
    %104 = tpu.matmul %102, %103, %cst_53 {dimension_numbers = #tpu.dot_dimension_numbers<[1], [0], [0], [1], [0, 0, 1, 1], [], []>} : vector<8x128xf32>, vector<128x32xf32>, vector<8x32xf32> -> vector<8x32xf32>
    %c0_54 = arith.constant 0 : index
    %c0_55 = arith.constant 0 : index
    %105 = vector.load %arg7[%c0_54, %c0_55] : memref<1x32xf32, #tpu.memory_space<vmem>>, vector<1x32xf32>
    %106 = vector.broadcast %105 : vector<1x32xf32> to vector<8x32xf32>
    %107 = arith.addf %104, %106 : vector<8x32xf32>
    %108 = math.tanh %107 : vector<8x32xf32>
    %c0_56 = arith.constant 0 : index
    %c0_57 = arith.constant 0 : index
    %109 = vector.load %arg8[%c0_56, %c0_57] : memref<128x4xf32, #tpu.memory_space<vmem>>, vector<128x4xf32>
    %cst_58 = arith.constant dense<0.000000e+00> : vector<8x4xf32>
    %110 = tpu.matmul %102, %109, %cst_58 {dimension_numbers = #tpu.dot_dimension_numbers<[1], [0], [0], [1], [0, 0, 1, 1], [], []>} : vector<8x128xf32>, vector<128x4xf32>, vector<8x4xf32> -> vector<8x4xf32>
    %c0_59 = arith.constant 0 : index
    %c0_60 = arith.constant 0 : index
    %111 = vector.load %arg9[%c0_59, %c0_60] : memref<32x4xf32, #tpu.memory_space<vmem>>, vector<32x4xf32>
    %cst_61 = arith.constant dense<0.000000e+00> : vector<8x4xf32>
    %112 = tpu.matmul %108, %111, %cst_61 {dimension_numbers = #tpu.dot_dimension_numbers<[1], [0], [0], [1], [0, 0, 1, 1], [], []>} : vector<8x32xf32>, vector<32x4xf32>, vector<8x4xf32> -> vector<8x4xf32>
    %113 = arith.addf %110, %112 : vector<8x4xf32>
    %c0_62 = arith.constant 0 : index
    %c0_63 = arith.constant 0 : index
    %114 = vector.load %arg10[%c0_62, %c0_63] : memref<1x4xf32, #tpu.memory_space<vmem>>, vector<1x4xf32>
    %115 = vector.broadcast %114 : vector<1x4xf32> to vector<8x4xf32>
    %116 = arith.addf %113, %115 : vector<8x4xf32>
    %c0_64 = arith.constant 0 : index
    %c0_65 = arith.constant 0 : index
    %117 = vector.load %arg11[%c0_64, %c0_65] : memref<8x4xf32, #tpu.memory_space<vmem>>, vector<8x4xf32>
    tpu.vector_store %arg11[%c0_64, %c0_65], %116 {strides = array<i32>} : memref<8x4xf32, #tpu.memory_space<vmem>>, vector<8x4xf32>,
    return
  }
}

module attributes {stable_mosaic.version = 11 : i64} {
  func.func @_rtrnn_block_kernel(%arg0: memref<8x32xf32, #tpu.memory_space<vmem>>, %arg1: memref<32x64xf32, #tpu.memory_space<vmem>>, %arg2: memref<64x64xf32, #tpu.memory_space<vmem>>, %arg3: memref<64x64xf32, #tpu.memory_space<vmem>>, %arg4: memref<64x64xf32, #tpu.memory_space<vmem>>, %arg5: memref<1x64xf32, #tpu.memory_space<vmem>>, %arg6: memref<1x64xf32, #tpu.memory_space<vmem>>, %arg7: memref<64x64xf32, #tpu.memory_space<vmem>>, %arg8: memref<1x64xf32, #tpu.memory_space<vmem>>, %arg9: memref<64x16xf32, #tpu.memory_space<vmem>>, %arg10: memref<1x16xf32, #tpu.memory_space<vmem>>, %arg11: memref<64x4xf32, #tpu.memory_space<vmem>>, %arg12: memref<16x4xf32, #tpu.memory_space<vmem>>, %arg13: memref<1x4xf32, #tpu.memory_space<vmem>>, %arg14: memref<8x4xf32, #tpu.memory_space<vmem>>, %arg15: memref<8x64xf32, #tpu.memory_space<vmem>>, %arg16: memref<8x64xf32, #tpu.memory_space<vmem>>) attributes {dimension_semantics = [], scalar_prefetch = 0 : i64, scratch_operands = 2 : i64, tpu.core_type = #tpu.core_type<tc>} {
    %0 = tpu.iota {dimensions = array<i32: 1>} : vector<1x64xi32>
    %c48_i32 = arith.constant 48 : i32
    %1 = vector.broadcast %c48_i32 : i32 to vector<1x64xi32>
    %2 = arith.cmpi slt, %0, %1 : vector<1x64xi32>
    %c0 = arith.constant 0 : index
    %c0_0 = arith.constant 0 : index
    %3 = vector.load %arg0[%c0, %c0_0] : memref<8x32xf32, #tpu.memory_space<vmem>>, vector<8x32xf32>
    %c0_1 = arith.constant 0 : index
    %c0_2 = arith.constant 0 : index
    %4 = vector.load %arg1[%c0_1, %c0_2] : memref<32x64xf32, #tpu.memory_space<vmem>>, vector<32x64xf32>
    %cst = arith.constant dense<0.000000e+00> : vector<8x64xf32>
    %5 = tpu.matmul %3, %4, %cst {dimension_numbers = #tpu.dot_dimension_numbers<[1], [0], [0], [1], [0, 0, 1, 1], [], []>} : vector<8x32xf32>, vector<32x64xf32>, vector<8x64xf32> -> vector<8x64xf32>
    %c0_3 = arith.constant 0 : index
    %c0_4 = arith.constant 0 : index
    %6 = vector.load %arg5[%c0_3, %c0_4] : memref<1x64xf32, #tpu.memory_space<vmem>>, vector<1x64xf32>
    %7 = vector.broadcast %6 : vector<1x64xf32> to vector<8x64xf32>
    %8 = arith.addf %5, %7 : vector<8x64xf32>
    %c0_5 = arith.constant 0 : index
    %c0_6 = arith.constant 0 : index
    %9 = vector.load %arg15[%c0_5, %c0_6] : memref<8x64xf32, #tpu.memory_space<vmem>>, vector<8x64xf32>
    tpu.vector_store %arg15[%c0_5, %c0_6], %8 {strides = array<i32>} : memref<8x64xf32, #tpu.memory_space<vmem>>, vector<8x64xf32>,
    %c0_7 = arith.constant 0 : index
    %c0_8 = arith.constant 0 : index
    %10 = vector.load %arg3[%c0_7, %c0_8] : memref<64x64xf32, #tpu.memory_space<vmem>>, vector<64x64xf32>
    %cst_9 = arith.constant 0.000000e+00 : f32
    %11 = vector.broadcast %cst_9 : f32 to vector<1x64xf32>
    %c0_i32 = arith.constant 0 : i32
    %12 = arith.index_cast %c0_i32 : i32 to index
    %c0_10 = arith.constant 0 : index
    %13 = vector.load %arg15[%12, %c0_10] : memref<8x64xf32, #tpu.memory_space<vmem>>, vector<1x64xf32>
    %cst_11 = arith.constant dense<0.000000e+00> : vector<1x64xf32>
    %14 = tpu.matmul %11, %10, %cst_11 {dimension_numbers = #tpu.dot_dimension_numbers<[1], [0], [0], [1], [0, 0, 1, 1], [], []>} : vector<1x64xf32>, vector<64x64xf32>, vector<1x64xf32> -> vector<1x64xf32>
    %15 = arith.addf %13, %14 : vector<1x64xf32>
    %cst_12 = arith.constant 0.000000e+00 : f32
    %16 = vector.broadcast %cst_12 : f32 to vector<1x64xf32>
    %17 = arith.maximumf %15, %16 : vector<1x64xf32>
    %18 = math.tanh %15 : vector<1x64xf32>
    %19 = arith.select %2, %17, %18 : vector<1x64xi1>, vector<1x64xf32>
    %20 = arith.index_cast %c0_i32 : i32 to index
    %c0_13 = arith.constant 0 : index
    %21 = vector.load %arg16[%20, %c0_13] : memref<8x64xf32, #tpu.memory_space<vmem>>, vector<1x64xf32>
    tpu.vector_store %arg16[%20, %c0_13], %19 {strides = array<i32>} : memref<8x64xf32, #tpu.memory_space<vmem>>, vector<1x64xf32>,
    %c1_i32 = arith.constant 1 : i32
    %22 = arith.index_cast %c1_i32 : i32 to index
    %c0_14 = arith.constant 0 : index
    %23 = vector.load %arg15[%22, %c0_14] : memref<8x64xf32, #tpu.memory_space<vmem>>, vector<1x64xf32>
    %cst_15 = arith.constant dense<0.000000e+00> : vector<1x64xf32>
    %24 = tpu.matmul %19, %10, %cst_15 {dimension_numbers = #tpu.dot_dimension_numbers<[1], [0], [0], [1], [0, 0, 1, 1], [], []>} : vector<1x64xf32>, vector<64x64xf32>, vector<1x64xf32> -> vector<1x64xf32>
    %25 = arith.addf %23, %24 : vector<1x64xf32>
    %cst_16 = arith.constant 0.000000e+00 : f32
    %26 = vector.broadcast %cst_16 : f32 to vector<1x64xf32>
    %27 = arith.maximumf %25, %26 : vector<1x64xf32>
    %28 = math.tanh %25 : vector<1x64xf32>
    %29 = arith.select %2, %27, %28 : vector<1x64xi1>, vector<1x64xf32>
    %30 = arith.index_cast %c1_i32 : i32 to index
    %c0_17 = arith.constant 0 : index
    %31 = vector.load %arg16[%30, %c0_17] : memref<8x64xf32, #tpu.memory_space<vmem>>, vector<1x64xf32>
    tpu.vector_store %arg16[%30, %c0_17], %29 {strides = array<i32>} : memref<8x64xf32, #tpu.memory_space<vmem>>, vector<1x64xf32>,
    %c2_i32 = arith.constant 2 : i32
    %32 = arith.index_cast %c2_i32 : i32 to index
    %c0_18 = arith.constant 0 : index
    %33 = vector.load %arg15[%32, %c0_18] : memref<8x64xf32, #tpu.memory_space<vmem>>, vector<1x64xf32>
    %cst_19 = arith.constant dense<0.000000e+00> : vector<1x64xf32>
    %34 = tpu.matmul %29, %10, %cst_19 {dimension_numbers = #tpu.dot_dimension_numbers<[1], [0], [0], [1], [0, 0, 1, 1], [], []>} : vector<1x64xf32>, vector<64x64xf32>, vector<1x64xf32> -> vector<1x64xf32>
    %35 = arith.addf %33, %34 : vector<1x64xf32>
    %cst_20 = arith.constant 0.000000e+00 : f32
    %36 = vector.broadcast %cst_20 : f32 to vector<1x64xf32>
    %37 = arith.maximumf %35, %36 : vector<1x64xf32>
    %38 = math.tanh %35 : vector<1x64xf32>
    %39 = arith.select %2, %37, %38 : vector<1x64xi1>, vector<1x64xf32>
    %40 = arith.index_cast %c2_i32 : i32 to index
    %c0_21 = arith.constant 0 : index
    %41 = vector.load %arg16[%40, %c0_21] : memref<8x64xf32, #tpu.memory_space<vmem>>, vector<1x64xf32>
    tpu.vector_store %arg16[%40, %c0_21], %39 {strides = array<i32>} : memref<8x64xf32, #tpu.memory_space<vmem>>, vector<1x64xf32>,
    %c3_i32 = arith.constant 3 : i32
    %42 = arith.index_cast %c3_i32 : i32 to index
    %c0_22 = arith.constant 0 : index
    %43 = vector.load %arg15[%42, %c0_22] : memref<8x64xf32, #tpu.memory_space<vmem>>, vector<1x64xf32>
    %cst_23 = arith.constant dense<0.000000e+00> : vector<1x64xf32>
    %44 = tpu.matmul %39, %10, %cst_23 {dimension_numbers = #tpu.dot_dimension_numbers<[1], [0], [0], [1], [0, 0, 1, 1], [], []>} : vector<1x64xf32>, vector<64x64xf32>, vector<1x64xf32> -> vector<1x64xf32>
    %45 = arith.addf %43, %44 : vector<1x64xf32>
    %cst_24 = arith.constant 0.000000e+00 : f32
    %46 = vector.broadcast %cst_24 : f32 to vector<1x64xf32>
    %47 = arith.maximumf %45, %46 : vector<1x64xf32>
    %48 = math.tanh %45 : vector<1x64xf32>
    %49 = arith.select %2, %47, %48 : vector<1x64xi1>, vector<1x64xf32>
    %50 = arith.index_cast %c3_i32 : i32 to index
    %c0_25 = arith.constant 0 : index
    %51 = vector.load %arg16[%50, %c0_25] : memref<8x64xf32, #tpu.memory_space<vmem>>, vector<1x64xf32>
    tpu.vector_store %arg16[%50, %c0_25], %49 {strides = array<i32>} : memref<8x64xf32, #tpu.memory_space<vmem>>, vector<1x64xf32>,
    %c4_i32 = arith.constant 4 : i32
    %52 = arith.index_cast %c4_i32 : i32 to index
    %c0_26 = arith.constant 0 : index
    %53 = vector.load %arg15[%52, %c0_26] : memref<8x64xf32, #tpu.memory_space<vmem>>, vector<1x64xf32>
    %cst_27 = arith.constant dense<0.000000e+00> : vector<1x64xf32>
    %54 = tpu.matmul %49, %10, %cst_27 {dimension_numbers = #tpu.dot_dimension_numbers<[1], [0], [0], [1], [0, 0, 1, 1], [], []>} : vector<1x64xf32>, vector<64x64xf32>, vector<1x64xf32> -> vector<1x64xf32>
    %55 = arith.addf %53, %54 : vector<1x64xf32>
    %cst_28 = arith.constant 0.000000e+00 : f32
    %56 = vector.broadcast %cst_28 : f32 to vector<1x64xf32>
    %57 = arith.maximumf %55, %56 : vector<1x64xf32>
    %58 = math.tanh %55 : vector<1x64xf32>
    %59 = arith.select %2, %57, %58 : vector<1x64xi1>, vector<1x64xf32>
    %60 = arith.index_cast %c4_i32 : i32 to index
    %c0_29 = arith.constant 0 : index
    %61 = vector.load %arg16[%60, %c0_29] : memref<8x64xf32, #tpu.memory_space<vmem>>, vector<1x64xf32>
    tpu.vector_store %arg16[%60, %c0_29], %59 {strides = array<i32>} : memref<8x64xf32, #tpu.memory_space<vmem>>, vector<1x64xf32>,
    %c5_i32 = arith.constant 5 : i32
    %62 = arith.index_cast %c5_i32 : i32 to index
    %c0_30 = arith.constant 0 : index
    %63 = vector.load %arg15[%62, %c0_30] : memref<8x64xf32, #tpu.memory_space<vmem>>, vector<1x64xf32>
    %cst_31 = arith.constant dense<0.000000e+00> : vector<1x64xf32>
    %64 = tpu.matmul %59, %10, %cst_31 {dimension_numbers = #tpu.dot_dimension_numbers<[1], [0], [0], [1], [0, 0, 1, 1], [], []>} : vector<1x64xf32>, vector<64x64xf32>, vector<1x64xf32> -> vector<1x64xf32>
    %65 = arith.addf %63, %64 : vector<1x64xf32>
    %cst_32 = arith.constant 0.000000e+00 : f32
    %66 = vector.broadcast %cst_32 : f32 to vector<1x64xf32>
    %67 = arith.maximumf %65, %66 : vector<1x64xf32>
    %68 = math.tanh %65 : vector<1x64xf32>
    %69 = arith.select %2, %67, %68 : vector<1x64xi1>, vector<1x64xf32>
    %70 = arith.index_cast %c5_i32 : i32 to index
    %c0_33 = arith.constant 0 : index
    %71 = vector.load %arg16[%70, %c0_33] : memref<8x64xf32, #tpu.memory_space<vmem>>, vector<1x64xf32>
    tpu.vector_store %arg16[%70, %c0_33], %69 {strides = array<i32>} : memref<8x64xf32, #tpu.memory_space<vmem>>, vector<1x64xf32>,
    %c6_i32 = arith.constant 6 : i32
    %72 = arith.index_cast %c6_i32 : i32 to index
    %c0_34 = arith.constant 0 : index
    %73 = vector.load %arg15[%72, %c0_34] : memref<8x64xf32, #tpu.memory_space<vmem>>, vector<1x64xf32>
    %cst_35 = arith.constant dense<0.000000e+00> : vector<1x64xf32>
    %74 = tpu.matmul %69, %10, %cst_35 {dimension_numbers = #tpu.dot_dimension_numbers<[1], [0], [0], [1], [0, 0, 1, 1], [], []>} : vector<1x64xf32>, vector<64x64xf32>, vector<1x64xf32> -> vector<1x64xf32>
    %75 = arith.addf %73, %74 : vector<1x64xf32>
    %cst_36 = arith.constant 0.000000e+00 : f32
    %76 = vector.broadcast %cst_36 : f32 to vector<1x64xf32>
    %77 = arith.maximumf %75, %76 : vector<1x64xf32>
    %78 = math.tanh %75 : vector<1x64xf32>
    %79 = arith.select %2, %77, %78 : vector<1x64xi1>, vector<1x64xf32>
    %80 = arith.index_cast %c6_i32 : i32 to index
    %c0_37 = arith.constant 0 : index
    %81 = vector.load %arg16[%80, %c0_37] : memref<8x64xf32, #tpu.memory_space<vmem>>, vector<1x64xf32>
    tpu.vector_store %arg16[%80, %c0_37], %79 {strides = array<i32>} : memref<8x64xf32, #tpu.memory_space<vmem>>, vector<1x64xf32>,
    %c7_i32 = arith.constant 7 : i32
    %82 = arith.index_cast %c7_i32 : i32 to index
    %c0_38 = arith.constant 0 : index
    %83 = vector.load %arg15[%82, %c0_38] : memref<8x64xf32, #tpu.memory_space<vmem>>, vector<1x64xf32>
    %cst_39 = arith.constant dense<0.000000e+00> : vector<1x64xf32>
    %84 = tpu.matmul %79, %10, %cst_39 {dimension_numbers = #tpu.dot_dimension_numbers<[1], [0], [0], [1], [0, 0, 1, 1], [], []>} : vector<1x64xf32>, vector<64x64xf32>, vector<1x64xf32> -> vector<1x64xf32>
    %85 = arith.addf %83, %84 : vector<1x64xf32>
    %cst_40 = arith.constant 0.000000e+00 : f32
    %86 = vector.broadcast %cst_40 : f32 to vector<1x64xf32>
    %87 = arith.maximumf %85, %86 : vector<1x64xf32>
    %88 = math.tanh %85 : vector<1x64xf32>
    %89 = arith.select %2, %87, %88 : vector<1x64xi1>, vector<1x64xf32>
    %90 = arith.index_cast %c7_i32 : i32 to index
    %c0_41 = arith.constant 0 : index
    %91 = vector.load %arg16[%90, %c0_41] : memref<8x64xf32, #tpu.memory_space<vmem>>, vector<1x64xf32>
    tpu.vector_store %arg16[%90, %c0_41], %89 {strides = array<i32>} : memref<8x64xf32, #tpu.memory_space<vmem>>, vector<1x64xf32>,
    %c8_i32 = arith.constant 8 : i32
    %c0_42 = arith.constant 0 : index
    %c0_43 = arith.constant 0 : index
    %92 = vector.load %arg16[%c0_42, %c0_43] : memref<8x64xf32, #tpu.memory_space<vmem>>, vector<8x64xf32>
    %c0_44 = arith.constant 0 : index
    %c0_45 = arith.constant 0 : index
    %93 = vector.load %arg2[%c0_44, %c0_45] : memref<64x64xf32, #tpu.memory_space<vmem>>, vector<64x64xf32>
    %cst_46 = arith.constant dense<0.000000e+00> : vector<8x64xf32>
    %94 = tpu.matmul %92, %93, %cst_46 {dimension_numbers = #tpu.dot_dimension_numbers<[1], [0], [0], [1], [0, 0, 1, 1], [], []>} : vector<8x64xf32>, vector<64x64xf32>, vector<8x64xf32> -> vector<8x64xf32>
    %c0_47 = arith.constant 0 : index
    %c0_48 = arith.constant 0 : index
    %95 = vector.load %arg6[%c0_47, %c0_48] : memref<1x64xf32, #tpu.memory_space<vmem>>, vector<1x64xf32>
    %96 = vector.broadcast %95 : vector<1x64xf32> to vector<8x64xf32>
    %97 = arith.addf %94, %96 : vector<8x64xf32>
    %c0_49 = arith.constant 0 : index
    %c0_50 = arith.constant 0 : index
    %98 = vector.load %arg15[%c0_49, %c0_50] : memref<8x64xf32, #tpu.memory_space<vmem>>, vector<8x64xf32>
    tpu.vector_store %arg15[%c0_49, %c0_50], %97 {strides = array<i32>} : memref<8x64xf32, #tpu.memory_space<vmem>>, vector<8x64xf32>,
    %c0_51 = arith.constant 0 : index
    %c0_52 = arith.constant 0 : index
    %99 = vector.load %arg4[%c0_51, %c0_52] : memref<64x64xf32, #tpu.memory_space<vmem>>, vector<64x64xf32>
    %cst_53 = arith.constant 0.000000e+00 : f32
    %100 = vector.broadcast %cst_53 : f32 to vector<1x64xf32>
    %c0_i32_54 = arith.constant 0 : i32
    %101 = arith.index_cast %c0_i32_54 : i32 to index
    %c0_55 = arith.constant 0 : index
    %102 = vector.load %arg15[%101, %c0_55] : memref<8x64xf32, #tpu.memory_space<vmem>>, vector<1x64xf32>
    %cst_56 = arith.constant dense<0.000000e+00> : vector<1x64xf32>
    %103 = tpu.matmul %100, %99, %cst_56 {dimension_numbers = #tpu.dot_dimension_numbers<[1], [0], [0], [1], [0, 0, 1, 1], [], []>} : vector<1x64xf32>, vector<64x64xf32>, vector<1x64xf32> -> vector<1x64xf32>
    %104 = arith.addf %102, %103 : vector<1x64xf32>
    %cst_57 = arith.constant 0.000000e+00 : f32
    %105 = vector.broadcast %cst_57 : f32 to vector<1x64xf32>
    %106 = arith.maximumf %104, %105 : vector<1x64xf32>
    %107 = math.tanh %104 : vector<1x64xf32>
    %108 = arith.select %2, %106, %107 : vector<1x64xi1>, vector<1x64xf32>
    %109 = arith.index_cast %c0_i32_54 : i32 to index
    %c0_58 = arith.constant 0 : index
    %110 = vector.load %arg16[%109, %c0_58] : memref<8x64xf32, #tpu.memory_space<vmem>>, vector<1x64xf32>
    tpu.vector_store %arg16[%109, %c0_58], %108 {strides = array<i32>} : memref<8x64xf32, #tpu.memory_space<vmem>>, vector<1x64xf32>,
    %c1_i32_59 = arith.constant 1 : i32
    %111 = arith.index_cast %c1_i32_59 : i32 to index
    %c0_60 = arith.constant 0 : index
    %112 = vector.load %arg15[%111, %c0_60] : memref<8x64xf32, #tpu.memory_space<vmem>>, vector<1x64xf32>
    %cst_61 = arith.constant dense<0.000000e+00> : vector<1x64xf32>
    %113 = tpu.matmul %108, %99, %cst_61 {dimension_numbers = #tpu.dot_dimension_numbers<[1], [0], [0], [1], [0, 0, 1, 1], [], []>} : vector<1x64xf32>, vector<64x64xf32>, vector<1x64xf32> -> vector<1x64xf32>
    %114 = arith.addf %112, %113 : vector<1x64xf32>
    %cst_62 = arith.constant 0.000000e+00 : f32
    %115 = vector.broadcast %cst_62 : f32 to vector<1x64xf32>
    %116 = arith.maximumf %114, %115 : vector<1x64xf32>
    %117 = math.tanh %114 : vector<1x64xf32>
    %118 = arith.select %2, %116, %117 : vector<1x64xi1>, vector<1x64xf32>
    %119 = arith.index_cast %c1_i32_59 : i32 to index
    %c0_63 = arith.constant 0 : index
    %120 = vector.load %arg16[%119, %c0_63] : memref<8x64xf32, #tpu.memory_space<vmem>>, vector<1x64xf32>
    tpu.vector_store %arg16[%119, %c0_63], %118 {strides = array<i32>} : memref<8x64xf32, #tpu.memory_space<vmem>>, vector<1x64xf32>,
    %c2_i32_64 = arith.constant 2 : i32
    %121 = arith.index_cast %c2_i32_64 : i32 to index
    %c0_65 = arith.constant 0 : index
    %122 = vector.load %arg15[%121, %c0_65] : memref<8x64xf32, #tpu.memory_space<vmem>>, vector<1x64xf32>
    %cst_66 = arith.constant dense<0.000000e+00> : vector<1x64xf32>
    %123 = tpu.matmul %118, %99, %cst_66 {dimension_numbers = #tpu.dot_dimension_numbers<[1], [0], [0], [1], [0, 0, 1, 1], [], []>} : vector<1x64xf32>, vector<64x64xf32>, vector<1x64xf32> -> vector<1x64xf32>
    %124 = arith.addf %122, %123 : vector<1x64xf32>
    %cst_67 = arith.constant 0.000000e+00 : f32
    %125 = vector.broadcast %cst_67 : f32 to vector<1x64xf32>
    %126 = arith.maximumf %124, %125 : vector<1x64xf32>
    %127 = math.tanh %124 : vector<1x64xf32>
    %128 = arith.select %2, %126, %127 : vector<1x64xi1>, vector<1x64xf32>
    %129 = arith.index_cast %c2_i32_64 : i32 to index
    %c0_68 = arith.constant 0 : index
    %130 = vector.load %arg16[%129, %c0_68] : memref<8x64xf32, #tpu.memory_space<vmem>>, vector<1x64xf32>
    tpu.vector_store %arg16[%129, %c0_68], %128 {strides = array<i32>} : memref<8x64xf32, #tpu.memory_space<vmem>>, vector<1x64xf32>,
    %c3_i32_69 = arith.constant 3 : i32
    %131 = arith.index_cast %c3_i32_69 : i32 to index
    %c0_70 = arith.constant 0 : index
    %132 = vector.load %arg15[%131, %c0_70] : memref<8x64xf32, #tpu.memory_space<vmem>>, vector<1x64xf32>
    %cst_71 = arith.constant dense<0.000000e+00> : vector<1x64xf32>
    %133 = tpu.matmul %128, %99, %cst_71 {dimension_numbers = #tpu.dot_dimension_numbers<[1], [0], [0], [1], [0, 0, 1, 1], [], []>} : vector<1x64xf32>, vector<64x64xf32>, vector<1x64xf32> -> vector<1x64xf32>
    %134 = arith.addf %132, %133 : vector<1x64xf32>
    %cst_72 = arith.constant 0.000000e+00 : f32
    %135 = vector.broadcast %cst_72 : f32 to vector<1x64xf32>
    %136 = arith.maximumf %134, %135 : vector<1x64xf32>
    %137 = math.tanh %134 : vector<1x64xf32>
    %138 = arith.select %2, %136, %137 : vector<1x64xi1>, vector<1x64xf32>
    %139 = arith.index_cast %c3_i32_69 : i32 to index
    %c0_73 = arith.constant 0 : index
    %140 = vector.load %arg16[%139, %c0_73] : memref<8x64xf32, #tpu.memory_space<vmem>>, vector<1x64xf32>
    tpu.vector_store %arg16[%139, %c0_73], %138 {strides = array<i32>} : memref<8x64xf32, #tpu.memory_space<vmem>>, vector<1x64xf32>,
    %c4_i32_74 = arith.constant 4 : i32
    %141 = arith.index_cast %c4_i32_74 : i32 to index
    %c0_75 = arith.constant 0 : index
    %142 = vector.load %arg15[%141, %c0_75] : memref<8x64xf32, #tpu.memory_space<vmem>>, vector<1x64xf32>
    %cst_76 = arith.constant dense<0.000000e+00> : vector<1x64xf32>
    %143 = tpu.matmul %138, %99, %cst_76 {dimension_numbers = #tpu.dot_dimension_numbers<[1], [0], [0], [1], [0, 0, 1, 1], [], []>} : vector<1x64xf32>, vector<64x64xf32>, vector<1x64xf32> -> vector<1x64xf32>
    %144 = arith.addf %142, %143 : vector<1x64xf32>
    %cst_77 = arith.constant 0.000000e+00 : f32
    %145 = vector.broadcast %cst_77 : f32 to vector<1x64xf32>
    %146 = arith.maximumf %144, %145 : vector<1x64xf32>
    %147 = math.tanh %144 : vector<1x64xf32>
    %148 = arith.select %2, %146, %147 : vector<1x64xi1>, vector<1x64xf32>
    %149 = arith.index_cast %c4_i32_74 : i32 to index
    %c0_78 = arith.constant 0 : index
    %150 = vector.load %arg16[%149, %c0_78] : memref<8x64xf32, #tpu.memory_space<vmem>>, vector<1x64xf32>
    tpu.vector_store %arg16[%149, %c0_78], %148 {strides = array<i32>} : memref<8x64xf32, #tpu.memory_space<vmem>>, vector<1x64xf32>,
    %c5_i32_79 = arith.constant 5 : i32
    %151 = arith.index_cast %c5_i32_79 : i32 to index
    %c0_80 = arith.constant 0 : index
    %152 = vector.load %arg15[%151, %c0_80] : memref<8x64xf32, #tpu.memory_space<vmem>>, vector<1x64xf32>
    %cst_81 = arith.constant dense<0.000000e+00> : vector<1x64xf32>
    %153 = tpu.matmul %148, %99, %cst_81 {dimension_numbers = #tpu.dot_dimension_numbers<[1], [0], [0], [1], [0, 0, 1, 1], [], []>} : vector<1x64xf32>, vector<64x64xf32>, vector<1x64xf32> -> vector<1x64xf32>
    %154 = arith.addf %152, %153 : vector<1x64xf32>
    %cst_82 = arith.constant 0.000000e+00 : f32
    %155 = vector.broadcast %cst_82 : f32 to vector<1x64xf32>
    %156 = arith.maximumf %154, %155 : vector<1x64xf32>
    %157 = math.tanh %154 : vector<1x64xf32>
    %158 = arith.select %2, %156, %157 : vector<1x64xi1>, vector<1x64xf32>
    %159 = arith.index_cast %c5_i32_79 : i32 to index
    %c0_83 = arith.constant 0 : index
    %160 = vector.load %arg16[%159, %c0_83] : memref<8x64xf32, #tpu.memory_space<vmem>>, vector<1x64xf32>
    tpu.vector_store %arg16[%159, %c0_83], %158 {strides = array<i32>} : memref<8x64xf32, #tpu.memory_space<vmem>>, vector<1x64xf32>,
    %c6_i32_84 = arith.constant 6 : i32
    %161 = arith.index_cast %c6_i32_84 : i32 to index
    %c0_85 = arith.constant 0 : index
    %162 = vector.load %arg15[%161, %c0_85] : memref<8x64xf32, #tpu.memory_space<vmem>>, vector<1x64xf32>
    %cst_86 = arith.constant dense<0.000000e+00> : vector<1x64xf32>
    %163 = tpu.matmul %158, %99, %cst_86 {dimension_numbers = #tpu.dot_dimension_numbers<[1], [0], [0], [1], [0, 0, 1, 1], [], []>} : vector<1x64xf32>, vector<64x64xf32>, vector<1x64xf32> -> vector<1x64xf32>
    %164 = arith.addf %162, %163 : vector<1x64xf32>
    %cst_87 = arith.constant 0.000000e+00 : f32
    %165 = vector.broadcast %cst_87 : f32 to vector<1x64xf32>
    %166 = arith.maximumf %164, %165 : vector<1x64xf32>
    %167 = math.tanh %164 : vector<1x64xf32>
    %168 = arith.select %2, %166, %167 : vector<1x64xi1>, vector<1x64xf32>
    %169 = arith.index_cast %c6_i32_84 : i32 to index
    %c0_88 = arith.constant 0 : index
    %170 = vector.load %arg16[%169, %c0_88] : memref<8x64xf32, #tpu.memory_space<vmem>>, vector<1x64xf32>
    tpu.vector_store %arg16[%169, %c0_88], %168 {strides = array<i32>} : memref<8x64xf32, #tpu.memory_space<vmem>>, vector<1x64xf32>,
    %c7_i32_89 = arith.constant 7 : i32
    %171 = arith.index_cast %c7_i32_89 : i32 to index
    %c0_90 = arith.constant 0 : index
    %172 = vector.load %arg15[%171, %c0_90] : memref<8x64xf32, #tpu.memory_space<vmem>>, vector<1x64xf32>
    %cst_91 = arith.constant dense<0.000000e+00> : vector<1x64xf32>
    %173 = tpu.matmul %168, %99, %cst_91 {dimension_numbers = #tpu.dot_dimension_numbers<[1], [0], [0], [1], [0, 0, 1, 1], [], []>} : vector<1x64xf32>, vector<64x64xf32>, vector<1x64xf32> -> vector<1x64xf32>
    %174 = arith.addf %172, %173 : vector<1x64xf32>
    %cst_92 = arith.constant 0.000000e+00 : f32
    %175 = vector.broadcast %cst_92 : f32 to vector<1x64xf32>
    %176 = arith.maximumf %174, %175 : vector<1x64xf32>
    %177 = math.tanh %174 : vector<1x64xf32>
    %178 = arith.select %2, %176, %177 : vector<1x64xi1>, vector<1x64xf32>
    %179 = arith.index_cast %c7_i32_89 : i32 to index
    %c0_93 = arith.constant 0 : index
    %180 = vector.load %arg16[%179, %c0_93] : memref<8x64xf32, #tpu.memory_space<vmem>>, vector<1x64xf32>
    tpu.vector_store %arg16[%179, %c0_93], %178 {strides = array<i32>} : memref<8x64xf32, #tpu.memory_space<vmem>>, vector<1x64xf32>,
    %c8_i32_94 = arith.constant 8 : i32
    %c0_95 = arith.constant 0 : index
    %c0_96 = arith.constant 0 : index
    %181 = vector.load %arg16[%c0_95, %c0_96] : memref<8x64xf32, #tpu.memory_space<vmem>>, vector<8x64xf32>
    %c0_97 = arith.constant 0 : index
    %c0_98 = arith.constant 0 : index
    %182 = vector.load %arg7[%c0_97, %c0_98] : memref<64x64xf32, #tpu.memory_space<vmem>>, vector<64x64xf32>
    %cst_99 = arith.constant dense<0.000000e+00> : vector<8x64xf32>
    %183 = tpu.matmul %181, %182, %cst_99 {dimension_numbers = #tpu.dot_dimension_numbers<[1], [0], [0], [1], [0, 0, 1, 1], [], []>} : vector<8x64xf32>, vector<64x64xf32>, vector<8x64xf32> -> vector<8x64xf32>
    %c0_100 = arith.constant 0 : index
    %c0_101 = arith.constant 0 : index
    %184 = vector.load %arg8[%c0_100, %c0_101] : memref<1x64xf32, #tpu.memory_space<vmem>>, vector<1x64xf32>
    %185 = vector.broadcast %184 : vector<1x64xf32> to vector<8x64xf32>
    %186 = arith.addf %183, %185 : vector<8x64xf32>
    %cst_102 = arith.constant 0.000000e+00 : f32
    %187 = vector.broadcast %cst_102 : f32 to vector<8x64xf32>
    %188 = arith.cmpf oge, %186, %187 : vector<8x64xf32>
    %cst_103 = arith.constant 0.229166672 : f32
    %189 = vector.broadcast %cst_103 : f32 to vector<8x64xf32>
    %190 = arith.mulf %189, %186 : vector<8x64xf32>
    %191 = arith.select %188, %186, %190 : vector<8x64xi1>, vector<8x64xf32>
    %c0_104 = arith.constant 0 : index
    %c0_105 = arith.constant 0 : index
    %192 = vector.load %arg9[%c0_104, %c0_105] : memref<64x16xf32, #tpu.memory_space<vmem>>, vector<64x16xf32>
    %cst_106 = arith.constant dense<0.000000e+00> : vector<8x16xf32>
    %193 = tpu.matmul %191, %192, %cst_106 {dimension_numbers = #tpu.dot_dimension_numbers<[1], [0], [0], [1], [0, 0, 1, 1], [], []>} : vector<8x64xf32>, vector<64x16xf32>, vector<8x16xf32> -> vector<8x16xf32>
    %c0_107 = arith.constant 0 : index
    %c0_108 = arith.constant 0 : index
    %194 = vector.load %arg10[%c0_107, %c0_108] : memref<1x16xf32, #tpu.memory_space<vmem>>, vector<1x16xf32>
    %195 = vector.broadcast %194 : vector<1x16xf32> to vector<8x16xf32>
    %196 = arith.addf %193, %195 : vector<8x16xf32>
    %197 = math.tanh %196 : vector<8x16xf32>
    %c0_109 = arith.constant 0 : index
    %c0_110 = arith.constant 0 : index
    %198 = vector.load %arg11[%c0_109, %c0_110] : memref<64x4xf32, #tpu.memory_space<vmem>>, vector<64x4xf32>
    %cst_111 = arith.constant dense<0.000000e+00> : vector<8x4xf32>
    %199 = tpu.matmul %191, %198, %cst_111 {dimension_numbers = #tpu.dot_dimension_numbers<[1], [0], [0], [1], [0, 0, 1, 1], [], []>} : vector<8x64xf32>, vector<64x4xf32>, vector<8x4xf32> -> vector<8x4xf32>
    %c0_112 = arith.constant 0 : index
    %c0_113 = arith.constant 0 : index
    %200 = vector.load %arg12[%c0_112, %c0_113] : memref<16x4xf32, #tpu.memory_space<vmem>>, vector<16x4xf32>
    %cst_114 = arith.constant dense<0.000000e+00> : vector<8x4xf32>
    %201 = tpu.matmul %197, %200, %cst_114 {dimension_numbers = #tpu.dot_dimension_numbers<[1], [0], [0], [1], [0, 0, 1, 1], [], []>} : vector<8x16xf32>, vector<16x4xf32>, vector<8x4xf32> -> vector<8x4xf32>
    %202 = arith.addf %199, %201 : vector<8x4xf32>
    %c0_115 = arith.constant 0 : index
    %c0_116 = arith.constant 0 : index
    %203 = vector.load %arg13[%c0_115, %c0_116] : memref<1x4xf32, #tpu.memory_space<vmem>>, vector<1x4xf32>
    %204 = vector.broadcast %203 : vector<1x4xf32> to vector<8x4xf32>
    %205 = arith.addf %202, %204 : vector<8x4xf32>
    %c0_117 = arith.constant 0 : index
    %c0_118 = arith.constant 0 : index
    %206 = vector.load %arg14[%c0_117, %c0_118] : memref<8x4xf32, #tpu.memory_space<vmem>>, vector<8x4xf32>
    tpu.vector_store %arg14[%c0_117, %c0_118], %205 {strides = array<i32>} : memref<8x4xf32, #tpu.memory_space<vmem>>, vector<8x4xf32>,
    return
  }
}

</mosaic_0001>

<llo_original>
// kernel: _lambda_.2
$region0: #{_lambda_.2}
  #allocation0 [shape = 'u32[]', space=smem, size = 0x4, offset = 0x4, fixed_abs, tag = 'smem constant byte address 0x4 - core index']
  #allocation1 [shape = 'u32[144,128]{1,0:T(1,128)}', space=vmem, size = 0x12000, scoped, tag = 'internal scratch']
  #allocation2 [shape = 'f32[8,128]{1,0:T(8,128)}', space=vmem, size = 0x1000, scoped, tag = 'scratch operand']
  #allocation3 [shape = 'f32[8,128]{1,0:T(8,128)}', space=vmem, size = 0x1000, scoped, tag = 'scratch operand']
  %s0 = inlined_call_operand.vmem [shape: f32[8,32], index: 0, kind: input, shape index: {}]
  %s1 = inlined_call_operand.vmem [shape: f32[32,128], index: 1, kind: input, shape index: {}]
  %s2 = inlined_call_operand.vmem [shape: f32[128,128], index: 2, kind: input, shape index: {}]
  %s3 = inlined_call_operand.vmem [shape: f32[1,128], index: 3, kind: input, shape index: {}]
  %s4 = inlined_call_operand.vmem [shape: f32[128,128], index: 4, kind: input, shape index: {}]
  %s5 = inlined_call_operand.vmem [shape: f32[1,128], index: 5, kind: input, shape index: {}]
  %s6 = inlined_call_operand.hbm [shape: f32[128,32], index: 6, kind: input, shape index: {}]
  %s7 = inlined_call_operand.vmem [shape: f32[1,32], index: 7, kind: input, shape index: {}]
  %s8 = inlined_call_operand.hbm [shape: f32[128,4], index: 8, kind: input, shape index: {}]
  %s9 = inlined_call_operand.hbm [shape: f32[32,4], index: 9, kind: input, shape index: {}]
  %s10 = inlined_call_operand.vmem [shape: f32[1,4], index: 10, kind: input, shape index: {}]
  %s11 = inlined_call_operand.vmem [shape: f32[8,4], index: 11, kind: output, shape index: {}]
  %s12 = sld [smem:[#allocation0]]
  $region66: #{_lambda_.2} parent=0
    _
  %s14 = ssub.s32 1, %s12
  %s15 = scalar_select 0, %s14, %s12
  $region1: #{_lambda_.2} parent=0
    #allocation4 [shape = 'u8[65536]{0}', space=vmem, size = 0x10000, scoped, tag = 'input window, operand 6, single buffered']
    #allocation5 [shape = 's32[1]{0}', space=sflag, size = 0x4, scoped, tag = 'scoped memory for _lambda_.2']
    #allocation6 [shape = 'u8[65536]{0}', space=vmem, size = 0x10000, scoped, tag = 'input window, operand 8, single buffered']
    #allocation7 [shape = 's32[1]{0}', space=sflag, size = 0x4, scoped, tag = 'scoped memory for _lambda_.2']
    #allocation8 [shape = 'u8[16384]{0}', space=vmem, size = 0x4000, scoped, tag = 'input window, operand 9, single buffered']
    %16 = vsyncpa [#allocation5], 0
    %17 = vsyncpa [#allocation7], 0
    // Predicated region
    $region2: #{_lambda_.2} parent=1 // pred_check
      _
    $region3: #{_lambda_.2} parent=1 // pred_check_branch
      %19 = sbr.rel (0) target = $region5
    $region4: #{_lambda_.2} parent=1 // pred_region
      _
    $region5: #{_lambda_.2} parent=1 // pred_fallthru
      _
    // Predicated region
    $region6: #{_lambda_.2} parent=1 // pred_check
      _
    $region7: #{_lambda_.2} parent=1 // pred_check_branch
      %21 = sbr.rel (0) target = $region9
    $region8: #{_lambda_.2} parent=1 // pred_region
      _
    $region9: #{_lambda_.2} parent=1 // pred_fallthru
      _
    // Predicated region
    $region10: #{_lambda_.2} parent=1 // pred_check
      _
    $region11: #{_lambda_.2} parent=1 // pred_check_branch
      %23 = sbr.rel (0) target = $region13
    $region12: #{_lambda_.2} parent=1 // pred_region
      _
    $region13: #{_lambda_.2} parent=1 // pred_fallthru
      _
    // Predicated region
    $region14: #{_lambda_.2} parent=1 // pred_check
      _
    $region15: #{_lambda_.2} parent=1 // pred_check_branch
      %25 = sbr.rel (0) target = $region17
    $region16: #{_lambda_.2} parent=1 // pred_region
      _
    $region17: #{_lambda_.2} parent=1 // pred_fallthru
      _
    // Predicated region
    $region18: #{_lambda_.2} parent=1 // pred_check
      _
    $region19: #{_lambda_.2} parent=1 // pred_check_branch
      %27 = sbr.rel (0) target = $region21
    $region20: #{_lambda_.2} parent=1 // pred_region
      _
    $region21: #{_lambda_.2} parent=1 // pred_fallthru
      _
    // Predicated region
    $region22: #{_lambda_.2} parent=1 // pred_check
      _
    $region23: #{_lambda_.2} parent=1 // pred_check_branch
      %29 = sbr.rel (0) target = $region25
    $region24: #{_lambda_.2} parent=1 // pred_region
      _
    $region25: #{_lambda_.2} parent=1 // pred_fallthru
      _
    // Predicated region
    $region26: #{_lambda_.2} parent=1 // pred_check
      _
    $region27: #{_lambda_.2} parent=1 // pred_check_branch
      %31 = sbr.rel (0) target = $region29
    $region28: #{_lambda_.2} parent=1 // pred_region
      %s33 = ssub.s32 2048, 2048
      %34 = vsyncadd [#allocation5], %s33
      %s35 = sshll.u32 [#allocation4], 4
      %s36 = int_to_ptr.vmem [resolvable:$true] %s35
      %41 = dma.hbm_to_vmem [thread:$0]  %s6, 2048, %s36, [#allocation5], 128, 128, 8
    $region29: #{_lambda_.2} parent=1 // pred_fallthru
      _
    // Predicated region
    $region30: #{_lambda_.2} parent=1 // pred_check
      _
    $region31: #{_lambda_.2} parent=1 // pred_check_branch
      %43 = sbr.rel (0) target = $region33
    $region32: #{_lambda_.2} parent=1 // pred_region
      _
    $region33: #{_lambda_.2} parent=1 // pred_fallthru
      _
    // Predicated region
    $region34: #{_lambda_.2} parent=1 // pred_check
      _
    $region35: #{_lambda_.2} parent=1 // pred_check_branch
      %45 = sbr.rel (0) target = $region37
    $region36: #{_lambda_.2} parent=1 // pred_region
      %s47 = ssub.s32 2048, 2048
      %48 = vsyncadd [#allocation7], %s47
      %s49 = sshll.u32 [#allocation6], 4
      %s50 = int_to_ptr.vmem [resolvable:$true] %s49
      %55 = dma.hbm_to_vmem [thread:$0]  %s8, 2048, %s50, [#allocation7], 128, 128, 8
    $region37: #{_lambda_.2} parent=1 // pred_fallthru
      _
    // Predicated region
    $region38: #{_lambda_.2} parent=1 // pred_check
      _
    $region39: #{_lambda_.2} parent=1 // pred_check_branch
      %57 = sbr.rel (0) target = $region41
    $region40: #{_lambda_.2} parent=1 // pred_region
      %s59 = ssub.s32 512, 512
      %60 = vsyncadd [#allocation7], %s59
      %s61 = sshll.u32 [#allocation8], 4
      %s62 = int_to_ptr.vmem [resolvable:$true] %s61
      %67 = dma.hbm_to_vmem [thread:$0]  %s9, 512, %s62, [#allocation7], 128, 128, 8
    $region41: #{_lambda_.2} parent=1 // pred_fallthru
      _
    // Predicated region
    $region42: #{_lambda_.2} parent=1 // pred_check
      _
    $region43: #{_lambda_.2} parent=1 // pred_check_branch
      %69 = sbr.rel (0) target = $region45
    $region44: #{_lambda_.2} parent=1 // pred_region
      _
    $region45: #{_lambda_.2} parent=1 // pred_fallthru
      _
    // Predicated region
    $region46: #{_lambda_.2} parent=1 // pred_check
      _
    $region47: #{_lambda_.2} parent=1 // pred_check_branch
      %71 = sbr.rel (0) target = $region49
    $region48: #{_lambda_.2} parent=1 // pred_region
      %72 = dma.done [#allocation5], 2048
    $region49: #{_lambda_.2} parent=1 // pred_fallthru
      _
    // Predicated region
    $region50: #{_lambda_.2} parent=1 // pred_check
      _
    $region51: #{_lambda_.2} parent=1 // pred_check_branch
      %74 = sbr.rel (0) target = $region53
    $region52: #{_lambda_.2} parent=1 // pred_region
      %75 = dma.done [#allocation7], 2048
    $region53: #{_lambda_.2} parent=1 // pred_fallthru
      _
    // Predicated region
    $region54: #{_lambda_.2} parent=1 // pred_check
      _
    $region55: #{_lambda_.2} parent=1 // pred_check_branch
      %77 = sbr.rel (0) target = $region57
    $region56: #{_lambda_.2} parent=1 // pred_region
      %78 = dma.done [#allocation7], 512
    $region57: #{_lambda_.2} parent=1 // pred_fallthru
      _
    %v79 = vlaneseq
    %v80 = vand.u32 %v79, 127
    %vm81 = vcmp.lt.s32.totalorder %v80, 96
    %v82 = vld [vmem:[%s0] sm:$0xff]
    %v83 = vld [vmem:[%s1] sm:$0xff]
    %v84 = vld [vmem:[%s1 + $0x8] sm:$0xff]
    %v85 = vld [vmem:[%s1 + $0x10] sm:$0xff]
    %v86 = vld [vmem:[%s1 + $0x18] sm:$0xff]
    %v87 = vld [vmem:[%s3] sm:$0x1]
    %v89 = vlaneseq
    %v90 = vshrl.u32 %v89, 7
    %v91 = vsub.s32 0, %v90
    %v92 = vrot.slane %v87, %v91
    %vm94 = vcmask 261120
    %v96 = vsel %vm94, %v82, 0
    %98 = vmatprep.subr.mxu0 0.0
    %99 = vmatpush1.msra.mxu0 %v83
    %100 = vmatprep.subr.mxu0 0.0
    %101 = vmatpush1.msra.mxu0 %v84
    %102 = vmatprep.subr.mxu0 0.0
    %103 = vmatpush1.msra.mxu0 %v85
    %104 = vmatprep.subr.mxu0 0.0
    %105 = vmatpush1.msra.mxu0 %v86
    %106 = vmatprep.subr.mxu0 0.0
    %107 = vmatpush1.msra.mxu0 0.0
    %108 = vmatprep.subr.mxu0 0.0
    %109 = vmatpush1.msra.mxu0 0.0
    %110 = vmatprep.subr.mxu0 0.0
    %111 = vmatpush1.msra.mxu0 0.0
    %112 = vmatprep.subr.mxu0 0.0
    %113 = vmatpush1.msra.mxu0 0.0
    %114 = vmatprep.subr.mxu0 0.0
    %115 = vmatpush1.msra.mxu0 0.0
    %116 = vmatprep.subr.mxu0 0.0
    %117 = vmatpush1.msra.mxu0 0.0
    %118 = vmatprep.subr.mxu0 0.0
    %119 = vmatpush1.msra.mxu0 0.0
    %120 = vmatprep.subr.mxu0 0.0
    %121 = vmatpush1.msra.mxu0 0.0
    %122 = vmatprep.subr.mxu0 0.0
    %123 = vmatpush1.msra.mxu0 0.0
    %124 = vmatprep.subr.mxu0 0.0
    %125 = vmatpush1.msra.mxu0 0.0
    %126 = vmatprep.subr.mxu0 0.0
    %127 = vmatpush1.msra.mxu0 0.0
    %128 = vmatprep.subr.mxu0 0.0
    %129 = vmatpush1.msra.mxu0 0.0
    %130 = vmatprep.subr.mxu0 0.0
    %131 = vmatpush1.msra.mxu0 0.0
    %132 = vmatprep.subr.mxu0 0.0
    %133 = vmatpush1.msra.mxu0 0.0
    %134 = vmatprep.subr.mxu0 0.0
    %135 = vmatpush1.msra.mxu0 0.0
    %136 = vmatprep.subr.mxu0 0.0
    %137 = vmatpush1.msra.mxu0 0.0
    %138 = vmatprep.subr.mxu0 0.0
    %139 = vmatpush1.msra.mxu0 0.0
    %140 = vmatprep.subr.mxu0 0.0
    %141 = vmatpush1.msra.mxu0 0.0
    %142 = vmatprep.subr.mxu0 0.0
    %143 = vmatpush1.msra.mxu0 0.0
    %144 = vmatprep.subr.mxu0 0.0
    %145 = vmatpush1.msra.mxu0 0.0
    %146 = vmatprep.subr.mxu0 0.0
    %147 = vmatpush1.msra.mxu0 0.0
    %148 = vmatprep.subr.mxu0 0.0
    %149 = vmatpush1.msra.mxu0 0.0
    %150 = vmatprep.subr.mxu0 0.0
    %151 = vmatpush1.msra.mxu0 0.0
    %152 = vmatprep.subr.mxu0 0.0
    %153 = vmatpush1.msra.mxu0 0.0
    %154 = vmatprep.subr.mxu0 0.0
    %155 = vmatpush1.msra.mxu0 0.0
    %156 = vmatprep.subr.mxu0 0.0
    %157 = vmatpush1.msra.mxu0 0.0
    %158 = vmatprep.subr.mxu0 0.0
    %159 = vmatpush1.msra.mxu0 0.0
    %160 = vmatprep.subr.mxu0 0.0
    %161 = vmatpush1.msra.mxu0 0.0
    %162 = vmatprep.mubr.f32.mxu0 0.0
    %163 = vmatmul.mubr.f32.gmra.mrb[0].mxu0 %v96
    %v164 = vpop.f32.mrb[0].mxu0
    %v165 = vadd.f32 %v92, %v164
    %v166 = vpop.f32.mrb[0].mxu0
    %167 = vdwg.mxu0
    %168 = vst [vmem:[#allocation2] sm:$0xff] %v165
    %v169 = vld [vmem:[%s2] sm:$0xff]
    %v170 = vld [vmem:[%s2 + $0x8] sm:$0xff]
    %v171 = vld [vmem:[%s2 + $0x10] sm:$0xff]
    %v172 = vld [vmem:[%s2 + $0x18] sm:$0xff]
    %v173 = vld [vmem:[%s2 + $0x20] sm:$0xff]
    %v174 = vld [vmem:[%s2 + $0x28] sm:$0xff]
    %v175 = vld [vmem:[%s2 + $0x30] sm:$0xff]
    %v176 = vld [vmem:[%s2 + $0x38] sm:$0xff]
    %v177 = vld [vmem:[%s2 + $0x40] sm:$0xff]
    %v178 = vld [vmem:[%s2 + $0x48] sm:$0xff]
    %v179 = vld [vmem:[%s2 + $0x50] sm:$0xff]
    %v180 = vld [vmem:[%s2 + $0x58] sm:$0xff]
    %v181 = vld [vmem:[%s2 + $0x60] sm:$0xff]
    %v182 = vld [vmem:[%s2 + $0x68] sm:$0xff]
    %v183 = vld [vmem:[%s2 + $0x70] sm:$0xff]
    %v184 = vld [vmem:[%s2 + $0x78] sm:$0xff]
    %v185 = vld [vmem:[#allocation2] sm:$0x1]
    %186 = vmatprep.subr.mxu0 0.0
    %187 = vmatpush1.msra.mxu0 %v169
    %188 = vmatprep.subr.mxu0 0.0
    %189 = vmatpush1.msra.mxu0 %v170
    %190 = vmatprep.subr.mxu0 0.0
    %191 = vmatpush1.msra.mxu0 %v171
    %192 = vmatprep.subr.mxu0 0.0
    %193 = vmatpush1.msra.mxu0 %v172
    %194 = vmatprep.subr.mxu0 0.0
    %195 = vmatpush1.msra.mxu0 %v173
    %196 = vmatprep.subr.mxu0 0.0
    %197 = vmatpush1.msra.mxu0 %v174
    %198 = vmatprep.subr.mxu0 0.0
    %199 = vmatpush1.msra.mxu0 %v175
    %200 = vmatprep.subr.mxu0 0.0
    %201 = vmatpush1.msra.mxu0 %v176
    %202 = vmatprep.subr.mxu0 0.0
    %203 = vmatpush1.msra.mxu0 %v177
    %204 = vmatprep.subr.mxu0 0.0
    %205 = vmatpush1.msra.mxu0 %v178
    %206 = vmatprep.subr.mxu0 0.0
    %207 = vmatpush1.msra.mxu0 %v179
    %208 = vmatprep.subr.mxu0 0.0
    %209 = vmatpush1.msra.mxu0 %v180
    %210 = vmatprep.subr.mxu0 0.0
    %211 = vmatpush1.msra.mxu0 %v181
    %212 = vmatprep.subr.mxu0 0.0
    %213 = vmatpush1.msra.mxu0 %v182
    %214 = vmatprep.subr.mxu0 0.0
    %215 = vmatpush1.msra.mxu0 %v183
    %216 = vmatprep.subr.mxu0 0.0
    %217 = vmatpush1.msra.mxu0 %v184
    %218 = vmatprep.subr.mxu0 0.0
    %219 = vmatpush1.msra.mxu0 0.0
    %220 = vmatprep.subr.mxu0 0.0
    %221 = vmatpush1.msra.mxu0 0.0
    %222 = vmatprep.subr.mxu0 0.0
    %223 = vmatpush1.msra.mxu0 0.0
    %224 = vmatprep.subr.mxu0 0.0
    %225 = vmatpush1.msra.mxu0 0.0
    %226 = vmatprep.subr.mxu0 0.0
    %227 = vmatpush1.msra.mxu0 0.0
    %228 = vmatprep.subr.mxu0 0.0
    %229 = vmatpush1.msra.mxu0 0.0
    %230 = vmatprep.subr.mxu0 0.0
    %231 = vmatpush1.msra.mxu0 0.0
    %232 = vmatprep.subr.mxu0 0.0
    %233 = vmatpush1.msra.mxu0 0.0
    %234 = vmatprep.subr.mxu0 0.0
    %235 = vmatpush1.msra.mxu0 0.0
    %236 = vmatprep.subr.mxu0 0.0
    %237 = vmatpush1.msra.mxu0 0.0
    %238 = vmatprep.subr.mxu0 0.0
    %239 = vmatpush1.msra.mxu0 0.0
    %240 = vmatprep.subr.mxu0 0.0
    %241 = vmatpush1.msra.mxu0 0.0
    %242 = vmatprep.subr.mxu0 0.0
    %243 = vmatpush1.msra.mxu0 0.0
    %244 = vmatprep.subr.mxu0 0.0
    %245 = vmatpush1.msra.mxu0 0.0
    %246 = vmatprep.subr.mxu0 0.0
    %247 = vmatpush1.msra.mxu0 0.0
    %248 = vmatprep.subr.mxu0 0.0
    %249 = vmatpush1.msra.mxu0 0.0
    %250 = vmatprep.mubr.f32.mxu0 0.0
    %251 = vmatmul.mubr.f32.gmra.mrb[0].mxu0 0.0
    %v252 = vpop.f32.mrb[0].mxu0
    %v253 = vadd.f32 0.0, %v252
    %v254 = vpop.f32.mrb[0].mxu0
    %255 = vdwg.mxu0
    %v256 = vadd.f32 %v185, %v253
    %v257 = vmax.f32 %v256, 0.0
    %v258 = vtanh.pop %v256
    %v259 = vsel %vm81, %v257, %v258
    %260 = vst [vmem:[#allocation3] sm:$0x1] %v259
    %v261 = vld [vmem:[#allocation2 + $0x1] sm:$0x1]
    %262 = vmatprep.subr.mxu0 0.0
    %263 = vmatpush1.msra.mxu0 %v169
    %264 = vmatprep.subr.mxu0 0.0
    %265 = vmatpush1.msra.mxu0 %v170
    %266 = vmatprep.subr.mxu0 0.0
    %267 = vmatpush1.msra.mxu0 %v171
    %268 = vmatprep.subr.mxu0 0.0
    %269 = vmatpush1.msra.mxu0 %v172
    %270 = vmatprep.subr.mxu0 0.0
    %271 = vmatpush1.msra.mxu0 %v173
    %272 = vmatprep.subr.mxu0 0.0
    %273 = vmatpush1.msra.mxu0 %v174
    %274 = vmatprep.subr.mxu0 0.0
    %275 = vmatpush1.msra.mxu0 %v175
    %276 = vmatprep.subr.mxu0 0.0
    %277 = vmatpush1.msra.mxu0 %v176
    %278 = vmatprep.subr.mxu0 0.0
    %279 = vmatpush1.msra.mxu0 %v177
    %280 = vmatprep.subr.mxu0 0.0
    %281 = vmatpush1.msra.mxu0 %v178
    %282 = vmatprep.subr.mxu0 0.0
    %283 = vmatpush1.msra.mxu0 %v179
    %284 = vmatprep.subr.mxu0 0.0
    %285 = vmatpush1.msra.mxu0 %v180
    %286 = vmatprep.subr.mxu0 0.0
    %287 = vmatpush1.msra.mxu0 %v181
    %288 = vmatprep.subr.mxu0 0.0
    %289 = vmatpush1.msra.mxu0 %v182
    %290 = vmatprep.subr.mxu0 0.0
    %291 = vmatpush1.msra.mxu0 %v183
    %292 = vmatprep.subr.mxu0 0.0
    %293 = vmatpush1.msra.mxu0 %v184
    %294 = vmatprep.subr.mxu0 0.0
    %295 = vmatpush1.msra.mxu0 0.0
    %296 = vmatprep.subr.mxu0 0.0
    %297 = vmatpush1.msra.mxu0 0.0
    %298 = vmatprep.subr.mxu0 0.0
    %299 = vmatpush1.msra.mxu0 0.0
    %300 = vmatprep.subr.mxu0 0.0
    %301 = vmatpush1.msra.mxu0 0.0
    %302 = vmatprep.subr.mxu0 0.0
    %303 = vmatpush1.msra.mxu0 0.0
    %304 = vmatprep.subr.mxu0 0.0
    %305 = vmatpush1.msra.mxu0 0.0
    %306 = vmatprep.subr.mxu0 0.0
    %307 = vmatpush1.msra.mxu0 0.0
    %308 = vmatprep.subr.mxu0 0.0
    %309 = vmatpush1.msra.mxu0 0.0
    %310 = vmatprep.subr.mxu0 0.0
    %311 = vmatpush1.msra.mxu0 0.0
    %312 = vmatprep.subr.mxu0 0.0
    %313 = vmatpush1.msra.mxu0 0.0
    %314 = vmatprep.subr.mxu0 0.0
    %315 = vmatpush1.msra.mxu0 0.0
    %316 = vmatprep.subr.mxu0 0.0
    %317 = vmatpush1.msra.mxu0 0.0
    %318 = vmatprep.subr.mxu0 0.0
    %319 = vmatpush1.msra.mxu0 0.0
    %320 = vmatprep.subr.mxu0 0.0
    %321 = vmatpush1.msra.mxu0 0.0
    %322 = vmatprep.subr.mxu0 0.0
    %323 = vmatpush1.msra.mxu0 0.0
    %324 = vmatprep.subr.mxu0 0.0
    %325 = vmatpush1.msra.mxu0 0.0
    %326 = vmatprep.mubr.f32.mxu0 0.0
    %327 = vmatmul.mubr.f32.gmra.mrb[0].mxu0 %v259
    %v328 = vpop.f32.mrb[0].mxu0
    %v329 = vadd.f32 0.0, %v328
    %v330 = vpop.f32.mrb[0].mxu0
    %331 = vdwg.mxu0
    %v332 = vadd.f32 %v261, %v329
    %v333 = vmax.f32 %v332, 0.0
    %v334 = vtanh.pop %v332
    %v335 = vsel %vm81, %v333, %v334
    %336 = vst [vmem:[#allocation3 + $0x1] sm:$0x1] %v335
    %v337 = vld [vmem:[#allocation2 + $0x2] sm:$0x1]
    %338 = vmatprep.subr.mxu0 0.0
    %339 = vmatpush1.msra.mxu0 %v169
    %340 = vmatprep.subr.mxu0 0.0
    %341 = vmatpush1.msra.mxu0 %v170
    %342 = vmatprep.subr.mxu0 0.0
    %343 = vmatpush1.msra.mxu0 %v171
    %344 = vmatprep.subr.mxu0 0.0
    %345 = vmatpush1.msra.mxu0 %v172
    %346 = vmatprep.subr.mxu0 0.0
    %347 = vmatpush1.msra.mxu0 %v173
    %348 = vmatprep.subr.mxu0 0.0
    %349 = vmatpush1.msra.mxu0 %v174
    %350 = vmatprep.subr.mxu0 0.0
    %351 = vmatpush1.msra.mxu0 %v175
    %352 = vmatprep.subr.mxu0 0.0
    %353 = vmatpush1.msra.mxu0 %v176
    %354 = vmatprep.subr.mxu0 0.0
    %355 = vmatpush1.msra.mxu0 %v177
    %356 = vmatprep.subr.mxu0 0.0
    %357 = vmatpush1.msra.mxu0 %v178
    %358 = vmatprep.subr.mxu0 0.0
    %359 = vmatpush1.msra.mxu0 %v179
    %360 = vmatprep.subr.mxu0 0.0
    %361 = vmatpush1.msra.mxu0 %v180
    %362 = vmatprep.subr.mxu0 0.0
    %363 = vmatpush1.msra.mxu0 %v181
    %364 = vmatprep.subr.mxu0 0.0
    %365 = vmatpush1.msra.mxu0 %v182
    %366 = vmatprep.subr.mxu0 0.0
    %367 = vmatpush1.msra.mxu0 %v183
    %368 = vmatprep.subr.mxu0 0.0
    %369 = vmatpush1.msra.mxu0 %v184
    %370 = vmatprep.subr.mxu0 0.0
    %371 = vmatpush1.msra.mxu0 0.0
    %372 = vmatprep.subr.mxu0 0.0
    %373 = vmatpush1.msra.mxu0 0.0
    %374 = vmatprep.subr.mxu0 0.0
    %375 = vmatpush1.msra.mxu0 0.0
    %376 = vmatprep.subr.mxu0 0.0
    %377 = vmatpush1.msra.mxu0 0.0
    %378 = vmatprep.subr.mxu0 0.0
    %379 = vmatpush1.msra.mxu0 0.0
    %380 = vmatprep.subr.mxu0 0.0
    %381 = vmatpush1.msra.mxu0 0.0
    %382 = vmatprep.subr.mxu0 0.0
    %383 = vmatpush1.msra.mxu0 0.0
    %384 = vmatprep.subr.mxu0 0.0
    %385 = vmatpush1.msra.mxu0 0.0
    %386 = vmatprep.subr.mxu0 0.0
    %387 = vmatpush1.msra.mxu0 0.0
    %388 = vmatprep.subr.mxu0 0.0
    %389 = vmatpush1.msra.mxu0 0.0
    %390 = vmatprep.subr.mxu0 0.0
    %391 = vmatpush1.msra.mxu0 0.0
    %392 = vmatprep.subr.mxu0 0.0
    %393 = vmatpush1.msra.mxu0 0.0
    %394 = vmatprep.subr.mxu0 0.0
    %395 = vmatpush1.msra.mxu0 0.0
    %396 = vmatprep.subr.mxu0 0.0
    %397 = vmatpush1.msra.mxu0 0.0
    %398 = vmatprep.subr.mxu0 0.0
    %399 = vmatpush1.msra.mxu0 0.0
    %400 = vmatprep.subr.mxu0 0.0
    %401 = vmatpush1.msra.mxu0 0.0
    %402 = vmatprep.mubr.f32.mxu0 0.0
    %403 = vmatmul.mubr.f32.gmra.mrb[0].mxu0 %v335
    %v404 = vpop.f32.mrb[0].mxu0
    %v405 = vadd.f32 0.0, %v404
    %v406 = vpop.f32.mrb[0].mxu0
    %407 = vdwg.mxu0
    %v408 = vadd.f32 %v337, %v405
    %v409 = vmax.f32 %v408, 0.0
    %v410 = vtanh.pop %v408
    %v411 = vsel %vm81, %v409, %v410
    %412 = vst [vmem:[#allocation3 + $0x2] sm:$0x1] %v411
    %v413 = vld [vmem:[#allocation2 + $0x3] sm:$0x1]
    %414 = vmatprep.subr.mxu0 0.0
    %415 = vmatpush1.msra.mxu0 %v169
    %416 = vmatprep.subr.mxu0 0.0
    %417 = vmatpush1.msra.mxu0 %v170
    %418 = vmatprep.subr.mxu0 0.0
    %419 = vmatpush1.msra.mxu0 %v171
    %420 = vmatprep.subr.mxu0 0.0
    %421 = vmatpush1.msra.mxu0 %v172
    %422 = vmatprep.subr.mxu0 0.0
    %423 = vmatpush1.msra.mxu0 %v173
    %424 = vmatprep.subr.mxu0 0.0
    %425 = vmatpush1.msra.mxu0 %v174
    %426 = vmatprep.subr.mxu0 0.0
    %427 = vmatpush1.msra.mxu0 %v175
    %428 = vmatprep.subr.mxu0 0.0
    %429 = vmatpush1.msra.mxu0 %v176
    %430 = vmatprep.subr.mxu0 0.0
    %431 = vmatpush1.msra.mxu0 %v177
    %432 = vmatprep.subr.mxu0 0.0
    %433 = vmatpush1.msra.mxu0 %v178
    %434 = vmatprep.subr.mxu0 0.0
    %435 = vmatpush1.msra.mxu0 %v179
    %436 = vmatprep.subr.mxu0 0.0
    %437 = vmatpush1.msra.mxu0 %v180
    %438 = vmatprep.subr.mxu0 0.0
    %439 = vmatpush1.msra.mxu0 %v181
    %440 = vmatprep.subr.mxu0 0.0
    %441 = vmatpush1.msra.mxu0 %v182
    %442 = vmatprep.subr.mxu0 0.0
    %443 = vmatpush1.msra.mxu0 %v183
    %444 = vmatprep.subr.mxu0 0.0
    %445 = vmatpush1.msra.mxu0 %v184
    %446 = vmatprep.subr.mxu0 0.0
    %447 = vmatpush1.msra.mxu0 0.0
    %448 = vmatprep.subr.mxu0 0.0
    %449 = vmatpush1.msra.mxu0 0.0
    %450 = vmatprep.subr.mxu0 0.0
    %451 = vmatpush1.msra.mxu0 0.0
    %452 = vmatprep.subr.mxu0 0.0
    %453 = vmatpush1.msra.mxu0 0.0
    %454 = vmatprep.subr.mxu0 0.0
    %455 = vmatpush1.msra.mxu0 0.0
    %456 = vmatprep.subr.mxu0 0.0
    %457 = vmatpush1.msra.mxu0 0.0
    %458 = vmatprep.subr.mxu0 0.0
    %459 = vmatpush1.msra.mxu0 0.0
    %460 = vmatprep.subr.mxu0 0.0
    %461 = vmatpush1.msra.mxu0 0.0
    %462 = vmatprep.subr.mxu0 0.0
    %463 = vmatpush1.msra.mxu0 0.0
    %464 = vmatprep.subr.mxu0 0.0
    %465 = vmatpush1.msra.mxu0 0.0
    %466 = vmatprep.subr.mxu0 0.0
    %467 = vmatpush1.msra.mxu0 0.0
    %468 = vmatprep.subr.mxu0 0.0
    %469 = vmatpush1.msra.mxu0 0.0
    %470 = vmatprep.subr.mxu0 0.0
    %471 = vmatpush1.msra.mxu0 0.0
    %472 = vmatprep.subr.mxu0 0.0
    %473 = vmatpush1.msra.mxu0 0.0
    %474 = vmatprep.subr.mxu0 0.0
    %475 = vmatpush1.msra.mxu0 0.0
    %476 = vmatprep.subr.mxu0 0.0
    %477 = vmatpush1.msra.mxu0 0.0
    %478 = vmatprep.mubr.f32.mxu0 0.0
    %479 = vmatmul.mubr.f32.gmra.mrb[0].mxu0 %v411
    %v480 = vpop.f32.mrb[0].mxu0
    %v481 = vadd.f32 0.0, %v480
    %v482 = vpop.f32.mrb[0].mxu0
    %483 = vdwg.mxu0
    %v484 = vadd.f32 %v413, %v481
    %v485 = vmax.f32 %v484, 0.0
    %v486 = vtanh.pop %v484
    %v487 = vsel %vm81, %v485, %v486
    %488 = vst [vmem:[#allocation3 + $0x3] sm:$0x1] %v487
    %v489 = vld [vmem:[#allocation2 + $0x4] sm:$0x1]
    %490 = vmatprep.subr.mxu0 0.0
    %491 = vmatpush1.msra.mxu0 %v169
    %492 = vmatprep.subr.mxu0 0.0
    %493 = vmatpush1.msra.mxu0 %v170
    %494 = vmatprep.subr.mxu0 0.0
    %495 = vmatpush1.msra.mxu0 %v171
    %496 = vmatprep.subr.mxu0 0.0
    %497 = vmatpush1.msra.mxu0 %v172
    %498 = vmatprep.subr.mxu0 0.0
    %499 = vmatpush1.msra.mxu0 %v173
    %500 = vmatprep.subr.mxu0 0.0
    %501 = vmatpush1.msra.mxu0 %v174
    %502 = vmatprep.subr.mxu0 0.0
    %503 = vmatpush1.msra.mxu0 %v175
    %504 = vmatprep.subr.mxu0 0.0
    %505 = vmatpush1.msra.mxu0 %v176
    %506 = vmatprep.subr.mxu0 0.0
    %507 = vmatpush1.msra.mxu0 %v177
    %508 = vmatprep.subr.mxu0 0.0
    %509 = vmatpush1.msra.mxu0 %v178
    %510 = vmatprep.subr.mxu0 0.0
    %511 = vmatpush1.msra.mxu0 %v179
    %512 = vmatprep.subr.mxu0 0.0
    %513 = vmatpush1.msra.mxu0 %v180
    %514 = vmatprep.subr.mxu0 0.0
    %515 = vmatpush1.msra.mxu0 %v181
    %516 = vmatprep.subr.mxu0 0.0
    %517 = vmatpush1.msra.mxu0 %v182
    %518 = vmatprep.subr.mxu0 0.0
    %519 = vmatpush1.msra.mxu0 %v183
    %520 = vmatprep.subr.mxu0 0.0
    %521 = vmatpush1.msra.mxu0 %v184
    %522 = vmatprep.subr.mxu0 0.0
    %523 = vmatpush1.msra.mxu0 0.0
    %524 = vmatprep.subr.mxu0 0.0
    %525 = vmatpush1.msra.mxu0 0.0
    %526 = vmatprep.subr.mxu0 0.0
    %527 = vmatpush1.msra.mxu0 0.0
    %528 = vmatprep.subr.mxu0 0.0
    %529 = vmatpush1.msra.mxu0 0.0
    %530 = vmatprep.subr.mxu0 0.0
    %531 = vmatpush1.msra.mxu0 0.0
    %532 = vmatprep.subr.mxu0 0.0
    %533 = vmatpush1.msra.mxu0 0.0
    %534 = vmatprep.subr.mxu0 0.0
    %535 = vmatpush1.msra.mxu0 0.0
    %536 = vmatprep.subr.mxu0 0.0
    %537 = vmatpush1.msra.mxu0 0.0
    %538 = vmatprep.subr.mxu0 0.0
    %539 = vmatpush1.msra.mxu0 0.0
    %540 = vmatprep.subr.mxu0 0.0
    %541 = vmatpush1.msra.mxu0 0.0
    %542 = vmatprep.subr.mxu0 0.0
    %543 = vmatpush1.msra.mxu0 0.0
    %544 = vmatprep.subr.mxu0 0.0
    %545 = vmatpush1.msra.mxu0 0.0
    %546 = vmatprep.subr.mxu0 0.0
    %547 = vmatpush1.msra.mxu0 0.0
    %548 = vmatprep.subr.mxu0 0.0
    %549 = vmatpush1.msra.mxu0 0.0
    %550 = vmatprep.subr.mxu0 0.0
    %551 = vmatpush1.msra.mxu0 0.0
    %552 = vmatprep.subr.mxu0 0.0
    %553 = vmatpush1.msra.mxu0 0.0
    %554 = vmatprep.mubr.f32.mxu0 0.0
    %555 = vmatmul.mubr.f32.gmra.mrb[0].mxu0 %v487
    %v556 = vpop.f32.mrb[0].mxu0
    %v557 = vadd.f32 0.0, %v556
    %v558 = vpop.f32.mrb[0].mxu0
    %559 = vdwg.mxu0
    %v560 = vadd.f32 %v489, %v557
    %v561 = vmax.f32 %v560, 0.0
    %v562 = vtanh.pop %v560
    %v563 = vsel %vm81, %v561, %v562
    %564 = vst [vmem:[#allocation3 + $0x4] sm:$0x1] %v563
    %v565 = vld [vmem:[#allocation2 + $0x5] sm:$0x1]
    %566 = vmatprep.subr.mxu0 0.0
    %567 = vmatpush1.msra.mxu0 %v169
    %568 = vmatprep.subr.mxu0 0.0
    %569 = vmatpush1.msra.mxu0 %v170
    %570 = vmatprep.subr.mxu0 0.0
    %571 = vmatpush1.msra.mxu0 %v171
    %572 = vmatprep.subr.mxu0 0.0
    %573 = vmatpush1.msra.mxu0 %v172
    %574 = vmatprep.subr.mxu0 0.0
    %575 = vmatpush1.msra.mxu0 %v173
    %576 = vmatprep.subr.mxu0 0.0
    %577 = vmatpush1.msra.mxu0 %v174
    %578 = vmatprep.subr.mxu0 0.0
    %579 = vmatpush1.msra.mxu0 %v175
    %580 = vmatprep.subr.mxu0 0.0
    %581 = vmatpush1.msra.mxu0 %v176
    %582 = vmatprep.subr.mxu0 0.0
    %583 = vmatpush1.msra.mxu0 %v177
    %584 = vmatprep.subr.mxu0 0.0
    %585 = vmatpush1.msra.mxu0 %v178
    %586 = vmatprep.subr.mxu0 0.0
    %587 = vmatpush1.msra.mxu0 %v179
    %588 = vmatprep.subr.mxu0 0.0
    %589 = vmatpush1.msra.mxu0 %v180
    %590 = vmatprep.subr.mxu0 0.0
    %591 = vmatpush1.msra.mxu0 %v181
    %592 = vmatprep.subr.mxu0 0.0
    %593 = vmatpush1.msra.mxu0 %v182
    %594 = vmatprep.subr.mxu0 0.0
    %595 = vmatpush1.msra.mxu0 %v183
    %596 = vmatprep.subr.mxu0 0.0
    %597 = vmatpush1.msra.mxu0 %v184
    %598 = vmatprep.subr.mxu0 0.0
    %599 = vmatpush1.msra.mxu0 0.0
    %600 = vmatprep.subr.mxu0 0.0
    %601 = vmatpush1.msra.mxu0 0.0
    %602 = vmatprep.subr.mxu0 0.0
    %603 = vmatpush1.msra.mxu0 0.0
    %604 = vmatprep.subr.mxu0 0.0
    %605 = vmatpush1.msra.mxu0 0.0
    %606 = vmatprep.subr.mxu0 0.0
    %607 = vmatpush1.msra.mxu0 0.0
    %608 = vmatprep.subr.mxu0 0.0
    %609 = vmatpush1.msra.mxu0 0.0
    %610 = vmatprep.subr.mxu0 0.0
    %611 = vmatpush1.msra.mxu0 0.0
    %612 = vmatprep.subr.mxu0 0.0
    %613 = vmatpush1.msra.mxu0 0.0
    %614 = vmatprep.subr.mxu0 0.0
    %615 = vmatpush1.msra.mxu0 0.0
    %616 = vmatprep.subr.mxu0 0.0
    %617 = vmatpush1.msra.mxu0 0.0
    %618 = vmatprep.subr.mxu0 0.0
    %619 = vmatpush1.msra.mxu0 0.0
    %620 = vmatprep.subr.mxu0 0.0
    %621 = vmatpush1.msra.mxu0 0.0
    %622 = vmatprep.subr.mxu0 0.0
    %623 = vmatpush1.msra.mxu0 0.0
    %624 = vmatprep.subr.mxu0 0.0
    %625 = vmatpush1.msra.mxu0 0.0
    %626 = vmatprep.subr.mxu0 0.0
    %627 = vmatpush1.msra.mxu0 0.0
    %628 = vmatprep.subr.mxu0 0.0
    %629 = vmatpush1.msra.mxu0 0.0
    %630 = vmatprep.mubr.f32.mxu0 0.0
    %631 = vmatmul.mubr.f32.gmra.mrb[0].mxu0 %v563
    %v632 = vpop.f32.mrb[0].mxu0
    %v633 = vadd.f32 0.0, %v632
    %v634 = vpop.f32.mrb[0].mxu0
    %635 = vdwg.mxu0
    %v636 = vadd.f32 %v565, %v633
    %v637 = vmax.f32 %v636, 0.0
    %v638 = vtanh.pop %v636
    %v639 = vsel %vm81, %v637, %v638
    %640 = vst [vmem:[#allocation3 + $0x5] sm:$0x1] %v639
    %v641 = vld [vmem:[#allocation2 + $0x6] sm:$0x1]
    %642 = vmatprep.subr.mxu0 0.0
    %643 = vmatpush1.msra.mxu0 %v169
    %644 = vmatprep.subr.mxu0 0.0
    %645 = vmatpush1.msra.mxu0 %v170
    %646 = vmatprep.subr.mxu0 0.0
    %647 = vmatpush1.msra.mxu0 %v171
    %648 = vmatprep.subr.mxu0 0.0
    %649 = vmatpush1.msra.mxu0 %v172
    %650 = vmatprep.subr.mxu0 0.0
    %651 = vmatpush1.msra.mxu0 %v173
    %652 = vmatprep.subr.mxu0 0.0
    %653 = vmatpush1.msra.mxu0 %v174
    %654 = vmatprep.subr.mxu0 0.0
    %655 = vmatpush1.msra.mxu0 %v175
    %656 = vmatprep.subr.mxu0 0.0
    %657 = vmatpush1.msra.mxu0 %v176
    %658 = vmatprep.subr.mxu0 0.0
    %659 = vmatpush1.msra.mxu0 %v177
    %660 = vmatprep.subr.mxu0 0.0
    %661 = vmatpush1.msra.mxu0 %v178
    %662 = vmatprep.subr.mxu0 0.0
    %663 = vmatpush1.msra.mxu0 %v179
    %664 = vmatprep.subr.mxu0 0.0
    %665 = vmatpush1.msra.mxu0 %v180
    %666 = vmatprep.subr.mxu0 0.0
    %667 = vmatpush1.msra.mxu0 %v181
    %668 = vmatprep.subr.mxu0 0.0
    %669 = vmatpush1.msra.mxu0 %v182
    %670 = vmatprep.subr.mxu0 0.0
    %671 = vmatpush1.msra.mxu0 %v183
    %672 = vmatprep.subr.mxu0 0.0
    %673 = vmatpush1.msra.mxu0 %v184
    %674 = vmatprep.subr.mxu0 0.0
    %675 = vmatpush1.msra.mxu0 0.0
    %676 = vmatprep.subr.mxu0 0.0
    %677 = vmatpush1.msra.mxu0 0.0
    %678 = vmatprep.subr.mxu0 0.0
    %679 = vmatpush1.msra.mxu0 0.0
    %680 = vmatprep.subr.mxu0 0.0
    %681 = vmatpush1.msra.mxu0 0.0
    %682 = vmatprep.subr.mxu0 0.0
    %683 = vmatpush1.msra.mxu0 0.0
    %684 = vmatprep.subr.mxu0 0.0
    %685 = vmatpush1.msra.mxu0 0.0
    %686 = vmatprep.subr.mxu0 0.0
    %687 = vmatpush1.msra.mxu0 0.0
    %688 = vmatprep.subr.mxu0 0.0
    %689 = vmatpush1.msra.mxu0 0.0
    %690 = vmatprep.subr.mxu0 0.0
    %691 = vmatpush1.msra.mxu0 0.0
    %692 = vmatprep.subr.mxu0 0.0
    %693 = vmatpush1.msra.mxu0 0.0
    %694 = vmatprep.subr.mxu0 0.0
    %695 = vmatpush1.msra.mxu0 0.0
    %696 = vmatprep.subr.mxu0 0.0
    %697 = vmatpush1.msra.mxu0 0.0
    %698 = vmatprep.subr.mxu0 0.0
    %699 = vmatpush1.msra.mxu0 0.0
    %700 = vmatprep.subr.mxu0 0.0
    %701 = vmatpush1.msra.mxu0 0.0
    %702 = vmatprep.subr.mxu0 0.0
    %703 = vmatpush1.msra.mxu0 0.0
    %704 = vmatprep.subr.mxu0 0.0
    %705 = vmatpush1.msra.mxu0 0.0
    %706 = vmatprep.mubr.f32.mxu0 0.0
    %707 = vmatmul.mubr.f32.gmra.mrb[0].mxu0 %v639
    %v708 = vpop.f32.mrb[0].mxu0
    %v709 = vadd.f32 0.0, %v708
    %v710 = vpop.f32.mrb[0].mxu0
    %711 = vdwg.mxu0
    %v712 = vadd.f32 %v641, %v709
    %v713 = vmax.f32 %v712, 0.0
    %v714 = vtanh.pop %v712
    %v715 = vsel %vm81, %v713, %v714
    %716 = vst [vmem:[#allocation3 + $0x6] sm:$0x1] %v715
    %v717 = vld [vmem:[#allocation2 + $0x7] sm:$0x1]
    %718 = vmatprep.subr.mxu0 0.0
    %719 = vmatpush1.msra.mxu0 %v169
    %720 = vmatprep.subr.mxu0 0.0
    %721 = vmatpush1.msra.mxu0 %v170
    %722 = vmatprep.subr.mxu0 0.0
    %723 = vmatpush1.msra.mxu0 %v171
    %724 = vmatprep.subr.mxu0 0.0
    %725 = vmatpush1.msra.mxu0 %v172
    %726 = vmatprep.subr.mxu0 0.0
    %727 = vmatpush1.msra.mxu0 %v173
    %728 = vmatprep.subr.mxu0 0.0
    %729 = vmatpush1.msra.mxu0 %v174
    %730 = vmatprep.subr.mxu0 0.0
    %731 = vmatpush1.msra.mxu0 %v175
    %732 = vmatprep.subr.mxu0 0.0
    %733 = vmatpush1.msra.mxu0 %v176
    %734 = vmatprep.subr.mxu0 0.0
    %735 = vmatpush1.msra.mxu0 %v177
    %736 = vmatprep.subr.mxu0 0.0
    %737 = vmatpush1.msra.mxu0 %v178
    %738 = vmatprep.subr.mxu0 0.0
    %739 = vmatpush1.msra.mxu0 %v179
    %740 = vmatprep.subr.mxu0 0.0
    %741 = vmatpush1.msra.mxu0 %v180
    %742 = vmatprep.subr.mxu0 0.0
    %743 = vmatpush1.msra.mxu0 %v181
    %744 = vmatprep.subr.mxu0 0.0
    %745 = vmatpush1.msra.mxu0 %v182
    %746 = vmatprep.subr.mxu0 0.0
    %747 = vmatpush1.msra.mxu0 %v183
    %748 = vmatprep.subr.mxu0 0.0
    %749 = vmatpush1.msra.mxu0 %v184
    %750 = vmatprep.subr.mxu0 0.0
    %751 = vmatpush1.msra.mxu0 0.0
    %752 = vmatprep.subr.mxu0 0.0
    %753 = vmatpush1.msra.mxu0 0.0
    %754 = vmatprep.subr.mxu0 0.0
    %755 = vmatpush1.msra.mxu0 0.0
    %756 = vmatprep.subr.mxu0 0.0
    %757 = vmatpush1.msra.mxu0 0.0
    %758 = vmatprep.subr.mxu0 0.0
    %759 = vmatpush1.msra.mxu0 0.0
    %760 = vmatprep.subr.mxu0 0.0
    %761 = vmatpush1.msra.mxu0 0.0
    %762 = vmatprep.subr.mxu0 0.0
    %763 = vmatpush1.msra.mxu0 0.0
    %764 = vmatprep.subr.mxu0 0.0
    %765 = vmatpush1.msra.mxu0 0.0
    %766 = vmatprep.subr.mxu0 0.0
    %767 = vmatpush1.msra.mxu0 0.0
    %768 = vmatprep.subr.mxu0 0.0
    %769 = vmatpush1.msra.mxu0 0.0
    %770 = vmatprep.subr.mxu0 0.0
    %771 = vmatpush1.msra.mxu0 0.0
    %772 = vmatprep.subr.mxu0 0.0
    %773 = vmatpush1.msra.mxu0 0.0
    %774 = vmatprep.subr.mxu0 0.0
    %775 = vmatpush1.msra.mxu0 0.0
    %776 = vmatprep.subr.mxu0 0.0
    %777 = vmatpush1.msra.mxu0 0.0
    %778 = vmatprep.subr.mxu0 0.0
    %779 = vmatpush1.msra.mxu0 0.0
    %780 = vmatprep.subr.mxu0 0.0
    %781 = vmatpush1.msra.mxu0 0.0
    %782 = vmatprep.mubr.f32.mxu0 0.0
    %783 = vmatmul.mubr.f32.gmra.mrb[0].mxu0 %v715
    %v784 = vpop.f32.mrb[0].mxu0
    %v785 = vadd.f32 0.0, %v784
    %v786 = vpop.f32.mrb[0].mxu0
    %787 = vdwg.mxu0
    %v788 = vadd.f32 %v717, %v785
    %v789 = vmax.f32 %v788, 0.0
    %v790 = vtanh.pop %v788
    %v791 = vsel %vm81, %v789, %v790
    %792 = vst [vmem:[#allocation3 + $0x7] sm:$0x1] %v791
    %v793 = vld [vmem:[#allocation3] sm:$0xff]
    %v794 = vld [vmem:[%s4] sm:$0xff]
    %v795 = vld [vmem:[%s4 + $0x8] sm:$0xff]
    %v796 = vld [vmem:[%s4 + $0x10] sm:$0xff]
    %v797 = vld [vmem:[%s4 + $0x18] sm:$0xff]
    %v798 = vld [vmem:[%s4 + $0x20] sm:$0xff]
    %v799 = vld [vmem:[%s4 + $0x28] sm:$0xff]
    %v800 = vld [vmem:[%s4 + $0x30] sm:$0xff]
    %v801 = vld [vmem:[%s4 + $0x38] sm:$0xff]
    %v802 = vld [vmem:[%s4 + $0x40] sm:$0xff]
    %v803 = vld [vmem:[%s4 + $0x48] sm:$0xff]
    %v804 = vld [vmem:[%s4 + $0x50] sm:$0xff]
    %v805 = vld [vmem:[%s4 + $0x58] sm:$0xff]
    %v806 = vld [vmem:[%s4 + $0x60] sm:$0xff]
    %v807 = vld [vmem:[%s4 + $0x68] sm:$0xff]
    %v808 = vld [vmem:[%s4 + $0x70] sm:$0xff]
    %v809 = vld [vmem:[%s4 + $0x78] sm:$0xff]
    %v810 = vld [vmem:[%s5] sm:$0x1]
    %v812 = vlaneseq
    %v813 = vshrl.u32 %v812, 7
    %v814 = vsub.s32 0, %v813
    %v815 = vrot.slane %v810, %v814
    %817 = vmatprep.subr.mxu0 0.0
    %818 = vmatpush1.msra.mxu0 %v794
    %819 = vmatprep.subr.mxu0 0.0
    %820 = vmatpush1.msra.mxu0 %v795
    %821 = vmatprep.subr.mxu0 0.0
    %822 = vmatpush1.msra.mxu0 %v796
    %823 = vmatprep.subr.mxu0 0.0
    %824 = vmatpush1.msra.mxu0 %v797
    %825 = vmatprep.subr.mxu0 0.0
    %826 = vmatpush1.msra.mxu0 %v798
    %827 = vmatprep.subr.mxu0 0.0
    %828 = vmatpush1.msra.mxu0 %v799
    %829 = vmatprep.subr.mxu0 0.0
    %830 = vmatpush1.msra.mxu0 %v800
    %831 = vmatprep.subr.mxu0 0.0
    %832 = vmatpush1.msra.mxu0 %v801
    %833 = vmatprep.subr.mxu0 0.0
    %834 = vmatpush1.msra.mxu0 %v802
    %835 = vmatprep.subr.mxu0 0.0
    %836 = vmatpush1.msra.mxu0 %v803
    %837 = vmatprep.subr.mxu0 0.0
    %838 = vmatpush1.msra.mxu0 %v804
    %839 = vmatprep.subr.mxu0 0.0
    %840 = vmatpush1.msra.mxu0 %v805
    %841 = vmatprep.subr.mxu0 0.0
    %842 = vmatpush1.msra.mxu0 %v806
    %843 = vmatprep.subr.mxu0 0.0
    %844 = vmatpush1.msra.mxu0 %v807
    %845 = vmatprep.subr.mxu0 0.0
    %846 = vmatpush1.msra.mxu0 %v808
    %847 = vmatprep.subr.mxu0 0.0
    %848 = vmatpush1.msra.mxu0 %v809
    %849 = vmatprep.subr.mxu0 0.0
    %850 = vmatpush1.msra.mxu0 0.0
    %851 = vmatprep.subr.mxu0 0.0
    %852 = vmatpush1.msra.mxu0 0.0
    %853 = vmatprep.subr.mxu0 0.0
    %854 = vmatpush1.msra.mxu0 0.0
    %855 = vmatprep.subr.mxu0 0.0
    %856 = vmatpush1.msra.mxu0 0.0
    %857 = vmatprep.subr.mxu0 0.0
    %858 = vmatpush1.msra.mxu0 0.0
    %859 = vmatprep.subr.mxu0 0.0
    %860 = vmatpush1.msra.mxu0 0.0
    %861 = vmatprep.subr.mxu0 0.0
    %862 = vmatpush1.msra.mxu0 0.0
    %863 = vmatprep.subr.mxu0 0.0
    %864 = vmatpush1.msra.mxu0 0.0
    %865 = vmatprep.subr.mxu0 0.0
    %866 = vmatpush1.msra.mxu0 0.0
    %867 = vmatprep.subr.mxu0 0.0
    %868 = vmatpush1.msra.mxu0 0.0
    %869 = vmatprep.subr.mxu0 0.0
    %870 = vmatpush1.msra.mxu0 0.0
    %871 = vmatprep.subr.mxu0 0.0
    %872 = vmatpush1.msra.mxu0 0.0
    %873 = vmatprep.subr.mxu0 0.0
    %874 = vmatpush1.msra.mxu0 0.0
    %875 = vmatprep.subr.mxu0 0.0
    %876 = vmatpush1.msra.mxu0 0.0
    %877 = vmatprep.subr.mxu0 0.0
    %878 = vmatpush1.msra.mxu0 0.0
    %879 = vmatprep.subr.mxu0 0.0
    %880 = vmatpush1.msra.mxu0 0.0
    %881 = vmatprep.mubr.f32.mxu0 0.0
    %882 = vmatmul.mubr.f32.gmra.mrb[0].mxu0 %v793
    %v883 = vpop.f32.mrb[0].mxu0
    %v884 = vadd.f32 %v815, %v883
    %v885 = vpop.f32.mrb[0].mxu0
    %886 = vdwg.mxu0
    %vm887 = vcmp.ge.f32.partialorder %v884, 0.0
    %v888 = vmul.f32 %v884, 0.22916667
    %v889 = vsel %vm887, %v884, %v888
    %v890 = vld [vmem:[#allocation4] sm:$0xff]
    %v891 = vld [vmem:[#allocation4 + $0x8] sm:$0xff]
    %v892 = vld [vmem:[#allocation4 + $0x10] sm:$0xff]
    %v893 = vld [vmem:[#allocation4 + $0x18] sm:$0xff]
    %v894 = vld [vmem:[#allocation4 + $0x20] sm:$0xff]
    %v895 = vld [vmem:[#allocation4 + $0x28] sm:$0xff]
    %v896 = vld [vmem:[#allocation4 + $0x30] sm:$0xff]
    %v897 = vld [vmem:[#allocation4 + $0x38] sm:$0xff]
    %v898 = vld [vmem:[#allocation4 + $0x40] sm:$0xff]
    %v899 = vld [vmem:[#allocation4 + $0x48] sm:$0xff]
    %v900 = vld [vmem:[#allocation4 + $0x50] sm:$0xff]
    %v901 = vld [vmem:[#allocation4 + $0x58] sm:$0xff]
    %v902 = vld [vmem:[#allocation4 + $0x60] sm:$0xff]
    %v903 = vld [vmem:[#allocation4 + $0x68] sm:$0xff]
    %v904 = vld [vmem:[#allocation4 + $0x70] sm:$0xff]
    %v905 = vld [vmem:[#allocation4 + $0x78] sm:$0xff]
    %v906 = vld [vmem:[%s7] sm:$0x1]
    %v908 = vlaneseq
    %v909 = vshrl.u32 %v908, 7
    %v910 = vsub.s32 0, %v909
    %v911 = vrot.slane %v906, %v910
    %913 = vmatprep.subr.mxu0 0.0
    %914 = vmatpush1.msra.mxu0 %v890
    %915 = vmatprep.subr.mxu0 0.0
    %916 = vmatpush1.msra.mxu0 %v891
    %917 = vmatprep.subr.mxu0 0.0
    %918 = vmatpush1.msra.mxu0 %v892
    %919 = vmatprep.subr.mxu0 0.0
    %920 = vmatpush1.msra.mxu0 %v893
    %921 = vmatprep.subr.mxu0 0.0
    %922 = vmatpush1.msra.mxu0 %v894
    %923 = vmatprep.subr.mxu0 0.0
    %924 = vmatpush1.msra.mxu0 %v895
    %925 = vmatprep.subr.mxu0 0.0
    %926 = vmatpush1.msra.mxu0 %v896
    %927 = vmatprep.subr.mxu0 0.0
    %928 = vmatpush1.msra.mxu0 %v897
    %929 = vmatprep.subr.mxu0 0.0
    %930 = vmatpush1.msra.mxu0 %v898
    %931 = vmatprep.subr.mxu0 0.0
    %932 = vmatpush1.msra.mxu0 %v899
    %933 = vmatprep.subr.mxu0 0.0
    %934 = vmatpush1.msra.mxu0 %v900
    %935 = vmatprep.subr.mxu0 0.0
    %936 = vmatpush1.msra.mxu0 %v901
    %937 = vmatprep.subr.mxu0 0.0
    %938 = vmatpush1.msra.mxu0 %v902
    %939 = vmatprep.subr.mxu0 0.0
    %940 = vmatpush1.msra.mxu0 %v903
    %941 = vmatprep.subr.mxu0 0.0
    %942 = vmatpush1.msra.mxu0 %v904
    %943 = vmatprep.subr.mxu0 0.0
    %944 = vmatpush1.msra.mxu0 %v905
    %945 = vmatprep.subr.mxu0 0.0
    %946 = vmatpush1.msra.mxu0 0.0
    %947 = vmatprep.subr.mxu0 0.0
    %948 = vmatpush1.msra.mxu0 0.0
    %949 = vmatprep.subr.mxu0 0.0
    %950 = vmatpush1.msra.mxu0 0.0
    %951 = vmatprep.subr.mxu0 0.0
    %952 = vmatpush1.msra.mxu0 0.0
    %953 = vmatprep.subr.mxu0 0.0
    %954 = vmatpush1.msra.mxu0 0.0
    %955 = vmatprep.subr.mxu0 0.0
    %956 = vmatpush1.msra.mxu0 0.0
    %957 = vmatprep.subr.mxu0 0.0
    %958 = vmatpush1.msra.mxu0 0.0
    %959 = vmatprep.subr.mxu0 0.0
    %960 = vmatpush1.msra.mxu0 0.0
    %961 = vmatprep.subr.mxu0 0.0
    %962 = vmatpush1.msra.mxu0 0.0
    %963 = vmatprep.subr.mxu0 0.0
    %964 = vmatpush1.msra.mxu0 0.0
    %965 = vmatprep.subr.mxu0 0.0
    %966 = vmatpush1.msra.mxu0 0.0
    %967 = vmatprep.subr.mxu0 0.0
    %968 = vmatpush1.msra.mxu0 0.0
    %969 = vmatprep.subr.mxu0 0.0
    %970 = vmatpush1.msra.mxu0 0.0
    %971 = vmatprep.subr.mxu0 0.0
    %972 = vmatpush1.msra.mxu0 0.0
    %973 = vmatprep.subr.mxu0 0.0
    %974 = vmatpush1.msra.mxu0 0.0
    %975 = vmatprep.subr.mxu0 0.0
    %976 = vmatpush1.msra.mxu0 0.0
    %977 = vmatprep.mubr.f32.mxu0 0.0
    %978 = vmatmul.mubr.f32.gmra.mrb[0].mxu0 %v889
    %v979 = vpop.f32.mrb[0].mxu0
    %v980 = vadd.f32 %v911, %v979
    %v981 = vpop.f32.mrb[0].mxu0
    %982 = vdwg.mxu0
    %v983 = vtanh.pop %v980
    %v984 = vld [vmem:[#allocation6] sm:$0xff]
    %v985 = vld [vmem:[#allocation6 + $0x8] sm:$0xff]
    %v986 = vld [vmem:[#allocation6 + $0x10] sm:$0xff]
    %v987 = vld [vmem:[#allocation6 + $0x18] sm:$0xff]
    %v988 = vld [vmem:[#allocation6 + $0x20] sm:$0xff]
    %v989 = vld [vmem:[#allocation6 + $0x28] sm:$0xff]
    %v990 = vld [vmem:[#allocation6 + $0x30] sm:$0xff]
    %v991 = vld [vmem:[#allocation6 + $0x38] sm:$0xff]
    %v992 = vld [vmem:[#allocation6 + $0x40] sm:$0xff]
    %v993 = vld [vmem:[#allocation6 + $0x48] sm:$0xff]
    %v994 = vld [vmem:[#allocation6 + $0x50] sm:$0xff]
    %v995 = vld [vmem:[#allocation6 + $0x58] sm:$0xff]
    %v996 = vld [vmem:[#allocation6 + $0x60] sm:$0xff]
    %v997 = vld [vmem:[#allocation6 + $0x68] sm:$0xff]
    %v998 = vld [vmem:[#allocation6 + $0x70] sm:$0xff]
    %v999 = vld [vmem:[#allocation6 + $0x78] sm:$0xff]
    %v1000 = vld [vmem:[#allocation8] sm:$0xff]
    %v1001 = vld [vmem:[#allocation8 + $0x8] sm:$0xff]
    %v1002 = vld [vmem:[#allocation8 + $0x10] sm:$0xff]
    %v1003 = vld [vmem:[#allocation8 + $0x18] sm:$0xff]
    %v1005 = vsel %vm94, %v983, 0
    %1007 = vmatprep.subr.mxu0 0.0
    %1008 = vmatpush1.msra.mxu0 %v1000
    %1009 = vmatprep.subr.mxu0 0.0
    %1010 = vmatpush1.msra.mxu0 %v1001
    %1011 = vmatprep.subr.mxu0 0.0
    %1012 = vmatpush1.msra.mxu0 %v1002
    %1013 = vmatprep.subr.mxu0 0.0
    %1014 = vmatpush1.msra.mxu0 %v1003
    %1015 = vmatprep.subr.mxu0 0.0
    %1016 = vmatpush1.msra.mxu0 0.0
    %1017 = vmatprep.subr.mxu0 0.0
    %1018 = vmatpush1.msra.mxu0 0.0
    %1019 = vmatprep.subr.mxu0 0.0
    %1020 = vmatpush1.msra.mxu0 0.0
    %1021 = vmatprep.subr.mxu0 0.0
    %1022 = vmatpush1.msra.mxu0 0.0
    %1023 = vmatprep.subr.mxu0 0.0
    %1024 = vmatpush1.msra.mxu0 0.0
    %1025 = vmatprep.subr.mxu0 0.0
    %1026 = vmatpush1.msra.mxu0 0.0
    %1027 = vmatprep.subr.mxu0 0.0
    %1028 = vmatpush1.msra.mxu0 0.0
    %1029 = vmatprep.subr.mxu0 0.0
    %1030 = vmatpush1.msra.mxu0 0.0
    %1031 = vmatprep.subr.mxu0 0.0
    %1032 = vmatpush1.msra.mxu0 0.0
    %1033 = vmatprep.subr.mxu0 0.0
    %1034 = vmatpush1.msra.mxu0 0.0
    %1035 = vmatprep.subr.mxu0 0.0
    %1036 = vmatpush1.msra.mxu0 0.0
    %1037 = vmatprep.subr.mxu0 0.0
    %1038 = vmatpush1.msra.mxu0 0.0
    %1039 = vmatprep.subr.mxu0 0.0
    %1040 = vmatpush1.msra.mxu0 0.0
    %1041 = vmatprep.subr.mxu0 0.0
    %1042 = vmatpush1.msra.mxu0 0.0
    %1043 = vmatprep.subr.mxu0 0.0
    %1044 = vmatpush1.msra.mxu0 0.0
    %1045 = vmatprep.subr.mxu0 0.0
    %1046 = vmatpush1.msra.mxu0 0.0
    %1047 = vmatprep.subr.mxu0 0.0
    %1048 = vmatpush1.msra.mxu0 0.0
    %1049 = vmatprep.subr.mxu0 0.0
    %1050 = vmatpush1.msra.mxu0 0.0
    %1051 = vmatprep.subr.mxu0 0.0
    %1052 = vmatpush1.msra.mxu0 0.0
    %1053 = vmatprep.subr.mxu0 0.0
    %1054 = vmatpush1.msra.mxu0 0.0
    %1055 = vmatprep.subr.mxu0 0.0
    %1056 = vmatpush1.msra.mxu0 0.0
    %1057 = vmatprep.subr.mxu0 0.0
    %1058 = vmatpush1.msra.mxu0 0.0
    %1059 = vmatprep.subr.mxu0 0.0
    %1060 = vmatpush1.msra.mxu0 0.0
    %1061 = vmatprep.subr.mxu0 0.0
    %1062 = vmatpush1.msra.mxu0 0.0
    %1063 = vmatprep.subr.mxu0 0.0
    %1064 = vmatpush1.msra.mxu0 0.0
    %1065 = vmatprep.subr.mxu0 0.0
    %1066 = vmatpush1.msra.mxu0 0.0
    %1067 = vmatprep.subr.mxu0 0.0
    %1068 = vmatpush1.msra.mxu0 0.0
    %1069 = vmatprep.subr.mxu0 0.0
    %1070 = vmatpush1.msra.mxu0 0.0
    %1071 = vmatprep.mubr.f32.mxu0 0.0
    %1072 = vmatmul.mubr.f32.gmra.mrb[0].mxu0 %v1005
    %v1073 = vpop.f32.mrb[0].mxu0
    %v1074 = vadd.f32 0.0, %v1073
    %v1075 = vpop.f32.mrb[0].mxu0
    %1076 = vdwg.mxu0
    %1077 = vmatprep.subr.mxu0 0.0
    %1078 = vmatpush1.msra.mxu0 %v984
    %1079 = vmatprep.subr.mxu0 0.0
    %1080 = vmatpush1.msra.mxu0 %v985
    %1081 = vmatprep.subr.mxu0 0.0
    %1082 = vmatpush1.msra.mxu0 %v986
    %1083 = vmatprep.subr.mxu0 0.0
    %1084 = vmatpush1.msra.mxu0 %v987
    %1085 = vmatprep.subr.mxu0 0.0
    %1086 = vmatpush1.msra.mxu0 %v988
    %1087 = vmatprep.subr.mxu0 0.0
    %1088 = vmatpush1.msra.mxu0 %v989
    %1089 = vmatprep.subr.mxu0 0.0
    %1090 = vmatpush1.msra.mxu0 %v990
    %1091 = vmatprep.subr.mxu0 0.0
    %1092 = vmatpush1.msra.mxu0 %v991
    %1093 = vmatprep.subr.mxu0 0.0
    %1094 = vmatpush1.msra.mxu0 %v992
    %1095 = vmatprep.subr.mxu0 0.0
    %1096 = vmatpush1.msra.mxu0 %v993
    %1097 = vmatprep.subr.mxu0 0.0
    %1098 = vmatpush1.msra.mxu0 %v994
    %1099 = vmatprep.subr.mxu0 0.0
    %1100 = vmatpush1.msra.mxu0 %v995
    %1101 = vmatprep.subr.mxu0 0.0
    %1102 = vmatpush1.msra.mxu0 %v996
    %1103 = vmatprep.subr.mxu0 0.0
    %1104 = vmatpush1.msra.mxu0 %v997
    %1105 = vmatprep.subr.mxu0 0.0
    %1106 = vmatpush1.msra.mxu0 %v998
    %1107 = vmatprep.subr.mxu0 0.0
    %1108 = vmatpush1.msra.mxu0 %v999
    %1109 = vmatprep.subr.mxu0 0.0
    %1110 = vmatpush1.msra.mxu0 0.0
    %1111 = vmatprep.subr.mxu0 0.0
    %1112 = vmatpush1.msra.mxu0 0.0
    %1113 = vmatprep.subr.mxu0 0.0
    %1114 = vmatpush1.msra.mxu0 0.0
    %1115 = vmatprep.subr.mxu0 0.0
    %1116 = vmatpush1.msra.mxu0 0.0
    %1117 = vmatprep.subr.mxu0 0.0
    %1118 = vmatpush1.msra.mxu0 0.0
    %1119 = vmatprep.subr.mxu0 0.0
    %1120 = vmatpush1.msra.mxu0 0.0
    %1121 = vmatprep.subr.mxu0 0.0
    %1122 = vmatpush1.msra.mxu0 0.0
    %1123 = vmatprep.subr.mxu0 0.0
    %1124 = vmatpush1.msra.mxu0 0.0
    %1125 = vmatprep.subr.mxu0 0.0
    %1126 = vmatpush1.msra.mxu0 0.0
    %1127 = vmatprep.subr.mxu0 0.0
    %1128 = vmatpush1.msra.mxu0 0.0
    %1129 = vmatprep.subr.mxu0 0.0
    %1130 = vmatpush1.msra.mxu0 0.0
    %1131 = vmatprep.subr.mxu0 0.0
    %1132 = vmatpush1.msra.mxu0 0.0
    %1133 = vmatprep.subr.mxu0 0.0
    %1134 = vmatpush1.msra.mxu0 0.0
    %1135 = vmatprep.subr.mxu0 0.0
    %1136 = vmatpush1.msra.mxu0 0.0
    %1137 = vmatprep.subr.mxu0 0.0
    %1138 = vmatpush1.msra.mxu0 0.0
    %1139 = vmatprep.subr.mxu0 0.0
    %1140 = vmatpush1.msra.mxu0 0.0
    %1141 = vmatprep.mubr.f32.mxu0 0.0
    %1142 = vmatmul.mubr.f32.gmra.mrb[0].mxu0 %v889
    %v1143 = vpop.f32.mrb[0].mxu0
    %v1144 = vadd.f32 %v1074, %v1143
    %v1145 = vpop.f32.mrb[0].mxu0
    %1146 = vdwg.mxu0
    %v1147 = vld [vmem:[%s10] sm:$0x1]
    %v1149 = vlaneseq
    %v1150 = vshrl.u32 %v1149, 7
    %v1151 = vsub.s32 0, %v1150
    %v1152 = vrot.slane %v1147, %v1151
    %v1154 = vadd.f32 %v1144, %v1152
    %vm1155 = vcmask 31744
    %1156 = vst.msk [vmem:[%s11] sm:$0xff] %vm1155, %v1154
    // Predicated region
    $region58: #{_lambda_.2} parent=1 // pred_check
      _
    $region59: #{_lambda_.2} parent=1 // pred_check_branch
      %1158 = sbr.rel (0) target = $region61
    $region60: #{_lambda_.2} parent=1 // pred_region
      _
    $region61: #{_lambda_.2} parent=1 // pred_fallthru
      _
    // Predicated region
    $region62: #{_lambda_.2} parent=1 // pred_check
      _
    $region63: #{_lambda_.2} parent=1 // pred_check_branch
      %1160 = sbr.rel (0) target = $region65
    $region64: #{_lambda_.2} parent=1 // pred_region
      _
    $region65: #{_lambda_.2} parent=1 // pred_fallthru
      _
    %1161 = vsyncpa [#allocation5], 1
    %1162 = vsyncpa [#allocation7], 1

// kernel: _lambda_.3
$region0: #{_lambda_.3}
  #allocation0 [shape = 'u32[]', space=smem, size = 0x4, offset = 0x4, fixed_abs, tag = 'smem constant byte address 0x4 - core index']
  #allocation1 [shape = 'u32[144,128]{1,0:T(1,128)}', space=vmem, size = 0x12000, scoped, tag = 'internal scratch']
  #allocation2 [shape = 'f32[8,64]{1,0:T(8,128)}', space=vmem, size = 0x1000, scoped, tag = 'scratch operand']
  #allocation3 [shape = 'f32[8,64]{1,0:T(8,128)}', space=vmem, size = 0x1000, scoped, tag = 'scratch operand']
  %s0 = inlined_call_operand.vmem [shape: f32[8,32], index: 0, kind: input, shape index: {}]
  %s1 = inlined_call_operand.vmem [shape: f32[32,64], index: 1, kind: input, shape index: {}]
  %s2 = inlined_call_operand.vmem [shape: f32[64,64], index: 2, kind: input, shape index: {}]
  %s3 = inlined_call_operand.vmem [shape: f32[64,64], index: 3, kind: input, shape index: {}]
  %s4 = inlined_call_operand.vmem [shape: f32[64,64], index: 4, kind: input, shape index: {}]
  %s5 = inlined_call_operand.vmem [shape: f32[1,64], index: 5, kind: input, shape index: {}]
  %s6 = inlined_call_operand.vmem [shape: f32[1,64], index: 6, kind: input, shape index: {}]
  %s7 = inlined_call_operand.vmem [shape: f32[64,64], index: 7, kind: input, shape index: {}]
  %s8 = inlined_call_operand.vmem [shape: f32[1,64], index: 8, kind: input, shape index: {}]
  %s9 = inlined_call_operand.vmem [shape: f32[64,16], index: 9, kind: input, shape index: {}]
  %s10 = inlined_call_operand.vmem [shape: f32[1,16], index: 10, kind: input, shape index: {}]
  %s11 = inlined_call_operand.vmem [shape: f32[64,4], index: 11, kind: input, shape index: {}]
  %s12 = inlined_call_operand.vmem [shape: f32[16,4], index: 12, kind: input, shape index: {}]
  %s13 = inlined_call_operand.vmem [shape: f32[1,4], index: 13, kind: input, shape index: {}]
  %s14 = inlined_call_operand.vmem [shape: f32[8,4], index: 14, kind: output, shape index: {}]
  %s15 = sld [smem:[#allocation0]]
  $region66: #{_lambda_.3} parent=0
    _
  %s17 = ssub.s32 1, %s15
  %s18 = scalar_select 0, %s17, %s15
  // Predicated region
  $region2: #{_lambda_.3} parent=0 // pred_check
    _
  $region3: #{_lambda_.3} parent=0 // pred_check_branch
    %20 = sbr.rel (0) target = $region5
  $region4: #{_lambda_.3} parent=0 // pred_region
    _
  $region5: #{_lambda_.3} parent=0 // pred_fallthru
    _
  // Predicated region
  $region6: #{_lambda_.3} parent=0 // pred_check
    _
  $region7: #{_lambda_.3} parent=0 // pred_check_branch
    %22 = sbr.rel (0) target = $region9
  $region8: #{_lambda_.3} parent=0 // pred_region
    _
  $region9: #{_lambda_.3} parent=0 // pred_fallthru
    _
  // Predicated region
  $region10: #{_lambda_.3} parent=0 // pred_check
    _
  $region11: #{_lambda_.3} parent=0 // pred_check_branch
    %24 = sbr.rel (0) target = $region13
  $region12: #{_lambda_.3} parent=0 // pred_region
    _
  $region13: #{_lambda_.3} parent=0 // pred_fallthru
    _
  // Predicated region
  $region14: #{_lambda_.3} parent=0 // pred_check
    _
  $region15: #{_lambda_.3} parent=0 // pred_check_branch
    %26 = sbr.rel (0) target = $region17
  $region16: #{_lambda_.3} parent=0 // pred_region
    _
  $region17: #{_lambda_.3} parent=0 // pred_fallthru
    _
  // Predicated region
  $region18: #{_lambda_.3} parent=0 // pred_check
    _
  $region19: #{_lambda_.3} parent=0 // pred_check_branch
    %28 = sbr.rel (0) target = $region21
  $region20: #{_lambda_.3} parent=0 // pred_region
    _
  $region21: #{_lambda_.3} parent=0 // pred_fallthru
    _
  // Predicated region
  $region22: #{_lambda_.3} parent=0 // pred_check
    _
  $region23: #{_lambda_.3} parent=0 // pred_check_branch
    %30 = sbr.rel (0) target = $region25
  $region24: #{_lambda_.3} parent=0 // pred_region
    _
  $region25: #{_lambda_.3} parent=0 // pred_fallthru
    _
  // Predicated region
  $region26: #{_lambda_.3} parent=0 // pred_check
    _
  $region27: #{_lambda_.3} parent=0 // pred_check_branch
    %32 = sbr.rel (0) target = $region29
  $region28: #{_lambda_.3} parent=0 // pred_region
    _
  $region29: #{_lambda_.3} parent=0 // pred_fallthru
    _
  // Predicated region
  $region30: #{_lambda_.3} parent=0 // pred_check
    _
  $region31: #{_lambda_.3} parent=0 // pred_check_branch
    %34 = sbr.rel (0) target = $region33
  $region32: #{_lambda_.3} parent=0 // pred_region
    _
  $region33: #{_lambda_.3} parent=0 // pred_fallthru
    _
  // Predicated region
  $region34: #{_lambda_.3} parent=0 // pred_check
    _
  $region35: #{_lambda_.3} parent=0 // pred_check_branch
    %36 = sbr.rel (0) target = $region37
  $region36: #{_lambda_.3} parent=0 // pred_region
    _
  $region37: #{_lambda_.3} parent=0 // pred_fallthru
    _
  // Predicated region
  $region38: #{_lambda_.3} parent=0 // pred_check
    _
  $region39: #{_lambda_.3} parent=0 // pred_check_branch
    %38 = sbr.rel (0) target = $region41
  $region40: #{_lambda_.3} parent=0 // pred_region
    _
  $region41: #{_lambda_.3} parent=0 // pred_fallthru
    _
  // Predicated region
  $region42: #{_lambda_.3} parent=0 // pred_check
    _
  $region43: #{_lambda_.3} parent=0 // pred_check_branch
    %40 = sbr.rel (0) target = $region45
  $region44: #{_lambda_.3} parent=0 // pred_region
    _
  $region45: #{_lambda_.3} parent=0 // pred_fallthru
    _
  // Predicated region
  $region46: #{_lambda_.3} parent=0 // pred_check
    _
  $region47: #{_lambda_.3} parent=0 // pred_check_branch
    %42 = sbr.rel (0) target = $region49
  $region48: #{_lambda_.3} parent=0 // pred_region
    _
  $region49: #{_lambda_.3} parent=0 // pred_fallthru
    _
  // Predicated region
  $region50: #{_lambda_.3} parent=0 // pred_check
    _
  $region51: #{_lambda_.3} parent=0 // pred_check_branch
    %44 = sbr.rel (0) target = $region53
  $region52: #{_lambda_.3} parent=0 // pred_region
    _
  $region53: #{_lambda_.3} parent=0 // pred_fallthru
    _
  // Predicated region
  $region54: #{_lambda_.3} parent=0 // pred_check
    _
  $region55: #{_lambda_.3} parent=0 // pred_check_branch
    %46 = sbr.rel (0) target = $region57
  $region56: #{_lambda_.3} parent=0 // pred_region
    _
  $region57: #{_lambda_.3} parent=0 // pred_fallthru
    _
  %v47 = vlaneseq
  %v48 = vand.u32 %v47, 127
  %vm49 = vcmp.lt.s32.totalorder %v48, 48
  %v50 = vld [vmem:[%s0] sm:$0xff]
  %v51 = vld [vmem:[%s1] sm:$0xff]
  %v52 = vld [vmem:[%s1 + $0x8] sm:$0xff]
  %v53 = vld [vmem:[%s1 + $0x10] sm:$0xff]
  %v54 = vld [vmem:[%s1 + $0x18] sm:$0xff]
  %v55 = vld [vmem:[%s5] sm:$0x1]
  %v57 = vlaneseq
  %v58 = vshrl.u32 %v57, 7
  %v59 = vsub.s32 0, %v58
  %v60 = vrot.slane %v55, %v59
  %vm62 = vcmask 261120
  %v64 = vsel %vm62, %v50, 0
  %66 = vmatprep.subr.mxu0 0.0
  %67 = vmatpush1.msra.mxu0 %v51
  %68 = vmatprep.subr.mxu0 0.0
  %69 = vmatpush1.msra.mxu0 %v52
  %70 = vmatprep.subr.mxu0 0.0
  %71 = vmatpush1.msra.mxu0 %v53
  %72 = vmatprep.subr.mxu0 0.0
  %73 = vmatpush1.msra.mxu0 %v54
  %74 = vmatprep.subr.mxu0 0.0
  %75 = vmatpush1.msra.mxu0 0.0
  %76 = vmatprep.subr.mxu0 0.0
  %77 = vmatpush1.msra.mxu0 0.0
  %78 = vmatprep.subr.mxu0 0.0
  %79 = vmatpush1.msra.mxu0 0.0
  %80 = vmatprep.subr.mxu0 0.0
  %81 = vmatpush1.msra.mxu0 0.0
  %82 = vmatprep.subr.mxu0 0.0
  %83 = vmatpush1.msra.mxu0 0.0
  %84 = vmatprep.subr.mxu0 0.0
  %85 = vmatpush1.msra.mxu0 0.0
  %86 = vmatprep.subr.mxu0 0.0
  %87 = vmatpush1.msra.mxu0 0.0
  %88 = vmatprep.subr.mxu0 0.0
  %89 = vmatpush1.msra.mxu0 0.0
  %90 = vmatprep.subr.mxu0 0.0
  %91 = vmatpush1.msra.mxu0 0.0
  %92 = vmatprep.subr.mxu0 0.0
  %93 = vmatpush1.msra.mxu0 0.0
  %94 = vmatprep.subr.mxu0 0.0
  %95 = vmatpush1.msra.mxu0 0.0
  %96 = vmatprep.subr.mxu0 0.0
  %97 = vmatpush1.msra.mxu0 0.0
  %98 = vmatprep.subr.mxu0 0.0
  %99 = vmatpush1.msra.mxu0 0.0
  %100 = vmatprep.subr.mxu0 0.0
  %101 = vmatpush1.msra.mxu0 0.0
  %102 = vmatprep.subr.mxu0 0.0
  %103 = vmatpush1.msra.mxu0 0.0
  %104 = vmatprep.subr.mxu0 0.0
  %105 = vmatpush1.msra.mxu0 0.0
  %106 = vmatprep.subr.mxu0 0.0
  %107 = vmatpush1.msra.mxu0 0.0
  %108 = vmatprep.subr.mxu0 0.0
  %109 = vmatpush1.msra.mxu0 0.0
  %110 = vmatprep.subr.mxu0 0.0
  %111 = vmatpush1.msra.mxu0 0.0
  %112 = vmatprep.subr.mxu0 0.0
  %113 = vmatpush1.msra.mxu0 0.0
  %114 = vmatprep.subr.mxu0 0.0
  %115 = vmatpush1.msra.mxu0 0.0
  %116 = vmatprep.subr.mxu0 0.0
  %117 = vmatpush1.msra.mxu0 0.0
  %118 = vmatprep.subr.mxu0 0.0
  %119 = vmatpush1.msra.mxu0 0.0
  %120 = vmatprep.subr.mxu0 0.0
  %121 = vmatpush1.msra.mxu0 0.0
  %122 = vmatprep.subr.mxu0 0.0
  %123 = vmatpush1.msra.mxu0 0.0
  %124 = vmatprep.subr.mxu0 0.0
  %125 = vmatpush1.msra.mxu0 0.0
  %126 = vmatprep.subr.mxu0 0.0
  %127 = vmatpush1.msra.mxu0 0.0
  %128 = vmatprep.subr.mxu0 0.0
  %129 = vmatpush1.msra.mxu0 0.0
  %130 = vmatprep.mubr.f32.mxu0 0.0
  %131 = vmatmul.mubr.f32.gmra.mrb[0].mxu0 %v64
  %v132 = vpop.f32.mrb[0].mxu0
  %v133 = vadd.f32 %v60, %v132
  %v134 = vpop.f32.mrb[0].mxu0
  %135 = vdwg.mxu0
  %vm136 = vcmask 523264
  %137 = vst.msk [vmem:[#allocation2] sm:$0xff] %vm136, %v133
  %v138 = vld [vmem:[%s3] sm:$0xff]
  %v139 = vld [vmem:[%s3 + $0x8] sm:$0xff]
  %v140 = vld [vmem:[%s3 + $0x10] sm:$0xff]
  %v141 = vld [vmem:[%s3 + $0x18] sm:$0xff]
  %v142 = vld [vmem:[%s3 + $0x20] sm:$0xff]
  %v143 = vld [vmem:[%s3 + $0x28] sm:$0xff]
  %v144 = vld [vmem:[%s3 + $0x30] sm:$0xff]
  %v145 = vld [vmem:[%s3 + $0x38] sm:$0xff]
  %v146 = vld [vmem:[#allocation2] sm:$0x1]
  %v148 = vsel %vm136, 0.0, 0
  %150 = vmatprep.subr.mxu0 0.0
  %151 = vmatpush1.msra.mxu0 %v138
  %152 = vmatprep.subr.mxu0 0.0
  %153 = vmatpush1.msra.mxu0 %v139
  %154 = vmatprep.subr.mxu0 0.0
  %155 = vmatpush1.msra.mxu0 %v140
  %156 = vmatprep.subr.mxu0 0.0
  %157 = vmatpush1.msra.mxu0 %v141
  %158 = vmatprep.subr.mxu0 0.0
  %159 = vmatpush1.msra.mxu0 %v142
  %160 = vmatprep.subr.mxu0 0.0
  %161 = vmatpush1.msra.mxu0 %v143
  %162 = vmatprep.subr.mxu0 0.0
  %163 = vmatpush1.msra.mxu0 %v144
  %164 = vmatprep.subr.mxu0 0.0
  %165 = vmatpush1.msra.mxu0 %v145
  %166 = vmatprep.subr.mxu0 0.0
  %167 = vmatpush1.msra.mxu0 0.0
  %168 = vmatprep.subr.mxu0 0.0
  %169 = vmatpush1.msra.mxu0 0.0
  %170 = vmatprep.subr.mxu0 0.0
  %171 = vmatpush1.msra.mxu0 0.0
  %172 = vmatprep.subr.mxu0 0.0
  %173 = vmatpush1.msra.mxu0 0.0
  %174 = vmatprep.subr.mxu0 0.0
  %175 = vmatpush1.msra.mxu0 0.0
  %176 = vmatprep.subr.mxu0 0.0
  %177 = vmatpush1.msra.mxu0 0.0
  %178 = vmatprep.subr.mxu0 0.0
  %179 = vmatpush1.msra.mxu0 0.0
  %180 = vmatprep.subr.mxu0 0.0
  %181 = vmatpush1.msra.mxu0 0.0
  %182 = vmatprep.subr.mxu0 0.0
  %183 = vmatpush1.msra.mxu0 0.0
  %184 = vmatprep.subr.mxu0 0.0
  %185 = vmatpush1.msra.mxu0 0.0
  %186 = vmatprep.subr.mxu0 0.0
  %187 = vmatpush1.msra.mxu0 0.0
  %188 = vmatprep.subr.mxu0 0.0
  %189 = vmatpush1.msra.mxu0 0.0
  %190 = vmatprep.subr.mxu0 0.0
  %191 = vmatpush1.msra.mxu0 0.0
  %192 = vmatprep.subr.mxu0 0.0
  %193 = vmatpush1.msra.mxu0 0.0
  %194 = vmatprep.subr.mxu0 0.0
  %195 = vmatpush1.msra.mxu0 0.0
  %196 = vmatprep.subr.mxu0 0.0
  %197 = vmatpush1.msra.mxu0 0.0
  %198 = vmatprep.subr.mxu0 0.0
  %199 = vmatpush1.msra.mxu0 0.0
  %200 = vmatprep.subr.mxu0 0.0
  %201 = vmatpush1.msra.mxu0 0.0
  %202 = vmatprep.subr.mxu0 0.0
  %203 = vmatpush1.msra.mxu0 0.0
  %204 = vmatprep.subr.mxu0 0.0
  %205 = vmatpush1.msra.mxu0 0.0
  %206 = vmatprep.subr.mxu0 0.0
  %207 = vmatpush1.msra.mxu0 0.0
  %208 = vmatprep.subr.mxu0 0.0
  %209 = vmatpush1.msra.mxu0 0.0
  %210 = vmatprep.subr.mxu0 0.0
  %211 = vmatpush1.msra.mxu0 0.0
  %212 = vmatprep.subr.mxu0 0.0
  %213 = vmatpush1.msra.mxu0 0.0
  %214 = vmatprep.mubr.f32.mxu0 0.0
  %215 = vmatmul.mubr.f32.gmra.mrb[0].mxu0 %v148
  %v216 = vpop.f32.mrb[0].mxu0
  %v217 = vadd.f32 0.0, %v216
  %v218 = vpop.f32.mrb[0].mxu0
  %219 = vdwg.mxu0
  %v220 = vadd.f32 %v146, %v217
  %v221 = vmax.f32 %v220, 0.0
  %v222 = vtanh.pop %v220
  %v223 = vsel %vm49, %v221, %v222
  %vm224 = vcmask 516096
  %225 = vst.msk [vmem:[#allocation3] sm:$0x1] %vm224, %v223
  %v226 = vld [vmem:[#allocation2 + $0x1] sm:$0x1]
  %v228 = vsel %vm136, %v223, 0
  %230 = vmatprep.subr.mxu0 0.0
  %231 = vmatpush1.msra.mxu0 %v138
  %232 = vmatprep.subr.mxu0 0.0
  %233 = vmatpush1.msra.mxu0 %v139
  %234 = vmatprep.subr.mxu0 0.0
  %235 = vmatpush1.msra.mxu0 %v140
  %236 = vmatprep.subr.mxu0 0.0
  %237 = vmatpush1.msra.mxu0 %v141
  %238 = vmatprep.subr.mxu0 0.0
  %239 = vmatpush1.msra.mxu0 %v142
  %240 = vmatprep.subr.mxu0 0.0
  %241 = vmatpush1.msra.mxu0 %v143
  %242 = vmatprep.subr.mxu0 0.0
  %243 = vmatpush1.msra.mxu0 %v144
  %244 = vmatprep.subr.mxu0 0.0
  %245 = vmatpush1.msra.mxu0 %v145
  %246 = vmatprep.subr.mxu0 0.0
  %247 = vmatpush1.msra.mxu0 0.0
  %248 = vmatprep.subr.mxu0 0.0
  %249 = vmatpush1.msra.mxu0 0.0
  %250 = vmatprep.subr.mxu0 0.0
  %251 = vmatpush1.msra.mxu0 0.0
  %252 = vmatprep.subr.mxu0 0.0
  %253 = vmatpush1.msra.mxu0 0.0
  %254 = vmatprep.subr.mxu0 0.0
  %255 = vmatpush1.msra.mxu0 0.0
  %256 = vmatprep.subr.mxu0 0.0
  %257 = vmatpush1.msra.mxu0 0.0
  %258 = vmatprep.subr.mxu0 0.0
  %259 = vmatpush1.msra.mxu0 0.0
  %260 = vmatprep.subr.mxu0 0.0
  %261 = vmatpush1.msra.mxu0 0.0
  %262 = vmatprep.subr.mxu0 0.0
  %263 = vmatpush1.msra.mxu0 0.0
  %264 = vmatprep.subr.mxu0 0.0
  %265 = vmatpush1.msra.mxu0 0.0
  %266 = vmatprep.subr.mxu0 0.0
  %267 = vmatpush1.msra.mxu0 0.0
  %268 = vmatprep.subr.mxu0 0.0
  %269 = vmatpush1.msra.mxu0 0.0
  %270 = vmatprep.subr.mxu0 0.0
  %271 = vmatpush1.msra.mxu0 0.0
  %272 = vmatprep.subr.mxu0 0.0
  %273 = vmatpush1.msra.mxu0 0.0
  %274 = vmatprep.subr.mxu0 0.0
  %275 = vmatpush1.msra.mxu0 0.0
  %276 = vmatprep.subr.mxu0 0.0
  %277 = vmatpush1.msra.mxu0 0.0
  %278 = vmatprep.subr.mxu0 0.0
  %279 = vmatpush1.msra.mxu0 0.0
  %280 = vmatprep.subr.mxu0 0.0
  %281 = vmatpush1.msra.mxu0 0.0
  %282 = vmatprep.subr.mxu0 0.0
  %283 = vmatpush1.msra.mxu0 0.0
  %284 = vmatprep.subr.mxu0 0.0
  %285 = vmatpush1.msra.mxu0 0.0
  %286 = vmatprep.subr.mxu0 0.0
  %287 = vmatpush1.msra.mxu0 0.0
  %288 = vmatprep.subr.mxu0 0.0
  %289 = vmatpush1.msra.mxu0 0.0
  %290 = vmatprep.subr.mxu0 0.0
  %291 = vmatpush1.msra.mxu0 0.0
  %292 = vmatprep.subr.mxu0 0.0
  %293 = vmatpush1.msra.mxu0 0.0
  %294 = vmatprep.mubr.f32.mxu0 0.0
  %295 = vmatmul.mubr.f32.gmra.mrb[0].mxu0 %v228
  %v296 = vpop.f32.mrb[0].mxu0
  %v297 = vadd.f32 0.0, %v296
  %v298 = vpop.f32.mrb[0].mxu0
  %299 = vdwg.mxu0
  %v300 = vadd.f32 %v226, %v297
  %v301 = vmax.f32 %v300, 0.0
  %v302 = vtanh.pop %v300
  %v303 = vsel %vm49, %v301, %v302
  %304 = vst.msk [vmem:[#allocation3 + $0x1] sm:$0x1] %vm224, %v303
  %v305 = vld [vmem:[#allocation2 + $0x2] sm:$0x1]
  %v307 = vsel %vm136, %v303, 0
  %309 = vmatprep.subr.mxu0 0.0
  %310 = vmatpush1.msra.mxu0 %v138
  %311 = vmatprep.subr.mxu0 0.0
  %312 = vmatpush1.msra.mxu0 %v139
  %313 = vmatprep.subr.mxu0 0.0
  %314 = vmatpush1.msra.mxu0 %v140
  %315 = vmatprep.subr.mxu0 0.0
  %316 = vmatpush1.msra.mxu0 %v141
  %317 = vmatprep.subr.mxu0 0.0
  %318 = vmatpush1.msra.mxu0 %v142
  %319 = vmatprep.subr.mxu0 0.0
  %320 = vmatpush1.msra.mxu0 %v143
  %321 = vmatprep.subr.mxu0 0.0
  %322 = vmatpush1.msra.mxu0 %v144
  %323 = vmatprep.subr.mxu0 0.0
  %324 = vmatpush1.msra.mxu0 %v145
  %325 = vmatprep.subr.mxu0 0.0
  %326 = vmatpush1.msra.mxu0 0.0
  %327 = vmatprep.subr.mxu0 0.0
  %328 = vmatpush1.msra.mxu0 0.0
  %329 = vmatprep.subr.mxu0 0.0
  %330 = vmatpush1.msra.mxu0 0.0
  %331 = vmatprep.subr.mxu0 0.0
  %332 = vmatpush1.msra.mxu0 0.0
  %333 = vmatprep.subr.mxu0 0.0
  %334 = vmatpush1.msra.mxu0 0.0
  %335 = vmatprep.subr.mxu0 0.0
  %336 = vmatpush1.msra.mxu0 0.0
  %337 = vmatprep.subr.mxu0 0.0
  %338 = vmatpush1.msra.mxu0 0.0
  %339 = vmatprep.subr.mxu0 0.0
  %340 = vmatpush1.msra.mxu0 0.0
  %341 = vmatprep.subr.mxu0 0.0
  %342 = vmatpush1.msra.mxu0 0.0
  %343 = vmatprep.subr.mxu0 0.0
  %344 = vmatpush1.msra.mxu0 0.0
  %345 = vmatprep.subr.mxu0 0.0
  %346 = vmatpush1.msra.mxu0 0.0
  %347 = vmatprep.subr.mxu0 0.0
  %348 = vmatpush1.msra.mxu0 0.0
  %349 = vmatprep.subr.mxu0 0.0
  %350 = vmatpush1.msra.mxu0 0.0
  %351 = vmatprep.subr.mxu0 0.0
  %352 = vmatpush1.msra.mxu0 0.0
  %353 = vmatprep.subr.mxu0 0.0
  %354 = vmatpush1.msra.mxu0 0.0
  %355 = vmatprep.subr.mxu0 0.0
  %356 = vmatpush1.msra.mxu0 0.0
  %357 = vmatprep.subr.mxu0 0.0
  %358 = vmatpush1.msra.mxu0 0.0
  %359 = vmatprep.subr.mxu0 0.0
  %360 = vmatpush1.msra.mxu0 0.0
  %361 = vmatprep.subr.mxu0 0.0
  %362 = vmatpush1.msra.mxu0 0.0
  %363 = vmatprep.subr.mxu0 0.0
  %364 = vmatpush1.msra.mxu0 0.0
  %365 = vmatprep.subr.mxu0 0.0
  %366 = vmatpush1.msra.mxu0 0.0
  %367 = vmatprep.subr.mxu0 0.0
  %368 = vmatpush1.msra.mxu0 0.0
  %369 = vmatprep.subr.mxu0 0.0
  %370 = vmatpush1.msra.mxu0 0.0
  %371 = vmatprep.subr.mxu0 0.0
  %372 = vmatpush1.msra.mxu0 0.0
  %373 = vmatprep.mubr.f32.mxu0 0.0
  %374 = vmatmul.mubr.f32.gmra.mrb[0].mxu0 %v307
  %v375 = vpop.f32.mrb[0].mxu0
  %v376 = vadd.f32 0.0, %v375
  %v377 = vpop.f32.mrb[0].mxu0
  %378 = vdwg.mxu0
  %v379 = vadd.f32 %v305, %v376
  %v380 = vmax.f32 %v379, 0.0
  %v381 = vtanh.pop %v379
  %v382 = vsel %vm49, %v380, %v381
  %383 = vst.msk [vmem:[#allocation3 + $0x2] sm:$0x1] %vm224, %v382
  %v384 = vld [vmem:[#allocation2 + $0x3] sm:$0x1]
  %v386 = vsel %vm136, %v382, 0
  %388 = vmatprep.subr.mxu0 0.0
  %389 = vmatpush1.msra.mxu0 %v138
  %390 = vmatprep.subr.mxu0 0.0
  %391 = vmatpush1.msra.mxu0 %v139
  %392 = vmatprep.subr.mxu0 0.0
  %393 = vmatpush1.msra.mxu0 %v140
  %394 = vmatprep.subr.mxu0 0.0
  %395 = vmatpush1.msra.mxu0 %v141
  %396 = vmatprep.subr.mxu0 0.0
  %397 = vmatpush1.msra.mxu0 %v142
  %398 = vmatprep.subr.mxu0 0.0
  %399 = vmatpush1.msra.mxu0 %v143
  %400 = vmatprep.subr.mxu0 0.0
  %401 = vmatpush1.msra.mxu0 %v144
  %402 = vmatprep.subr.mxu0 0.0
  %403 = vmatpush1.msra.mxu0 %v145
  %404 = vmatprep.subr.mxu0 0.0
  %405 = vmatpush1.msra.mxu0 0.0
  %406 = vmatprep.subr.mxu0 0.0
  %407 = vmatpush1.msra.mxu0 0.0
  %408 = vmatprep.subr.mxu0 0.0
  %409 = vmatpush1.msra.mxu0 0.0
  %410 = vmatprep.subr.mxu0 0.0
  %411 = vmatpush1.msra.mxu0 0.0
  %412 = vmatprep.subr.mxu0 0.0
  %413 = vmatpush1.msra.mxu0 0.0
  %414 = vmatprep.subr.mxu0 0.0
  %415 = vmatpush1.msra.mxu0 0.0
  %416 = vmatprep.subr.mxu0 0.0
  %417 = vmatpush1.msra.mxu0 0.0
  %418 = vmatprep.subr.mxu0 0.0
  %419 = vmatpush1.msra.mxu0 0.0
  %420 = vmatprep.subr.mxu0 0.0
  %421 = vmatpush1.msra.mxu0 0.0
  %422 = vmatprep.subr.mxu0 0.0
  %423 = vmatpush1.msra.mxu0 0.0
  %424 = vmatprep.subr.mxu0 0.0
  %425 = vmatpush1.msra.mxu0 0.0
  %426 = vmatprep.subr.mxu0 0.0
  %427 = vmatpush1.msra.mxu0 0.0
  %428 = vmatprep.subr.mxu0 0.0
  %429 = vmatpush1.msra.mxu0 0.0
  %430 = vmatprep.subr.mxu0 0.0
  %431 = vmatpush1.msra.mxu0 0.0
  %432 = vmatprep.subr.mxu0 0.0
  %433 = vmatpush1.msra.mxu0 0.0
  %434 = vmatprep.subr.mxu0 0.0
  %435 = vmatpush1.msra.mxu0 0.0
  %436 = vmatprep.subr.mxu0 0.0
  %437 = vmatpush1.msra.mxu0 0.0
  %438 = vmatprep.subr.mxu0 0.0
  %439 = vmatpush1.msra.mxu0 0.0
  %440 = vmatprep.subr.mxu0 0.0
  %441 = vmatpush1.msra.mxu0 0.0
  %442 = vmatprep.subr.mxu0 0.0
  %443 = vmatpush1.msra.mxu0 0.0
  %444 = vmatprep.subr.mxu0 0.0
  %445 = vmatpush1.msra.mxu0 0.0
  %446 = vmatprep.subr.mxu0 0.0
  %447 = vmatpush1.msra.mxu0 0.0
  %448 = vmatprep.subr.mxu0 0.0
  %449 = vmatpush1.msra.mxu0 0.0
  %450 = vmatprep.subr.mxu0 0.0
  %451 = vmatpush1.msra.mxu0 0.0
  %452 = vmatprep.mubr.f32.mxu0 0.0
  %453 = vmatmul.mubr.f32.gmra.mrb[0].mxu0 %v386
  %v454 = vpop.f32.mrb[0].mxu0
  %v455 = vadd.f32 0.0, %v454
  %v456 = vpop.f32.mrb[0].mxu0
  %457 = vdwg.mxu0
  %v458 = vadd.f32 %v384, %v455
  %v459 = vmax.f32 %v458, 0.0
  %v460 = vtanh.pop %v458
  %v461 = vsel %vm49, %v459, %v460
  %462 = vst.msk [vmem:[#allocation3 + $0x3] sm:$0x1] %vm224, %v461
  %v463 = vld [vmem:[#allocation2 + $0x4] sm:$0x1]
  %v465 = vsel %vm136, %v461, 0
  %467 = vmatprep.subr.mxu0 0.0
  %468 = vmatpush1.msra.mxu0 %v138
  %469 = vmatprep.subr.mxu0 0.0
  %470 = vmatpush1.msra.mxu0 %v139
  %471 = vmatprep.subr.mxu0 0.0
  %472 = vmatpush1.msra.mxu0 %v140
  %473 = vmatprep.subr.mxu0 0.0
  %474 = vmatpush1.msra.mxu0 %v141
  %475 = vmatprep.subr.mxu0 0.0
  %476 = vmatpush1.msra.mxu0 %v142
  %477 = vmatprep.subr.mxu0 0.0
  %478 = vmatpush1.msra.mxu0 %v143
  %479 = vmatprep.subr.mxu0 0.0
  %480 = vmatpush1.msra.mxu0 %v144
  %481 = vmatprep.subr.mxu0 0.0
  %482 = vmatpush1.msra.mxu0 %v145
  %483 = vmatprep.subr.mxu0 0.0
  %484 = vmatpush1.msra.mxu0 0.0
  %485 = vmatprep.subr.mxu0 0.0
  %486 = vmatpush1.msra.mxu0 0.0
  %487 = vmatprep.subr.mxu0 0.0
  %488 = vmatpush1.msra.mxu0 0.0
  %489 = vmatprep.subr.mxu0 0.0
  %490 = vmatpush1.msra.mxu0 0.0
  %491 = vmatprep.subr.mxu0 0.0
  %492 = vmatpush1.msra.mxu0 0.0
  %493 = vmatprep.subr.mxu0 0.0
  %494 = vmatpush1.msra.mxu0 0.0
  %495 = vmatprep.subr.mxu0 0.0
  %496 = vmatpush1.msra.mxu0 0.0
  %497 = vmatprep.subr.mxu0 0.0
  %498 = vmatpush1.msra.mxu0 0.0
  %499 = vmatprep.subr.mxu0 0.0
  %500 = vmatpush1.msra.mxu0 0.0
  %501 = vmatprep.subr.mxu0 0.0
  %502 = vmatpush1.msra.mxu0 0.0
  %503 = vmatprep.subr.mxu0 0.0
  %504 = vmatpush1.msra.mxu0 0.0
  %505 = vmatprep.subr.mxu0 0.0
  %506 = vmatpush1.msra.mxu0 0.0
  %507 = vmatprep.subr.mxu0 0.0
  %508 = vmatpush1.msra.mxu0 0.0
  %509 = vmatprep.subr.mxu0 0.0
  %510 = vmatpush1.msra.mxu0 0.0
  %511 = vmatprep.subr.mxu0 0.0
  %512 = vmatpush1.msra.mxu0 0.0
  %513 = vmatprep.subr.mxu0 0.0
  %514 = vmatpush1.msra.mxu0 0.0
  %515 = vmatprep.subr.mxu0 0.0
  %516 = vmatpush1.msra.mxu0 0.0
  %517 = vmatprep.subr.mxu0 0.0
  %518 = vmatpush1.msra.mxu0 0.0
  %519 = vmatprep.subr.mxu0 0.0
  %520 = vmatpush1.msra.mxu0 0.0
  %521 = vmatprep.subr.mxu0 0.0
  %522 = vmatpush1.msra.mxu0 0.0
  %523 = vmatprep.subr.mxu0 0.0
  %524 = vmatpush1.msra.mxu0 0.0
  %525 = vmatprep.subr.mxu0 0.0
  %526 = vmatpush1.msra.mxu0 0.0
  %527 = vmatprep.subr.mxu0 0.0
  %528 = vmatpush1.msra.mxu0 0.0
  %529 = vmatprep.subr.mxu0 0.0
  %530 = vmatpush1.msra.mxu0 0.0
  %531 = vmatprep.mubr.f32.mxu0 0.0
  %532 = vmatmul.mubr.f32.gmra.mrb[0].mxu0 %v465
  %v533 = vpop.f32.mrb[0].mxu0
  %v534 = vadd.f32 0.0, %v533
  %v535 = vpop.f32.mrb[0].mxu0
  %536 = vdwg.mxu0
  %v537 = vadd.f32 %v463, %v534
  %v538 = vmax.f32 %v537, 0.0
  %v539 = vtanh.pop %v537
  %v540 = vsel %vm49, %v538, %v539
  %541 = vst.msk [vmem:[#allocation3 + $0x4] sm:$0x1] %vm224, %v540
  %v542 = vld [vmem:[#allocation2 + $0x5] sm:$0x1]
  %v544 = vsel %vm136, %v540, 0
  %546 = vmatprep.subr.mxu0 0.0
  %547 = vmatpush1.msra.mxu0 %v138
  %548 = vmatprep.subr.mxu0 0.0
  %549 = vmatpush1.msra.mxu0 %v139
  %550 = vmatprep.subr.mxu0 0.0
  %551 = vmatpush1.msra.mxu0 %v140
  %552 = vmatprep.subr.mxu0 0.0
  %553 = vmatpush1.msra.mxu0 %v141
  %554 = vmatprep.subr.mxu0 0.0
  %555 = vmatpush1.msra.mxu0 %v142
  %556 = vmatprep.subr.mxu0 0.0
  %557 = vmatpush1.msra.mxu0 %v143
  %558 = vmatprep.subr.mxu0 0.0
  %559 = vmatpush1.msra.mxu0 %v144
  %560 = vmatprep.subr.mxu0 0.0
  %561 = vmatpush1.msra.mxu0 %v145
  %562 = vmatprep.subr.mxu0 0.0
  %563 = vmatpush1.msra.mxu0 0.0
  %564 = vmatprep.subr.mxu0 0.0
  %565 = vmatpush1.msra.mxu0 0.0
  %566 = vmatprep.subr.mxu0 0.0
  %567 = vmatpush1.msra.mxu0 0.0
  %568 = vmatprep.subr.mxu0 0.0
  %569 = vmatpush1.msra.mxu0 0.0
  %570 = vmatprep.subr.mxu0 0.0
  %571 = vmatpush1.msra.mxu0 0.0
  %572 = vmatprep.subr.mxu0 0.0
  %573 = vmatpush1.msra.mxu0 0.0
  %574 = vmatprep.subr.mxu0 0.0
  %575 = vmatpush1.msra.mxu0 0.0
  %576 = vmatprep.subr.mxu0 0.0
  %577 = vmatpush1.msra.mxu0 0.0
  %578 = vmatprep.subr.mxu0 0.0
  %579 = vmatpush1.msra.mxu0 0.0
  %580 = vmatprep.subr.mxu0 0.0
  %581 = vmatpush1.msra.mxu0 0.0
  %582 = vmatprep.subr.mxu0 0.0
  %583 = vmatpush1.msra.mxu0 0.0
  %584 = vmatprep.subr.mxu0 0.0
  %585 = vmatpush1.msra.mxu0 0.0
  %586 = vmatprep.subr.mxu0 0.0
  %587 = vmatpush1.msra.mxu0 0.0
  %588 = vmatprep.subr.mxu0 0.0
  %589 = vmatpush1.msra.mxu0 0.0
  %590 = vmatprep.subr.mxu0 0.0
  %591 = vmatpush1.msra.mxu0 0.0
  %592 = vmatprep.subr.mxu0 0.0
  %593 = vmatpush1.msra.mxu0 0.0
  %594 = vmatprep.subr.mxu0 0.0
  %595 = vmatpush1.msra.mxu0 0.0
  %596 = vmatprep.subr.mxu0 0.0
  %597 = vmatpush1.msra.mxu0 0.0
  %598 = vmatprep.subr.mxu0 0.0
  %599 = vmatpush1.msra.mxu0 0.0
  %600 = vmatprep.subr.mxu0 0.0
  %601 = vmatpush1.msra.mxu0 0.0
  %602 = vmatprep.subr.mxu0 0.0
  %603 = vmatpush1.msra.mxu0 0.0
  %604 = vmatprep.subr.mxu0 0.0
  %605 = vmatpush1.msra.mxu0 0.0
  %606 = vmatprep.subr.mxu0 0.0
  %607 = vmatpush1.msra.mxu0 0.0
  %608 = vmatprep.subr.mxu0 0.0
  %609 = vmatpush1.msra.mxu0 0.0
  %610 = vmatprep.mubr.f32.mxu0 0.0
  %611 = vmatmul.mubr.f32.gmra.mrb[0].mxu0 %v544
  %v612 = vpop.f32.mrb[0].mxu0
  %v613 = vadd.f32 0.0, %v612
  %v614 = vpop.f32.mrb[0].mxu0
  %615 = vdwg.mxu0
  %v616 = vadd.f32 %v542, %v613
  %v617 = vmax.f32 %v616, 0.0
  %v618 = vtanh.pop %v616
  %v619 = vsel %vm49, %v617, %v618
  %620 = vst.msk [vmem:[#allocation3 + $0x5] sm:$0x1] %vm224, %v619
  %v621 = vld [vmem:[#allocation2 + $0x6] sm:$0x1]
  %v623 = vsel %vm136, %v619, 0
  %625 = vmatprep.subr.mxu0 0.0
  %626 = vmatpush1.msra.mxu0 %v138
  %627 = vmatprep.subr.mxu0 0.0
  %628 = vmatpush1.msra.mxu0 %v139
  %629 = vmatprep.subr.mxu0 0.0
  %630 = vmatpush1.msra.mxu0 %v140
  %631 = vmatprep.subr.mxu0 0.0
  %632 = vmatpush1.msra.mxu0 %v141
  %633 = vmatprep.subr.mxu0 0.0
  %634 = vmatpush1.msra.mxu0 %v142
  %635 = vmatprep.subr.mxu0 0.0
  %636 = vmatpush1.msra.mxu0 %v143
  %637 = vmatprep.subr.mxu0 0.0
  %638 = vmatpush1.msra.mxu0 %v144
  %639 = vmatprep.subr.mxu0 0.0
  %640 = vmatpush1.msra.mxu0 %v145
  %641 = vmatprep.subr.mxu0 0.0
  %642 = vmatpush1.msra.mxu0 0.0
  %643 = vmatprep.subr.mxu0 0.0
  %644 = vmatpush1.msra.mxu0 0.0
  %645 = vmatprep.subr.mxu0 0.0
  %646 = vmatpush1.msra.mxu0 0.0
  %647 = vmatprep.subr.mxu0 0.0
  %648 = vmatpush1.msra.mxu0 0.0
  %649 = vmatprep.subr.mxu0 0.0
  %650 = vmatpush1.msra.mxu0 0.0
  %651 = vmatprep.subr.mxu0 0.0
  %652 = vmatpush1.msra.mxu0 0.0
  %653 = vmatprep.subr.mxu0 0.0
  %654 = vmatpush1.msra.mxu0 0.0
  %655 = vmatprep.subr.mxu0 0.0
  %656 = vmatpush1.msra.mxu0 0.0
  %657 = vmatprep.subr.mxu0 0.0
  %658 = vmatpush1.msra.mxu0 0.0
  %659 = vmatprep.subr.mxu0 0.0
  %660 = vmatpush1.msra.mxu0 0.0
  %661 = vmatprep.subr.mxu0 0.0
  %662 = vmatpush1.msra.mxu0 0.0
  %663 = vmatprep.subr.mxu0 0.0
  %664 = vmatpush1.msra.mxu0 0.0
  %665 = vmatprep.subr.mxu0 0.0
  %666 = vmatpush1.msra.mxu0 0.0
  %667 = vmatprep.subr.mxu0 0.0
  %668 = vmatpush1.msra.mxu0 0.0
  %669 = vmatprep.subr.mxu0 0.0
  %670 = vmatpush1.msra.mxu0 0.0
  %671 = vmatprep.subr.mxu0 0.0
  %672 = vmatpush1.msra.mxu0 0.0
  %673 = vmatprep.subr.mxu0 0.0
  %674 = vmatpush1.msra.mxu0 0.0
  %675 = vmatprep.subr.mxu0 0.0
  %676 = vmatpush1.msra.mxu0 0.0
  %677 = vmatprep.subr.mxu0 0.0
  %678 = vmatpush1.msra.mxu0 0.0
  %679 = vmatprep.subr.mxu0 0.0
  %680 = vmatpush1.msra.mxu0 0.0
  %681 = vmatprep.subr.mxu0 0.0
  %682 = vmatpush1.msra.mxu0 0.0
  %683 = vmatprep.subr.mxu0 0.0
  %684 = vmatpush1.msra.mxu0 0.0
  %685 = vmatprep.subr.mxu0 0.0
  %686 = vmatpush1.msra.mxu0 0.0
  %687 = vmatprep.subr.mxu0 0.0
  %688 = vmatpush1.msra.mxu0 0.0
  %689 = vmatprep.mubr.f32.mxu0 0.0
  %690 = vmatmul.mubr.f32.gmra.mrb[0].mxu0 %v623
  %v691 = vpop.f32.mrb[0].mxu0
  %v692 = vadd.f32 0.0, %v691
  %v693 = vpop.f32.mrb[0].mxu0
  %694 = vdwg.mxu0
  %v695 = vadd.f32 %v621, %v692
  %v696 = vmax.f32 %v695, 0.0
  %v697 = vtanh.pop %v695
  %v698 = vsel %vm49, %v696, %v697
  %699 = vst.msk [vmem:[#allocation3 + $0x6] sm:$0x1] %vm224, %v698
  %v700 = vld [vmem:[#allocation2 + $0x7] sm:$0x1]
  %v702 = vsel %vm136, %v698, 0
  %704 = vmatprep.subr.mxu0 0.0
  %705 = vmatpush1.msra.mxu0 %v138
  %706 = vmatprep.subr.mxu0 0.0
  %707 = vmatpush1.msra.mxu0 %v139
  %708 = vmatprep.subr.mxu0 0.0
  %709 = vmatpush1.msra.mxu0 %v140
  %710 = vmatprep.subr.mxu0 0.0
  %711 = vmatpush1.msra.mxu0 %v141
  %712 = vmatprep.subr.mxu0 0.0
  %713 = vmatpush1.msra.mxu0 %v142
  %714 = vmatprep.subr.mxu0 0.0
  %715 = vmatpush1.msra.mxu0 %v143
  %716 = vmatprep.subr.mxu0 0.0
  %717 = vmatpush1.msra.mxu0 %v144
  %718 = vmatprep.subr.mxu0 0.0
  %719 = vmatpush1.msra.mxu0 %v145
  %720 = vmatprep.subr.mxu0 0.0
  %721 = vmatpush1.msra.mxu0 0.0
  %722 = vmatprep.subr.mxu0 0.0
  %723 = vmatpush1.msra.mxu0 0.0
  %724 = vmatprep.subr.mxu0 0.0
  %725 = vmatpush1.msra.mxu0 0.0
  %726 = vmatprep.subr.mxu0 0.0
  %727 = vmatpush1.msra.mxu0 0.0
  %728 = vmatprep.subr.mxu0 0.0
  %729 = vmatpush1.msra.mxu0 0.0
  %730 = vmatprep.subr.mxu0 0.0
  %731 = vmatpush1.msra.mxu0 0.0
  %732 = vmatprep.subr.mxu0 0.0
  %733 = vmatpush1.msra.mxu0 0.0
  %734 = vmatprep.subr.mxu0 0.0
  %735 = vmatpush1.msra.mxu0 0.0
  %736 = vmatprep.subr.mxu0 0.0
  %737 = vmatpush1.msra.mxu0 0.0
  %738 = vmatprep.subr.mxu0 0.0
  %739 = vmatpush1.msra.mxu0 0.0
  %740 = vmatprep.subr.mxu0 0.0
  %741 = vmatpush1.msra.mxu0 0.0
  %742 = vmatprep.subr.mxu0 0.0
  %743 = vmatpush1.msra.mxu0 0.0
  %744 = vmatprep.subr.mxu0 0.0
  %745 = vmatpush1.msra.mxu0 0.0
  %746 = vmatprep.subr.mxu0 0.0
  %747 = vmatpush1.msra.mxu0 0.0
  %748 = vmatprep.subr.mxu0 0.0
  %749 = vmatpush1.msra.mxu0 0.0
  %750 = vmatprep.subr.mxu0 0.0
  %751 = vmatpush1.msra.mxu0 0.0
  %752 = vmatprep.subr.mxu0 0.0
  %753 = vmatpush1.msra.mxu0 0.0
  %754 = vmatprep.subr.mxu0 0.0
  %755 = vmatpush1.msra.mxu0 0.0
  %756 = vmatprep.subr.mxu0 0.0
  %757 = vmatpush1.msra.mxu0 0.0
  %758 = vmatprep.subr.mxu0 0.0
  %759 = vmatpush1.msra.mxu0 0.0
  %760 = vmatprep.subr.mxu0 0.0
  %761 = vmatpush1.msra.mxu0 0.0
  %762 = vmatprep.subr.mxu0 0.0
  %763 = vmatpush1.msra.mxu0 0.0
  %764 = vmatprep.subr.mxu0 0.0
  %765 = vmatpush1.msra.mxu0 0.0
  %766 = vmatprep.subr.mxu0 0.0
  %767 = vmatpush1.msra.mxu0 0.0
  %768 = vmatprep.mubr.f32.mxu0 0.0
  %769 = vmatmul.mubr.f32.gmra.mrb[0].mxu0 %v702
  %v770 = vpop.f32.mrb[0].mxu0
  %v771 = vadd.f32 0.0, %v770
  %v772 = vpop.f32.mrb[0].mxu0
  %773 = vdwg.mxu0
  %v774 = vadd.f32 %v700, %v771
  %v775 = vmax.f32 %v774, 0.0
  %v776 = vtanh.pop %v774
  %v777 = vsel %vm49, %v775, %v776
  %778 = vst.msk [vmem:[#allocation3 + $0x7] sm:$0x1] %vm224, %v777
  %v779 = vld [vmem:[#allocation3] sm:$0xff]
  %v780 = vld [vmem:[%s2] sm:$0xff]
  %v781 = vld [vmem:[%s2 + $0x8] sm:$0xff]
  %v782 = vld [vmem:[%s2 + $0x10] sm:$0xff]
  %v783 = vld [vmem:[%s2 + $0x18] sm:$0xff]
  %v784 = vld [vmem:[%s2 + $0x20] sm:$0xff]
  %v785 = vld [vmem:[%s2 + $0x28] sm:$0xff]
  %v786 = vld [vmem:[%s2 + $0x30] sm:$0xff]
  %v787 = vld [vmem:[%s2 + $0x38] sm:$0xff]
  %v788 = vld [vmem:[%s6] sm:$0x1]
  %v790 = vlaneseq
  %v791 = vshrl.u32 %v790, 7
  %v792 = vsub.s32 0, %v791
  %v793 = vrot.slane %v788, %v792
  %v796 = vsel %vm136, %v779, 0
  %798 = vmatprep.subr.mxu0 0.0
  %799 = vmatpush1.msra.mxu0 %v780
  %800 = vmatprep.subr.mxu0 0.0
  %801 = vmatpush1.msra.mxu0 %v781
  %802 = vmatprep.subr.mxu0 0.0
  %803 = vmatpush1.msra.mxu0 %v782
  %804 = vmatprep.subr.mxu0 0.0
  %805 = vmatpush1.msra.mxu0 %v783
  %806 = vmatprep.subr.mxu0 0.0
  %807 = vmatpush1.msra.mxu0 %v784
  %808 = vmatprep.subr.mxu0 0.0
  %809 = vmatpush1.msra.mxu0 %v785
  %810 = vmatprep.subr.mxu0 0.0
  %811 = vmatpush1.msra.mxu0 %v786
  %812 = vmatprep.subr.mxu0 0.0
  %813 = vmatpush1.msra.mxu0 %v787
  %814 = vmatprep.subr.mxu0 0.0
  %815 = vmatpush1.msra.mxu0 0.0
  %816 = vmatprep.subr.mxu0 0.0
  %817 = vmatpush1.msra.mxu0 0.0
  %818 = vmatprep.subr.mxu0 0.0
  %819 = vmatpush1.msra.mxu0 0.0
  %820 = vmatprep.subr.mxu0 0.0
  %821 = vmatpush1.msra.mxu0 0.0
  %822 = vmatprep.subr.mxu0 0.0
  %823 = vmatpush1.msra.mxu0 0.0
  %824 = vmatprep.subr.mxu0 0.0
  %825 = vmatpush1.msra.mxu0 0.0
  %826 = vmatprep.subr.mxu0 0.0
  %827 = vmatpush1.msra.mxu0 0.0
  %828 = vmatprep.subr.mxu0 0.0
  %829 = vmatpush1.msra.mxu0 0.0
  %830 = vmatprep.subr.mxu0 0.0
  %831 = vmatpush1.msra.mxu0 0.0
  %832 = vmatprep.subr.mxu0 0.0
  %833 = vmatpush1.msra.mxu0 0.0
  %834 = vmatprep.subr.mxu0 0.0
  %835 = vmatpush1.msra.mxu0 0.0
  %836 = vmatprep.subr.mxu0 0.0
  %837 = vmatpush1.msra.mxu0 0.0
  %838 = vmatprep.subr.mxu0 0.0
  %839 = vmatpush1.msra.mxu0 0.0
  %840 = vmatprep.subr.mxu0 0.0
  %841 = vmatpush1.msra.mxu0 0.0
  %842 = vmatprep.subr.mxu0 0.0
  %843 = vmatpush1.msra.mxu0 0.0
  %844 = vmatprep.subr.mxu0 0.0
  %845 = vmatpush1.msra.mxu0 0.0
  %846 = vmatprep.subr.mxu0 0.0
  %847 = vmatpush1.msra.mxu0 0.0
  %848 = vmatprep.subr.mxu0 0.0
  %849 = vmatpush1.msra.mxu0 0.0
  %850 = vmatprep.subr.mxu0 0.0
  %851 = vmatpush1.msra.mxu0 0.0
  %852 = vmatprep.subr.mxu0 0.0
  %853 = vmatpush1.msra.mxu0 0.0
  %854 = vmatprep.subr.mxu0 0.0
  %855 = vmatpush1.msra.mxu0 0.0
  %856 = vmatprep.subr.mxu0 0.0
  %857 = vmatpush1.msra.mxu0 0.0
  %858 = vmatprep.subr.mxu0 0.0
  %859 = vmatpush1.msra.mxu0 0.0
  %860 = vmatprep.subr.mxu0 0.0
  %861 = vmatpush1.msra.mxu0 0.0
  %862 = vmatprep.mubr.f32.mxu0 0.0
  %863 = vmatmul.mubr.f32.gmra.mrb[0].mxu0 %v796
  %v864 = vpop.f32.mrb[0].mxu0
  %v865 = vadd.f32 %v793, %v864
  %v866 = vpop.f32.mrb[0].mxu0
  %867 = vdwg.mxu0
  %868 = vst.msk [vmem:[#allocation2] sm:$0xff] %vm136, %v865
  %v869 = vld [vmem:[%s4] sm:$0xff]
  %v870 = vld [vmem:[%s4 + $0x8] sm:$0xff]
  %v871 = vld [vmem:[%s4 + $0x10] sm:$0xff]
  %v872 = vld [vmem:[%s4 + $0x18] sm:$0xff]
  %v873 = vld [vmem:[%s4 + $0x20] sm:$0xff]
  %v874 = vld [vmem:[%s4 + $0x28] sm:$0xff]
  %v875 = vld [vmem:[%s4 + $0x30] sm:$0xff]
  %v876 = vld [vmem:[%s4 + $0x38] sm:$0xff]
  %v877 = vld [vmem:[#allocation2] sm:$0x1]
  %878 = vmatprep.subr.mxu0 0.0
  %879 = vmatpush1.msra.mxu0 %v869
  %880 = vmatprep.subr.mxu0 0.0
  %881 = vmatpush1.msra.mxu0 %v870
  %882 = vmatprep.subr.mxu0 0.0
  %883 = vmatpush1.msra.mxu0 %v871
  %884 = vmatprep.subr.mxu0 0.0
  %885 = vmatpush1.msra.mxu0 %v872
  %886 = vmatprep.subr.mxu0 0.0
  %887 = vmatpush1.msra.mxu0 %v873
  %888 = vmatprep.subr.mxu0 0.0
  %889 = vmatpush1.msra.mxu0 %v874
  %890 = vmatprep.subr.mxu0 0.0
  %891 = vmatpush1.msra.mxu0 %v875
  %892 = vmatprep.subr.mxu0 0.0
  %893 = vmatpush1.msra.mxu0 %v876
  %894 = vmatprep.subr.mxu0 0.0
  %895 = vmatpush1.msra.mxu0 0.0
  %896 = vmatprep.subr.mxu0 0.0
  %897 = vmatpush1.msra.mxu0 0.0
  %898 = vmatprep.subr.mxu0 0.0
  %899 = vmatpush1.msra.mxu0 0.0
  %900 = vmatprep.subr.mxu0 0.0
  %901 = vmatpush1.msra.mxu0 0.0
  %902 = vmatprep.subr.mxu0 0.0
  %903 = vmatpush1.msra.mxu0 0.0
  %904 = vmatprep.subr.mxu0 0.0
  %905 = vmatpush1.msra.mxu0 0.0
  %906 = vmatprep.subr.mxu0 0.0
  %907 = vmatpush1.msra.mxu0 0.0
  %908 = vmatprep.subr.mxu0 0.0
  %909 = vmatpush1.msra.mxu0 0.0
  %910 = vmatprep.subr.mxu0 0.0
  %911 = vmatpush1.msra.mxu0 0.0
  %912 = vmatprep.subr.mxu0 0.0
  %913 = vmatpush1.msra.mxu0 0.0
  %914 = vmatprep.subr.mxu0 0.0
  %915 = vmatpush1.msra.mxu0 0.0
  %916 = vmatprep.subr.mxu0 0.0
  %917 = vmatpush1.msra.mxu0 0.0
  %918 = vmatprep.subr.mxu0 0.0
  %919 = vmatpush1.msra.mxu0 0.0
  %920 = vmatprep.subr.mxu0 0.0
  %921 = vmatpush1.msra.mxu0 0.0
  %922 = vmatprep.subr.mxu0 0.0
  %923 = vmatpush1.msra.mxu0 0.0
  %924 = vmatprep.subr.mxu0 0.0
  %925 = vmatpush1.msra.mxu0 0.0
  %926 = vmatprep.subr.mxu0 0.0
  %927 = vmatpush1.msra.mxu0 0.0
  %928 = vmatprep.subr.mxu0 0.0
  %929 = vmatpush1.msra.mxu0 0.0
  %930 = vmatprep.subr.mxu0 0.0
  %931 = vmatpush1.msra.mxu0 0.0
  %932 = vmatprep.subr.mxu0 0.0
  %933 = vmatpush1.msra.mxu0 0.0
  %934 = vmatprep.subr.mxu0 0.0
  %935 = vmatpush1.msra.mxu0 0.0
  %936 = vmatprep.subr.mxu0 0.0
  %937 = vmatpush1.msra.mxu0 0.0
  %938 = vmatprep.subr.mxu0 0.0
  %939 = vmatpush1.msra.mxu0 0.0
  %940 = vmatprep.subr.mxu0 0.0
  %941 = vmatpush1.msra.mxu0 0.0
  %942 = vmatprep.mubr.f32.mxu0 0.0
  %943 = vmatmul.mubr.f32.gmra.mrb[0].mxu0 %v148
  %v944 = vpop.f32.mrb[0].mxu0
  %v945 = vadd.f32 0.0, %v944
  %v946 = vpop.f32.mrb[0].mxu0
  %947 = vdwg.mxu0
  %v948 = vadd.f32 %v877, %v945
  %v949 = vmax.f32 %v948, 0.0
  %v950 = vtanh.pop %v948
  %v951 = vsel %vm49, %v949, %v950
  %952 = vst.msk [vmem:[#allocation3] sm:$0x1] %vm224, %v951
  %v953 = vld [vmem:[#allocation2 + $0x1] sm:$0x1]
  %v955 = vsel %vm136, %v951, 0
  %957 = vmatprep.subr.mxu0 0.0
  %958 = vmatpush1.msra.mxu0 %v869
  %959 = vmatprep.subr.mxu0 0.0
  %960 = vmatpush1.msra.mxu0 %v870
  %961 = vmatprep.subr.mxu0 0.0
  %962 = vmatpush1.msra.mxu0 %v871
  %963 = vmatprep.subr.mxu0 0.0
  %964 = vmatpush1.msra.mxu0 %v872
  %965 = vmatprep.subr.mxu0 0.0
  %966 = vmatpush1.msra.mxu0 %v873
  %967 = vmatprep.subr.mxu0 0.0
  %968 = vmatpush1.msra.mxu0 %v874
  %969 = vmatprep.subr.mxu0 0.0
  %970 = vmatpush1.msra.mxu0 %v875
  %971 = vmatprep.subr.mxu0 0.0
  %972 = vmatpush1.msra.mxu0 %v876
  %973 = vmatprep.subr.mxu0 0.0
  %974 = vmatpush1.msra.mxu0 0.0
  %975 = vmatprep.subr.mxu0 0.0
  %976 = vmatpush1.msra.mxu0 0.0
  %977 = vmatprep.subr.mxu0 0.0
  %978 = vmatpush1.msra.mxu0 0.0
  %979 = vmatprep.subr.mxu0 0.0
  %980 = vmatpush1.msra.mxu0 0.0
  %981 = vmatprep.subr.mxu0 0.0
  %982 = vmatpush1.msra.mxu0 0.0
  %983 = vmatprep.subr.mxu0 0.0
  %984 = vmatpush1.msra.mxu0 0.0
  %985 = vmatprep.subr.mxu0 0.0
  %986 = vmatpush1.msra.mxu0 0.0
  %987 = vmatprep.subr.mxu0 0.0
  %988 = vmatpush1.msra.mxu0 0.0
  %989 = vmatprep.subr.mxu0 0.0
  %990 = vmatpush1.msra.mxu0 0.0
  %991 = vmatprep.subr.mxu0 0.0
  %992 = vmatpush1.msra.mxu0 0.0
  %993 = vmatprep.subr.mxu0 0.0
  %994 = vmatpush1.msra.mxu0 0.0
  %995 = vmatprep.subr.mxu0 0.0
  %996 = vmatpush1.msra.mxu0 0.0
  %997 = vmatprep.subr.mxu0 0.0
  %998 = vmatpush1.msra.mxu0 0.0
  %999 = vmatprep.subr.mxu0 0.0
  %1000 = vmatpush1.msra.mxu0 0.0
  %1001 = vmatprep.subr.mxu0 0.0
  %1002 = vmatpush1.msra.mxu0 0.0
  %1003 = vmatprep.subr.mxu0 0.0
  %1004 = vmatpush1.msra.mxu0 0.0
  %1005 = vmatprep.subr.mxu0 0.0
  %1006 = vmatpush1.msra.mxu0 0.0
  %1007 = vmatprep.subr.mxu0 0.0
  %1008 = vmatpush1.msra.mxu0 0.0
  %1009 = vmatprep.subr.mxu0 0.0
  %1010 = vmatpush1.msra.mxu0 0.0
  %1011 = vmatprep.subr.mxu0 0.0
  %1012 = vmatpush1.msra.mxu0 0.0
  %1013 = vmatprep.subr.mxu0 0.0
  %1014 = vmatpush1.msra.mxu0 0.0
  %1015 = vmatprep.subr.mxu0 0.0
  %1016 = vmatpush1.msra.mxu0 0.0
  %1017 = vmatprep.subr.mxu0 0.0
  %1018 = vmatpush1.msra.mxu0 0.0
  %1019 = vmatprep.subr.mxu0 0.0
  %1020 = vmatpush1.msra.mxu0 0.0
  %1021 = vmatprep.mubr.f32.mxu0 0.0
  %1022 = vmatmul.mubr.f32.gmra.mrb[0].mxu0 %v955
  %v1023 = vpop.f32.mrb[0].mxu0
  %v1024 = vadd.f32 0.0, %v1023
  %v1025 = vpop.f32.mrb[0].mxu0
  %1026 = vdwg.mxu0
  %v1027 = vadd.f32 %v953, %v1024
  %v1028 = vmax.f32 %v1027, 0.0
  %v1029 = vtanh.pop %v1027
  %v1030 = vsel %vm49, %v1028, %v1029
  %1031 = vst.msk [vmem:[#allocation3 + $0x1] sm:$0x1] %vm224, %v1030
  %v1032 = vld [vmem:[#allocation2 + $0x2] sm:$0x1]
  %v1034 = vsel %vm136, %v1030, 0
  %1036 = vmatprep.subr.mxu0 0.0
  %1037 = vmatpush1.msra.mxu0 %v869
  %1038 = vmatprep.subr.mxu0 0.0
  %1039 = vmatpush1.msra.mxu0 %v870
  %1040 = vmatprep.subr.mxu0 0.0
  %1041 = vmatpush1.msra.mxu0 %v871
  %1042 = vmatprep.subr.mxu0 0.0
  %1043 = vmatpush1.msra.mxu0 %v872
  %1044 = vmatprep.subr.mxu0 0.0
  %1045 = vmatpush1.msra.mxu0 %v873
  %1046 = vmatprep.subr.mxu0 0.0
  %1047 = vmatpush1.msra.mxu0 %v874
  %1048 = vmatprep.subr.mxu0 0.0
  %1049 = vmatpush1.msra.mxu0 %v875
  %1050 = vmatprep.subr.mxu0 0.0
  %1051 = vmatpush1.msra.mxu0 %v876
  %1052 = vmatprep.subr.mxu0 0.0
  %1053 = vmatpush1.msra.mxu0 0.0
  %1054 = vmatprep.subr.mxu0 0.0
  %1055 = vmatpush1.msra.mxu0 0.0
  %1056 = vmatprep.subr.mxu0 0.0
  %1057 = vmatpush1.msra.mxu0 0.0
  %1058 = vmatprep.subr.mxu0 0.0
  %1059 = vmatpush1.msra.mxu0 0.0
  %1060 = vmatprep.subr.mxu0 0.0
  %1061 = vmatpush1.msra.mxu0 0.0
  %1062 = vmatprep.subr.mxu0 0.0
  %1063 = vmatpush1.msra.mxu0 0.0
  %1064 = vmatprep.subr.mxu0 0.0
  %1065 = vmatpush1.msra.mxu0 0.0
  %1066 = vmatprep.subr.mxu0 0.0
  %1067 = vmatpush1.msra.mxu0 0.0
  %1068 = vmatprep.subr.mxu0 0.0
  %1069 = vmatpush1.msra.mxu0 0.0
  %1070 = vmatprep.subr.mxu0 0.0
  %1071 = vmatpush1.msra.mxu0 0.0
  %1072 = vmatprep.subr.mxu0 0.0
  %1073 = vmatpush1.msra.mxu0 0.0
  %1074 = vmatprep.subr.mxu0 0.0
  %1075 = vmatpush1.msra.mxu0 0.0
  %1076 = vmatprep.subr.mxu0 0.0
  %1077 = vmatpush1.msra.mxu0 0.0
  %1078 = vmatprep.subr.mxu0 0.0
  %1079 = vmatpush1.msra.mxu0 0.0
  %1080 = vmatprep.subr.mxu0 0.0
  %1081 = vmatpush1.msra.mxu0 0.0
  %1082 = vmatprep.subr.mxu0 0.0
  %1083 = vmatpush1.msra.mxu0 0.0
  %1084 = vmatprep.subr.mxu0 0.0
  %1085 = vmatpush1.msra.mxu0 0.0
  %1086 = vmatprep.subr.mxu0 0.0
  %1087 = vmatpush1.msra.mxu0 0.0
  %1088 = vmatprep.subr.mxu0 0.0
  %1089 = vmatpush1.msra.mxu0 0.0
  %1090 = vmatprep.subr.mxu0 0.0
  %1091 = vmatpush1.msra.mxu0 0.0
  %1092 = vmatprep.subr.mxu0 0.0
  %1093 = vmatpush1.msra.mxu0 0.0
  %1094 = vmatprep.subr.mxu0 0.0
  %1095 = vmatpush1.msra.mxu0 0.0
  %1096 = vmatprep.subr.mxu0 0.0
  %1097 = vmatpush1.msra.mxu0 0.0
  %1098 = vmatprep.subr.mxu0 0.0
  %1099 = vmatpush1.msra.mxu0 0.0
  %1100 = vmatprep.mubr.f32.mxu0 0.0
  %1101 = vmatmul.mubr.f32.gmra.mrb[0].mxu0 %v1034
  %v1102 = vpop.f32.mrb[0].mxu0
  %v1103 = vadd.f32 0.0, %v1102
  %v1104 = vpop.f32.mrb[0].mxu0
  %1105 = vdwg.mxu0
  %v1106 = vadd.f32 %v1032, %v1103
  %v1107 = vmax.f32 %v1106, 0.0
  %v1108 = vtanh.pop %v1106
  %v1109 = vsel %vm49, %v1107, %v1108
  %1110 = vst.msk [vmem:[#allocation3 + $0x2] sm:$0x1] %vm224, %v1109
  %v1111 = vld [vmem:[#allocation2 + $0x3] sm:$0x1]
  %v1113 = vsel %vm136, %v1109, 0
  %1115 = vmatprep.subr.mxu0 0.0
  %1116 = vmatpush1.msra.mxu0 %v869
  %1117 = vmatprep.subr.mxu0 0.0
  %1118 = vmatpush1.msra.mxu0 %v870
  %1119 = vmatprep.subr.mxu0 0.0
  %1120 = vmatpush1.msra.mxu0 %v871
  %1121 = vmatprep.subr.mxu0 0.0
  %1122 = vmatpush1.msra.mxu0 %v872
  %1123 = vmatprep.subr.mxu0 0.0
  %1124 = vmatpush1.msra.mxu0 %v873
  %1125 = vmatprep.subr.mxu0 0.0
  %1126 = vmatpush1.msra.mxu0 %v874
  %1127 = vmatprep.subr.mxu0 0.0
  %1128 = vmatpush1.msra.mxu0 %v875
  %1129 = vmatprep.subr.mxu0 0.0
  %1130 = vmatpush1.msra.mxu0 %v876
  %1131 = vmatprep.subr.mxu0 0.0
  %1132 = vmatpush1.msra.mxu0 0.0
  %1133 = vmatprep.subr.mxu0 0.0
  %1134 = vmatpush1.msra.mxu0 0.0
  %1135 = vmatprep.subr.mxu0 0.0
  %1136 = vmatpush1.msra.mxu0 0.0
  %1137 = vmatprep.subr.mxu0 0.0
  %1138 = vmatpush1.msra.mxu0 0.0
  %1139 = vmatprep.subr.mxu0 0.0
  %1140 = vmatpush1.msra.mxu0 0.0
  %1141 = vmatprep.subr.mxu0 0.0
  %1142 = vmatpush1.msra.mxu0 0.0
  %1143 = vmatprep.subr.mxu0 0.0
  %1144 = vmatpush1.msra.mxu0 0.0
  %1145 = vmatprep.subr.mxu0 0.0
  %1146 = vmatpush1.msra.mxu0 0.0
  %1147 = vmatprep.subr.mxu0 0.0
  %1148 = vmatpush1.msra.mxu0 0.0
  %1149 = vmatprep.subr.mxu0 0.0
  %1150 = vmatpush1.msra.mxu0 0.0
  %1151 = vmatprep.subr.mxu0 0.0
  %1152 = vmatpush1.msra.mxu0 0.0
  %1153 = vmatprep.subr.mxu0 0.0
  %1154 = vmatpush1.msra.mxu0 0.0
  %1155 = vmatprep.subr.mxu0 0.0
  %1156 = vmatpush1.msra.mxu0 0.0
  %1157 = vmatprep.subr.mxu0 0.0
  %1158 = vmatpush1.msra.mxu0 0.0
  %1159 = vmatprep.subr.mxu0 0.0
  %1160 = vmatpush1.msra.mxu0 0.0
  %1161 = vmatprep.subr.mxu0 0.0
  %1162 = vmatpush1.msra.mxu0 0.0
  %1163 = vmatprep.subr.mxu0 0.0
  %1164 = vmatpush1.msra.mxu0 0.0
  %1165 = vmatprep.subr.mxu0 0.0
  %1166 = vmatpush1.msra.mxu0 0.0
  %1167 = vmatprep.subr.mxu0 0.0
  %1168 = vmatpush1.msra.mxu0 0.0
  %1169 = vmatprep.subr.mxu0 0.0
  %1170 = vmatpush1.msra.mxu0 0.0
  %1171 = vmatprep.subr.mxu0 0.0
  %1172 = vmatpush1.msra.mxu0 0.0
  %1173 = vmatprep.subr.mxu0 0.0
  %1174 = vmatpush1.msra.mxu0 0.0
  %1175 = vmatprep.subr.mxu0 0.0
  %1176 = vmatpush1.msra.mxu0 0.0
  %1177 = vmatprep.subr.mxu0 0.0
  %1178 = vmatpush1.msra.mxu0 0.0
  %1179 = vmatprep.mubr.f32.mxu0 0.0
  %1180 = vmatmul.mubr.f32.gmra.mrb[0].mxu0 %v1113
  %v1181 = vpop.f32.mrb[0].mxu0
  %v1182 = vadd.f32 0.0, %v1181
  %v1183 = vpop.f32.mrb[0].mxu0
  %1184 = vdwg.mxu0
  %v1185 = vadd.f32 %v1111, %v1182
  %v1186 = vmax.f32 %v1185, 0.0
  %v1187 = vtanh.pop %v1185
  %v1188 = vsel %vm49, %v1186, %v1187
  %1189 = vst.msk [vmem:[#allocation3 + $0x3] sm:$0x1] %vm224, %v1188
  %v1190 = vld [vmem:[#allocation2 + $0x4] sm:$0x1]
  %v1192 = vsel %vm136, %v1188, 0
  %1194 = vmatprep.subr.mxu0 0.0
  %1195 = vmatpush1.msra.mxu0 %v869
  %1196 = vmatprep.subr.mxu0 0.0
  %1197 = vmatpush1.msra.mxu0 %v870
  %1198 = vmatprep.subr.mxu0 0.0
  %1199 = vmatpush1.msra.mxu0 %v871
  %1200 = vmatprep.subr.mxu0 0.0
  %1201 = vmatpush1.msra.mxu0 %v872
  %1202 = vmatprep.subr.mxu0 0.0
  %1203 = vmatpush1.msra.mxu0 %v873
  %1204 = vmatprep.subr.mxu0 0.0
  %1205 = vmatpush1.msra.mxu0 %v874
  %1206 = vmatprep.subr.mxu0 0.0
  %1207 = vmatpush1.msra.mxu0 %v875
  %1208 = vmatprep.subr.mxu0 0.0
  %1209 = vmatpush1.msra.mxu0 %v876
  %1210 = vmatprep.subr.mxu0 0.0
  %1211 = vmatpush1.msra.mxu0 0.0
  %1212 = vmatprep.subr.mxu0 0.0
  %1213 = vmatpush1.msra.mxu0 0.0
  %1214 = vmatprep.subr.mxu0 0.0
  %1215 = vmatpush1.msra.mxu0 0.0
  %1216 = vmatprep.subr.mxu0 0.0
  %1217 = vmatpush1.msra.mxu0 0.0
  %1218 = vmatprep.subr.mxu0 0.0
  %1219 = vmatpush1.msra.mxu0 0.0
  %1220 = vmatprep.subr.mxu0 0.0
  %1221 = vmatpush1.msra.mxu0 0.0
  %1222 = vmatprep.subr.mxu0 0.0
  %1223 = vmatpush1.msra.mxu0 0.0
  %1224 = vmatprep.subr.mxu0 0.0
  %1225 = vmatpush1.msra.mxu0 0.0
  %1226 = vmatprep.subr.mxu0 0.0
  %1227 = vmatpush1.msra.mxu0 0.0
  %1228 = vmatprep.subr.mxu0 0.0
  %1229 = vmatpush1.msra.mxu0 0.0
  %1230 = vmatprep.subr.mxu0 0.0
  %1231 = vmatpush1.msra.mxu0 0.0
  %1232 = vmatprep.subr.mxu0 0.0
  %1233 = vmatpush1.msra.mxu0 0.0
  %1234 = vmatprep.subr.mxu0 0.0
  %1235 = vmatpush1.msra.mxu0 0.0
  %1236 = vmatprep.subr.mxu0 0.0
  %1237 = vmatpush1.msra.mxu0 0.0
  %1238 = vmatprep.subr.mxu0 0.0
  %1239 = vmatpush1.msra.mxu0 0.0
  %1240 = vmatprep.subr.mxu0 0.0
  %1241 = vmatpush1.msra.mxu0 0.0
  %1242 = vmatprep.subr.mxu0 0.0
  %1243 = vmatpush1.msra.mxu0 0.0
  %1244 = vmatprep.subr.mxu0 0.0
  %1245 = vmatpush1.msra.mxu0 0.0
  %1246 = vmatprep.subr.mxu0 0.0
  %1247 = vmatpush1.msra.mxu0 0.0
  %1248 = vmatprep.subr.mxu0 0.0
  %1249 = vmatpush1.msra.mxu0 0.0
  %1250 = vmatprep.subr.mxu0 0.0
  %1251 = vmatpush1.msra.mxu0 0.0
  %1252 = vmatprep.subr.mxu0 0.0
  %1253 = vmatpush1.msra.mxu0 0.0
  %1254 = vmatprep.subr.mxu0 0.0
  %1255 = vmatpush1.msra.mxu0 0.0
  %1256 = vmatprep.subr.mxu0 0.0
  %1257 = vmatpush1.msra.mxu0 0.0
  %1258 = vmatprep.mubr.f32.mxu0 0.0
  %1259 = vmatmul.mubr.f32.gmra.mrb[0].mxu0 %v1192
  %v1260 = vpop.f32.mrb[0].mxu0
  %v1261 = vadd.f32 0.0, %v1260
  %v1262 = vpop.f32.mrb[0].mxu0
  %1263 = vdwg.mxu0
  %v1264 = vadd.f32 %v1190, %v1261
  %v1265 = vmax.f32 %v1264, 0.0
  %v1266 = vtanh.pop %v1264
  %v1267 = vsel %vm49, %v1265, %v1266
  %1268 = vst.msk [vmem:[#allocation3 + $0x4] sm:$0x1] %vm224, %v1267
  %v1269 = vld [vmem:[#allocation2 + $0x5] sm:$0x1]
  %v1271 = vsel %vm136, %v1267, 0
  %1273 = vmatprep.subr.mxu0 0.0
  %1274 = vmatpush1.msra.mxu0 %v869
  %1275 = vmatprep.subr.mxu0 0.0
  %1276 = vmatpush1.msra.mxu0 %v870
  %1277 = vmatprep.subr.mxu0 0.0
  %1278 = vmatpush1.msra.mxu0 %v871
  %1279 = vmatprep.subr.mxu0 0.0
  %1280 = vmatpush1.msra.mxu0 %v872
  %1281 = vmatprep.subr.mxu0 0.0
  %1282 = vmatpush1.msra.mxu0 %v873
  %1283 = vmatprep.subr.mxu0 0.0
  %1284 = vmatpush1.msra.mxu0 %v874
  %1285 = vmatprep.subr.mxu0 0.0
  %1286 = vmatpush1.msra.mxu0 %v875
  %1287 = vmatprep.subr.mxu0 0.0
  %1288 = vmatpush1.msra.mxu0 %v876
  %1289 = vmatprep.subr.mxu0 0.0
  %1290 = vmatpush1.msra.mxu0 0.0
  %1291 = vmatprep.subr.mxu0 0.0
  %1292 = vmatpush1.msra.mxu0 0.0
  %1293 = vmatprep.subr.mxu0 0.0
  %1294 = vmatpush1.msra.mxu0 0.0
  %1295 = vmatprep.subr.mxu0 0.0
  %1296 = vmatpush1.msra.mxu0 0.0
  %1297 = vmatprep.subr.mxu0 0.0
  %1298 = vmatpush1.msra.mxu0 0.0
  %1299 = vmatprep.subr.mxu0 0.0
  %1300 = vmatpush1.msra.mxu0 0.0
  %1301 = vmatprep.subr.mxu0 0.0
  %1302 = vmatpush1.msra.mxu0 0.0
  %1303 = vmatprep.subr.mxu0 0.0
  %1304 = vmatpush1.msra.mxu0 0.0
  %1305 = vmatprep.subr.mxu0 0.0
  %1306 = vmatpush1.msra.mxu0 0.0
  %1307 = vmatprep.subr.mxu0 0.0
  %1308 = vmatpush1.msra.mxu0 0.0
  %1309 = vmatprep.subr.mxu0 0.0
  %1310 = vmatpush1.msra.mxu0 0.0
  %1311 = vmatprep.subr.mxu0 0.0
  %1312 = vmatpush1.msra.mxu0 0.0
  %1313 = vmatprep.subr.mxu0 0.0
  %1314 = vmatpush1.msra.mxu0 0.0
  %1315 = vmatprep.subr.mxu0 0.0
  %1316 = vmatpush1.msra.mxu0 0.0
  %1317 = vmatprep.subr.mxu0 0.0
  %1318 = vmatpush1.msra.mxu0 0.0
  %1319 = vmatprep.subr.mxu0 0.0
  %1320 = vmatpush1.msra.mxu0 0.0
  %1321 = vmatprep.subr.mxu0 0.0
  %1322 = vmatpush1.msra.mxu0 0.0
  %1323 = vmatprep.subr.mxu0 0.0
  %1324 = vmatpush1.msra.mxu0 0.0
  %1325 = vmatprep.subr.mxu0 0.0
  %1326 = vmatpush1.msra.mxu0 0.0
  %1327 = vmatprep.subr.mxu0 0.0
  %1328 = vmatpush1.msra.mxu0 0.0
  %1329 = vmatprep.subr.mxu0 0.0
  %1330 = vmatpush1.msra.mxu0 0.0
  %1331 = vmatprep.subr.mxu0 0.0
  %1332 = vmatpush1.msra.mxu0 0.0
  %1333 = vmatprep.subr.mxu0 0.0
  %1334 = vmatpush1.msra.mxu0 0.0
  %1335 = vmatprep.subr.mxu0 0.0
  %1336 = vmatpush1.msra.mxu0 0.0
  %1337 = vmatprep.mubr.f32.mxu0 0.0
  %1338 = vmatmul.mubr.f32.gmra.mrb[0].mxu0 %v1271
  %v1339 = vpop.f32.mrb[0].mxu0
  %v1340 = vadd.f32 0.0, %v1339
  %v1341 = vpop.f32.mrb[0].mxu0
  %1342 = vdwg.mxu0
  %v1343 = vadd.f32 %v1269, %v1340
  %v1344 = vmax.f32 %v1343, 0.0
  %v1345 = vtanh.pop %v1343
  %v1346 = vsel %vm49, %v1344, %v1345
  %1347 = vst.msk [vmem:[#allocation3 + $0x5] sm:$0x1] %vm224, %v1346
  %v1348 = vld [vmem:[#allocation2 + $0x6] sm:$0x1]
  %v1350 = vsel %vm136, %v1346, 0
  %1352 = vmatprep.subr.mxu0 0.0
  %1353 = vmatpush1.msra.mxu0 %v869
  %1354 = vmatprep.subr.mxu0 0.0
  %1355 = vmatpush1.msra.mxu0 %v870
  %1356 = vmatprep.subr.mxu0 0.0
  %1357 = vmatpush1.msra.mxu0 %v871
  %1358 = vmatprep.subr.mxu0 0.0
  %1359 = vmatpush1.msra.mxu0 %v872
  %1360 = vmatprep.subr.mxu0 0.0
  %1361 = vmatpush1.msra.mxu0 %v873
  %1362 = vmatprep.subr.mxu0 0.0
  %1363 = vmatpush1.msra.mxu0 %v874
  %1364 = vmatprep.subr.mxu0 0.0
  %1365 = vmatpush1.msra.mxu0 %v875
  %1366 = vmatprep.subr.mxu0 0.0
  %1367 = vmatpush1.msra.mxu0 %v876
  %1368 = vmatprep.subr.mxu0 0.0
  %1369 = vmatpush1.msra.mxu0 0.0
  %1370 = vmatprep.subr.mxu0 0.0
  %1371 = vmatpush1.msra.mxu0 0.0
  %1372 = vmatprep.subr.mxu0 0.0
  %1373 = vmatpush1.msra.mxu0 0.0
  %1374 = vmatprep.subr.mxu0 0.0
  %1375 = vmatpush1.msra.mxu0 0.0
  %1376 = vmatprep.subr.mxu0 0.0
  %1377 = vmatpush1.msra.mxu0 0.0
  %1378 = vmatprep.subr.mxu0 0.0
  %1379 = vmatpush1.msra.mxu0 0.0
  %1380 = vmatprep.subr.mxu0 0.0
  %1381 = vmatpush1.msra.mxu0 0.0
  %1382 = vmatprep.subr.mxu0 0.0
  %1383 = vmatpush1.msra.mxu0 0.0
  %1384 = vmatprep.subr.mxu0 0.0
  %1385 = vmatpush1.msra.mxu0 0.0
  %1386 = vmatprep.subr.mxu0 0.0
  %1387 = vmatpush1.msra.mxu0 0.0
  %1388 = vmatprep.subr.mxu0 0.0
  %1389 = vmatpush1.msra.mxu0 0.0
  %1390 = vmatprep.subr.mxu0 0.0
  %1391 = vmatpush1.msra.mxu0 0.0
  %1392 = vmatprep.subr.mxu0 0.0
  %1393 = vmatpush1.msra.mxu0 0.0
  %1394 = vmatprep.subr.mxu0 0.0
  %1395 = vmatpush1.msra.mxu0 0.0
  %1396 = vmatprep.subr.mxu0 0.0
  %1397 = vmatpush1.msra.mxu0 0.0
  %1398 = vmatprep.subr.mxu0 0.0
  %1399 = vmatpush1.msra.mxu0 0.0
  %1400 = vmatprep.subr.mxu0 0.0
  %1401 = vmatpush1.msra.mxu0 0.0
  %1402 = vmatprep.subr.mxu0 0.0
  %1403 = vmatpush1.msra.mxu0 0.0
  %1404 = vmatprep.subr.mxu0 0.0
  %1405 = vmatpush1.msra.mxu0 0.0
  %1406 = vmatprep.subr.mxu0 0.0
  %1407 = vmatpush1.msra.mxu0 0.0
  %1408 = vmatprep.subr.mxu0 0.0
  %1409 = vmatpush1.msra.mxu0 0.0
  %1410 = vmatprep.subr.mxu0 0.0
  %1411 = vmatpush1.msra.mxu0 0.0
  %1412 = vmatprep.subr.mxu0 0.0
  %1413 = vmatpush1.msra.mxu0 0.0
  %1414 = vmatprep.subr.mxu0 0.0
  %1415 = vmatpush1.msra.mxu0 0.0
  %1416 = vmatprep.mubr.f32.mxu0 0.0
  %1417 = vmatmul.mubr.f32.gmra.mrb[0].mxu0 %v1350
  %v1418 = vpop.f32.mrb[0].mxu0
  %v1419 = vadd.f32 0.0, %v1418
  %v1420 = vpop.f32.mrb[0].mxu0
  %1421 = vdwg.mxu0
  %v1422 = vadd.f32 %v1348, %v1419
  %v1423 = vmax.f32 %v1422, 0.0
  %v1424 = vtanh.pop %v1422
  %v1425 = vsel %vm49, %v1423, %v1424
  %1426 = vst.msk [vmem:[#allocation3 + $0x6] sm:$0x1] %vm224, %v1425
  %v1427 = vld [vmem:[#allocation2 + $0x7] sm:$0x1]
  %v1429 = vsel %vm136, %v1425, 0
  %1431 = vmatprep.subr.mxu0 0.0
  %1432 = vmatpush1.msra.mxu0 %v869
  %1433 = vmatprep.subr.mxu0 0.0
  %1434 = vmatpush1.msra.mxu0 %v870
  %1435 = vmatprep.subr.mxu0 0.0
  %1436 = vmatpush1.msra.mxu0 %v871
  %1437 = vmatprep.subr.mxu0 0.0
  %1438 = vmatpush1.msra.mxu0 %v872
  %1439 = vmatprep.subr.mxu0 0.0
  %1440 = vmatpush1.msra.mxu0 %v873
  %1441 = vmatprep.subr.mxu0 0.0
  %1442 = vmatpush1.msra.mxu0 %v874
  %1443 = vmatprep.subr.mxu0 0.0
  %1444 = vmatpush1.msra.mxu0 %v875
  %1445 = vmatprep.subr.mxu0 0.0
  %1446 = vmatpush1.msra.mxu0 %v876
  %1447 = vmatprep.subr.mxu0 0.0
  %1448 = vmatpush1.msra.mxu0 0.0
  %1449 = vmatprep.subr.mxu0 0.0
  %1450 = vmatpush1.msra.mxu0 0.0
  %1451 = vmatprep.subr.mxu0 0.0
  %1452 = vmatpush1.msra.mxu0 0.0
  %1453 = vmatprep.subr.mxu0 0.0
  %1454 = vmatpush1.msra.mxu0 0.0
  %1455 = vmatprep.subr.mxu0 0.0
  %1456 = vmatpush1.msra.mxu0 0.0
  %1457 = vmatprep.subr.mxu0 0.0
  %1458 = vmatpush1.msra.mxu0 0.0
  %1459 = vmatprep.subr.mxu0 0.0
  %1460 = vmatpush1.msra.mxu0 0.0
  %1461 = vmatprep.subr.mxu0 0.0
  %1462 = vmatpush1.msra.mxu0 0.0
  %1463 = vmatprep.subr.mxu0 0.0
  %1464 = vmatpush1.msra.mxu0 0.0
  %1465 = vmatprep.subr.mxu0 0.0
  %1466 = vmatpush1.msra.mxu0 0.0
  %1467 = vmatprep.subr.mxu0 0.0
  %1468 = vmatpush1.msra.mxu0 0.0
  %1469 = vmatprep.subr.mxu0 0.0
  %1470 = vmatpush1.msra.mxu0 0.0
  %1471 = vmatprep.subr.mxu0 0.0
  %1472 = vmatpush1.msra.mxu0 0.0
  %1473 = vmatprep.subr.mxu0 0.0
  %1474 = vmatpush1.msra.mxu0 0.0
  %1475 = vmatprep.subr.mxu0 0.0
  %1476 = vmatpush1.msra.mxu0 0.0
  %1477 = vmatprep.subr.mxu0 0.0
  %1478 = vmatpush1.msra.mxu0 0.0
  %1479 = vmatprep.subr.mxu0 0.0
  %1480 = vmatpush1.msra.mxu0 0.0
  %1481 = vmatprep.subr.mxu0 0.0
  %1482 = vmatpush1.msra.mxu0 0.0
  %1483 = vmatprep.subr.mxu0 0.0
  %1484 = vmatpush1.msra.mxu0 0.0
  %1485 = vmatprep.subr.mxu0 0.0
  %1486 = vmatpush1.msra.mxu0 0.0
  %1487 = vmatprep.subr.mxu0 0.0
  %1488 = vmatpush1.msra.mxu0 0.0
  %1489 = vmatprep.subr.mxu0 0.0
  %1490 = vmatpush1.msra.mxu0 0.0
  %1491 = vmatprep.subr.mxu0 0.0
  %1492 = vmatpush1.msra.mxu0 0.0
  %1493 = vmatprep.subr.mxu0 0.0
  %1494 = vmatpush1.msra.mxu0 0.0
  %1495 = vmatprep.mubr.f32.mxu0 0.0
  %1496 = vmatmul.mubr.f32.gmra.mrb[0].mxu0 %v1429
  %v1497 = vpop.f32.mrb[0].mxu0
  %v1498 = vadd.f32 0.0, %v1497
  %v1499 = vpop.f32.mrb[0].mxu0
  %1500 = vdwg.mxu0
  %v1501 = vadd.f32 %v1427, %v1498
  %v1502 = vmax.f32 %v1501, 0.0
  %v1503 = vtanh.pop %v1501
  %v1504 = vsel %vm49, %v1502, %v1503
  %1505 = vst.msk [vmem:[#allocation3 + $0x7] sm:$0x1] %vm224, %v1504
  %v1506 = vld [vmem:[#allocation3] sm:$0xff]
  %v1507 = vld [vmem:[%s7] sm:$0xff]
  %v1508 = vld [vmem:[%s7 + $0x8] sm:$0xff]
  %v1509 = vld [vmem:[%s7 + $0x10] sm:$0xff]
  %v1510 = vld [vmem:[%s7 + $0x18] sm:$0xff]
  %v1511 = vld [vmem:[%s7 + $0x20] sm:$0xff]
  %v1512 = vld [vmem:[%s7 + $0x28] sm:$0xff]
  %v1513 = vld [vmem:[%s7 + $0x30] sm:$0xff]
  %v1514 = vld [vmem:[%s7 + $0x38] sm:$0xff]
  %v1515 = vld [vmem:[%s8] sm:$0x1]
  %v1517 = vlaneseq
  %v1518 = vshrl.u32 %v1517, 7
  %v1519 = vsub.s32 0, %v1518
  %v1520 = vrot.slane %v1515, %v1519
  %v1523 = vsel %vm136, %v1506, 0
  %1525 = vmatprep.subr.mxu0 0.0
  %1526 = vmatpush1.msra.mxu0 %v1507
  %1527 = vmatprep.subr.mxu0 0.0
  %1528 = vmatpush1.msra.mxu0 %v1508
  %1529 = vmatprep.subr.mxu0 0.0
  %1530 = vmatpush1.msra.mxu0 %v1509
  %1531 = vmatprep.subr.mxu0 0.0
  %1532 = vmatpush1.msra.mxu0 %v1510
  %1533 = vmatprep.subr.mxu0 0.0
  %1534 = vmatpush1.msra.mxu0 %v1511
  %1535 = vmatprep.subr.mxu0 0.0
  %1536 = vmatpush1.msra.mxu0 %v1512
  %1537 = vmatprep.subr.mxu0 0.0
  %1538 = vmatpush1.msra.mxu0 %v1513
  %1539 = vmatprep.subr.mxu0 0.0
  %1540 = vmatpush1.msra.mxu0 %v1514
  %1541 = vmatprep.subr.mxu0 0.0
  %1542 = vmatpush1.msra.mxu0 0.0
  %1543 = vmatprep.subr.mxu0 0.0
  %1544 = vmatpush1.msra.mxu0 0.0
  %1545 = vmatprep.subr.mxu0 0.0
  %1546 = vmatpush1.msra.mxu0 0.0
  %1547 = vmatprep.subr.mxu0 0.0
  %1548 = vmatpush1.msra.mxu0 0.0
  %1549 = vmatprep.subr.mxu0 0.0
  %1550 = vmatpush1.msra.mxu0 0.0
  %1551 = vmatprep.subr.mxu0 0.0
  %1552 = vmatpush1.msra.mxu0 0.0
  %1553 = vmatprep.subr.mxu0 0.0
  %1554 = vmatpush1.msra.mxu0 0.0
  %1555 = vmatprep.subr.mxu0 0.0
  %1556 = vmatpush1.msra.mxu0 0.0
  %1557 = vmatprep.subr.mxu0 0.0
  %1558 = vmatpush1.msra.mxu0 0.0
  %1559 = vmatprep.subr.mxu0 0.0
  %1560 = vmatpush1.msra.mxu0 0.0
  %1561 = vmatprep.subr.mxu0 0.0
  %1562 = vmatpush1.msra.mxu0 0.0
  %1563 = vmatprep.subr.mxu0 0.0
  %1564 = vmatpush1.msra.mxu0 0.0
  %1565 = vmatprep.subr.mxu0 0.0
  %1566 = vmatpush1.msra.mxu0 0.0
  %1567 = vmatprep.subr.mxu0 0.0
  %1568 = vmatpush1.msra.mxu0 0.0
  %1569 = vmatprep.subr.mxu0 0.0
  %1570 = vmatpush1.msra.mxu0 0.0
  %1571 = vmatprep.subr.mxu0 0.0
  %1572 = vmatpush1.msra.mxu0 0.0
  %1573 = vmatprep.subr.mxu0 0.0
  %1574 = vmatpush1.msra.mxu0 0.0
  %1575 = vmatprep.subr.mxu0 0.0
  %1576 = vmatpush1.msra.mxu0 0.0
  %1577 = vmatprep.subr.mxu0 0.0
  %1578 = vmatpush1.msra.mxu0 0.0
  %1579 = vmatprep.subr.mxu0 0.0
  %1580 = vmatpush1.msra.mxu0 0.0
  %1581 = vmatprep.subr.mxu0 0.0
  %1582 = vmatpush1.msra.mxu0 0.0
  %1583 = vmatprep.subr.mxu0 0.0
  %1584 = vmatpush1.msra.mxu0 0.0
  %1585 = vmatprep.subr.mxu0 0.0
  %1586 = vmatpush1.msra.mxu0 0.0
  %1587 = vmatprep.subr.mxu0 0.0
  %1588 = vmatpush1.msra.mxu0 0.0
  %1589 = vmatprep.mubr.f32.mxu0 0.0
  %1590 = vmatmul.mubr.f32.gmra.mrb[0].mxu0 %v1523
  %v1591 = vpop.f32.mrb[0].mxu0
  %v1592 = vadd.f32 %v1520, %v1591
  %v1593 = vpop.f32.mrb[0].mxu0
  %1594 = vdwg.mxu0
  %vm1595 = vcmp.ge.f32.partialorder %v1592, 0.0
  %v1596 = vmul.f32 %v1592, 0.22916667
  %v1597 = vsel %vm1595, %v1592, %v1596
  %v1598 = vld [vmem:[%s9] sm:$0xff]
  %v1599 = vld [vmem:[%s9 + $0x8] sm:$0xff]
  %v1600 = vld [vmem:[%s9 + $0x10] sm:$0xff]
  %v1601 = vld [vmem:[%s9 + $0x18] sm:$0xff]
  %v1602 = vld [vmem:[%s9 + $0x20] sm:$0xff]
  %v1603 = vld [vmem:[%s9 + $0x28] sm:$0xff]
  %v1604 = vld [vmem:[%s9 + $0x30] sm:$0xff]
  %v1605 = vld [vmem:[%s9 + $0x38] sm:$0xff]
  %v1606 = vld [vmem:[%s10] sm:$0x1]
  %v1608 = vlaneseq
  %v1609 = vshrl.u32 %v1608, 7
  %v1610 = vsub.s32 0, %v1609
  %v1611 = vrot.slane %v1606, %v1610
  %v1614 = vsel %vm136, %v1597, 0
  %1616 = vmatprep.subr.mxu0 0.0
  %1617 = vmatpush1.msra.mxu0 %v1598
  %1618 = vmatprep.subr.mxu0 0.0
  %1619 = vmatpush1.msra.mxu0 %v1599
  %1620 = vmatprep.subr.mxu0 0.0
  %1621 = vmatpush1.msra.mxu0 %v1600
  %1622 = vmatprep.subr.mxu0 0.0
  %1623 = vmatpush1.msra.mxu0 %v1601
  %1624 = vmatprep.subr.mxu0 0.0
  %1625 = vmatpush1.msra.mxu0 %v1602
  %1626 = vmatprep.subr.mxu0 0.0
  %1627 = vmatpush1.msra.mxu0 %v1603
  %1628 = vmatprep.subr.mxu0 0.0
  %1629 = vmatpush1.msra.mxu0 %v1604
  %1630 = vmatprep.subr.mxu0 0.0
  %1631 = vmatpush1.msra.mxu0 %v1605
  %1632 = vmatprep.subr.mxu0 0.0
  %1633 = vmatpush1.msra.mxu0 0.0
  %1634 = vmatprep.subr.mxu0 0.0
  %1635 = vmatpush1.msra.mxu0 0.0
  %1636 = vmatprep.subr.mxu0 0.0
  %1637 = vmatpush1.msra.mxu0 0.0
  %1638 = vmatprep.subr.mxu0 0.0
  %1639 = vmatpush1.msra.mxu0 0.0
  %1640 = vmatprep.subr.mxu0 0.0
  %1641 = vmatpush1.msra.mxu0 0.0
  %1642 = vmatprep.subr.mxu0 0.0
  %1643 = vmatpush1.msra.mxu0 0.0
  %1644 = vmatprep.subr.mxu0 0.0
  %1645 = vmatpush1.msra.mxu0 0.0
  %1646 = vmatprep.subr.mxu0 0.0
  %1647 = vmatpush1.msra.mxu0 0.0
  %1648 = vmatprep.subr.mxu0 0.0
  %1649 = vmatpush1.msra.mxu0 0.0
  %1650 = vmatprep.subr.mxu0 0.0
  %1651 = vmatpush1.msra.mxu0 0.0
  %1652 = vmatprep.subr.mxu0 0.0
  %1653 = vmatpush1.msra.mxu0 0.0
  %1654 = vmatprep.subr.mxu0 0.0
  %1655 = vmatpush1.msra.mxu0 0.0
  %1656 = vmatprep.subr.mxu0 0.0
  %1657 = vmatpush1.msra.mxu0 0.0
  %1658 = vmatprep.subr.mxu0 0.0
  %1659 = vmatpush1.msra.mxu0 0.0
  %1660 = vmatprep.subr.mxu0 0.0
  %1661 = vmatpush1.msra.mxu0 0.0
  %1662 = vmatprep.subr.mxu0 0.0
  %1663 = vmatpush1.msra.mxu0 0.0
  %1664 = vmatprep.subr.mxu0 0.0
  %1665 = vmatpush1.msra.mxu0 0.0
  %1666 = vmatprep.subr.mxu0 0.0
  %1667 = vmatpush1.msra.mxu0 0.0
  %1668 = vmatprep.subr.mxu0 0.0
  %1669 = vmatpush1.msra.mxu0 0.0
  %1670 = vmatprep.subr.mxu0 0.0
  %1671 = vmatpush1.msra.mxu0 0.0
  %1672 = vmatprep.subr.mxu0 0.0
  %1673 = vmatpush1.msra.mxu0 0.0
  %1674 = vmatprep.subr.mxu0 0.0
  %1675 = vmatpush1.msra.mxu0 0.0
  %1676 = vmatprep.subr.mxu0 0.0
  %1677 = vmatpush1.msra.mxu0 0.0
  %1678 = vmatprep.subr.mxu0 0.0
  %1679 = vmatpush1.msra.mxu0 0.0
  %1680 = vmatprep.mubr.f32.mxu0 0.0
  %1681 = vmatmul.mubr.f32.gmra.mrb[0].mxu0 %v1614
  %v1682 = vpop.f32.mrb[0].mxu0
  %v1683 = vadd.f32 %v1611, %v1682
  %v1684 = vpop.f32.mrb[0].mxu0
  %1685 = vdwg.mxu0
  %v1686 = vtanh.pop %v1683
  %v1687 = vld [vmem:[%s11] sm:$0xff]
  %v1688 = vld [vmem:[%s11 + $0x8] sm:$0xff]
  %v1689 = vld [vmem:[%s11 + $0x10] sm:$0xff]
  %v1690 = vld [vmem:[%s11 + $0x18] sm:$0xff]
  %v1691 = vld [vmem:[%s11 + $0x20] sm:$0xff]
  %v1692 = vld [vmem:[%s11 + $0x28] sm:$0xff]
  %v1693 = vld [vmem:[%s11 + $0x30] sm:$0xff]
  %v1694 = vld [vmem:[%s11 + $0x38] sm:$0xff]
  %v1695 = vld [vmem:[%s12] sm:$0xff]
  %v1696 = vld [vmem:[%s12 + $0x8] sm:$0xff]
  %vm1697 = vcmask 130048
  %v1699 = vsel %vm1697, %v1686, 0
  %1701 = vmatprep.subr.mxu0 0.0
  %1702 = vmatpush1.msra.mxu0 %v1695
  %1703 = vmatprep.subr.mxu0 0.0
  %1704 = vmatpush1.msra.mxu0 %v1696
  %1705 = vmatprep.subr.mxu0 0.0
  %1706 = vmatpush1.msra.mxu0 0.0
  %1707 = vmatprep.subr.mxu0 0.0
  %1708 = vmatpush1.msra.mxu0 0.0
  %1709 = vmatprep.subr.mxu0 0.0
  %1710 = vmatpush1.msra.mxu0 0.0
  %1711 = vmatprep.subr.mxu0 0.0
  %1712 = vmatpush1.msra.mxu0 0.0
  %1713 = vmatprep.subr.mxu0 0.0
  %1714 = vmatpush1.msra.mxu0 0.0
  %1715 = vmatprep.subr.mxu0 0.0
  %1716 = vmatpush1.msra.mxu0 0.0
  %1717 = vmatprep.subr.mxu0 0.0
  %1718 = vmatpush1.msra.mxu0 0.0
  %1719 = vmatprep.subr.mxu0 0.0
  %1720 = vmatpush1.msra.mxu0 0.0
  %1721 = vmatprep.subr.mxu0 0.0
  %1722 = vmatpush1.msra.mxu0 0.0
  %1723 = vmatprep.subr.mxu0 0.0
  %1724 = vmatpush1.msra.mxu0 0.0
  %1725 = vmatprep.subr.mxu0 0.0
  %1726 = vmatpush1.msra.mxu0 0.0
  %1727 = vmatprep.subr.mxu0 0.0
  %1728 = vmatpush1.msra.mxu0 0.0
  %1729 = vmatprep.subr.mxu0 0.0
  %1730 = vmatpush1.msra.mxu0 0.0
  %1731 = vmatprep.subr.mxu0 0.0
  %1732 = vmatpush1.msra.mxu0 0.0
  %1733 = vmatprep.subr.mxu0 0.0
  %1734 = vmatpush1.msra.mxu0 0.0
  %1735 = vmatprep.subr.mxu0 0.0
  %1736 = vmatpush1.msra.mxu0 0.0
  %1737 = vmatprep.subr.mxu0 0.0
  %1738 = vmatpush1.msra.mxu0 0.0
  %1739 = vmatprep.subr.mxu0 0.0
  %1740 = vmatpush1.msra.mxu0 0.0
  %1741 = vmatprep.subr.mxu0 0.0
  %1742 = vmatpush1.msra.mxu0 0.0
  %1743 = vmatprep.subr.mxu0 0.0
  %1744 = vmatpush1.msra.mxu0 0.0
  %1745 = vmatprep.subr.mxu0 0.0
  %1746 = vmatpush1.msra.mxu0 0.0
  %1747 = vmatprep.subr.mxu0 0.0
  %1748 = vmatpush1.msra.mxu0 0.0
  %1749 = vmatprep.subr.mxu0 0.0
  %1750 = vmatpush1.msra.mxu0 0.0
  %1751 = vmatprep.subr.mxu0 0.0
  %1752 = vmatpush1.msra.mxu0 0.0
  %1753 = vmatprep.subr.mxu0 0.0
  %1754 = vmatpush1.msra.mxu0 0.0
  %1755 = vmatprep.subr.mxu0 0.0
  %1756 = vmatpush1.msra.mxu0 0.0
  %1757 = vmatprep.subr.mxu0 0.0
  %1758 = vmatpush1.msra.mxu0 0.0
  %1759 = vmatprep.subr.mxu0 0.0
  %1760 = vmatpush1.msra.mxu0 0.0
  %1761 = vmatprep.subr.mxu0 0.0
  %1762 = vmatpush1.msra.mxu0 0.0
  %1763 = vmatprep.subr.mxu0 0.0
  %1764 = vmatpush1.msra.mxu0 0.0
  %1765 = vmatprep.mubr.f32.mxu0 0.0
  %1766 = vmatmul.mubr.f32.gmra.mrb[0].mxu0 %v1699
  %v1767 = vpop.f32.mrb[0].mxu0
  %v1768 = vadd.f32 0.0, %v1767
  %v1769 = vpop.f32.mrb[0].mxu0
  %1770 = vdwg.mxu0
  %1771 = vmatprep.subr.mxu0 0.0
  %1772 = vmatpush1.msra.mxu0 %v1687
  %1773 = vmatprep.subr.mxu0 0.0
  %1774 = vmatpush1.msra.mxu0 %v1688
  %1775 = vmatprep.subr.mxu0 0.0
  %1776 = vmatpush1.msra.mxu0 %v1689
  %1777 = vmatprep.subr.mxu0 0.0
  %1778 = vmatpush1.msra.mxu0 %v1690
  %1779 = vmatprep.subr.mxu0 0.0
  %1780 = vmatpush1.msra.mxu0 %v1691
  %1781 = vmatprep.subr.mxu0 0.0
  %1782 = vmatpush1.msra.mxu0 %v1692
  %1783 = vmatprep.subr.mxu0 0.0
  %1784 = vmatpush1.msra.mxu0 %v1693
  %1785 = vmatprep.subr.mxu0 0.0
  %1786 = vmatpush1.msra.mxu0 %v1694
  %1787 = vmatprep.subr.mxu0 0.0
  %1788 = vmatpush1.msra.mxu0 0.0
  %1789 = vmatprep.subr.mxu0 0.0
  %1790 = vmatpush1.msra.mxu0 0.0
  %1791 = vmatprep.subr.mxu0 0.0
  %1792 = vmatpush1.msra.mxu0 0.0
  %1793 = vmatprep.subr.mxu0 0.0
  %1794 = vmatpush1.msra.mxu0 0.0
  %1795 = vmatprep.subr.mxu0 0.0
  %1796 = vmatpush1.msra.mxu0 0.0
  %1797 = vmatprep.subr.mxu0 0.0
  %1798 = vmatpush1.msra.mxu0 0.0
  %1799 = vmatprep.subr.mxu0 0.0
  %1800 = vmatpush1.msra.mxu0 0.0
  %1801 = vmatprep.subr.mxu0 0.0
  %1802 = vmatpush1.msra.mxu0 0.0
  %1803 = vmatprep.subr.mxu0 0.0
  %1804 = vmatpush1.msra.mxu0 0.0
  %1805 = vmatprep.subr.mxu0 0.0
  %1806 = vmatpush1.msra.mxu0 0.0
  %1807 = vmatprep.subr.mxu0 0.0
  %1808 = vmatpush1.msra.mxu0 0.0
  %1809 = vmatprep.subr.mxu0 0.0
  %1810 = vmatpush1.msra.mxu0 0.0
  %1811 = vmatprep.subr.mxu0 0.0
  %1812 = vmatpush1.msra.mxu0 0.0
  %1813 = vmatprep.subr.mxu0 0.0
  %1814 = vmatpush1.msra.mxu0 0.0
  %1815 = vmatprep.subr.mxu0 0.0
  %1816 = vmatpush1.msra.mxu0 0.0
  %1817 = vmatprep.subr.mxu0 0.0
  %1818 = vmatpush1.msra.mxu0 0.0
  %1819 = vmatprep.subr.mxu0 0.0
  %1820 = vmatpush1.msra.mxu0 0.0
  %1821 = vmatprep.subr.mxu0 0.0
  %1822 = vmatpush1.msra.mxu0 0.0
  %1823 = vmatprep.subr.mxu0 0.0
  %1824 = vmatpush1.msra.mxu0 0.0
  %1825 = vmatprep.subr.mxu0 0.0
  %1826 = vmatpush1.msra.mxu0 0.0
  %1827 = vmatprep.subr.mxu0 0.0
  %1828 = vmatpush1.msra.mxu0 0.0
  %1829 = vmatprep.subr.mxu0 0.0
  %1830 = vmatpush1.msra.mxu0 0.0
  %1831 = vmatprep.subr.mxu0 0.0
  %1832 = vmatpush1.msra.mxu0 0.0
  %1833 = vmatprep.subr.mxu0 0.0
  %1834 = vmatpush1.msra.mxu0 0.0
  %1835 = vmatprep.mubr.f32.mxu0 0.0
  %1836 = vmatmul.mubr.f32.gmra.mrb[0].mxu0 %v1614
  %v1837 = vpop.f32.mrb[0].mxu0
  %v1838 = vadd.f32 %v1768, %v1837
  %v1839 = vpop.f32.mrb[0].mxu0
  %1840 = vdwg.mxu0
  %v1841 = vld [vmem:[%s13] sm:$0x1]
  %v1843 = vlaneseq
  %v1844 = vshrl.u32 %v1843, 7
  %v1845 = vsub.s32 0, %v1844
  %v1846 = vrot.slane %v1841, %v1845
  %v1848 = vadd.f32 %v1838, %v1846
  %vm1849 = vcmask 31744
  %1850 = vst.msk [vmem:[%s14] sm:$0xff] %vm1849, %v1848
  // Predicated region
  $region58: #{_lambda_.3} parent=0 // pred_check
    _
  $region59: #{_lambda_.3} parent=0 // pred_check_branch
    %1852 = sbr.rel (0) target = $region61
  $region60: #{_lambda_.3} parent=0 // pred_region
    _
  $region61: #{_lambda_.3} parent=0 // pred_fallthru
    _
  // Predicated region
  $region62: #{_lambda_.3} parent=0 // pred_check
    _
  $region63: #{_lambda_.3} parent=0 // pred_check_branch
    %1854 = sbr.rel (0) target = $region65
  $region64: #{_lambda_.3} parent=0 // pred_region
    _
  $region65: #{_lambda_.3} parent=0 // pred_fallthru
    _

</llo_original>
